<compile_context>
chip_gen: v7x
topology: tpu7x:2x2x1
jax: 0.10.0
libtpu: 0.0.40
codegen_flags: <defaults>
</compile_context>

<pallas_src>
import jax
import jax.numpy as jnp
from jax.experimental import pallas as pl
from jax.experimental.pallas import tpu as pltpu

_LANES = 128
_SUBLANES = 8


def _round_up(x, m):
    return ((x + m - 1) // m) * m


def _device_vmem_config():
    """(vmem_budget_bytes, vmem_limit_bytes_or_None) by TPU generation."""
    try:
        kind = jax.devices()[0].device_kind.lower()
    except Exception:  # pragma: no cover - defensive
        kind = ""
    if ("v5" in kind) or ("v6" in kind):
        # 128 MiB physical VMEM per core: allow big tiles, raise scoped limit.
        return 64 * 1024 * 1024, 100 * 1024 * 1024
    # v7x (64 MiB / TC) or unknown: stay safely under the 32 MiB scoped default.
    return 22 * 1024 * 1024, None


def _gated_attn_kernel(x_ref, wab_ref, bab_ref, wc_ref, bc_ref, a_out_ref):
    """One tile: A = (tanh(x@Wa + ba) * sigmoid(x@Wb + bb)) @ Wc + bc."""
    compute_dtype = wab_ref.dtype                 # bf16 (native MXU operands)
    x = x_ref[...].astype(compute_dtype)
    # Single lane-dense (tile_m, L) x (L, 2*Dp) matmul covering both gate
    # projections; accumulate in f32 on the MXU, add the f32 biases.
    h = jnp.dot(x, wab_ref[...], preferred_element_type=jnp.float32) + bab_ref[...]
    dp = h.shape[-1] // 2                         # Dp is a multiple of 128 lanes
    a = jnp.tanh(h[:, :dp])
    b = jax.nn.sigmoid(h[:, dp:])
    gated = (a * b).astype(compute_dtype)
    # Lane-dense (tile_m, 128) head matmul (columns >= n_classes are zero).
    attn = jnp.dot(gated, wc_ref[...], preferred_element_type=jnp.float32) + bc_ref[...]
    a_out_ref[...] = attn.astype(a_out_ref.dtype)


def prepare_params(wa, ba, wb, bb, wc, bc, *, compute_dtype=jnp.bfloat16):
    """One-time layout plumbing (call at init, reuse the result every call).

    Pads each L->D gate projection to a multiple of 128 lanes, fuses them into a
    single (L, 2*Dp) weight, pads the D->C head to a lane-dense (Dp, 128) slab,
    and casts the matmul weights to `compute_dtype` (bf16 => native MXU).
    Biases stay f32 (they ride the f32 accumulator).
    """
    L, D = wa.shape
    C = wc.shape[1]
    Dp = _round_up(D, _LANES)
    Cp = _LANES
    assert C <= Cp, "n_classes > 128 not supported by this kernel"

    f32 = jnp.float32
    wa_p = jnp.zeros((L, Dp), f32).at[:, :D].set(wa.astype(f32))
    wb_p = jnp.zeros((L, Dp), f32).at[:, :D].set(wb.astype(f32))
    ba_p = jnp.zeros((1, Dp), f32).at[:, :D].set(ba.astype(f32))
    bb_p = jnp.zeros((1, Dp), f32).at[:, :D].set(bb.astype(f32))
    w_ab = jnp.concatenate([wa_p, wb_p], axis=1).astype(compute_dtype)
    b_ab = jnp.concatenate([ba_p, bb_p], axis=1)                  # f32
    # Padded gate columns produce tanh(0)*sigmoid(0) = 0 and hit zero head rows.
    wc_p = jnp.zeros((Dp, Cp), f32).at[:D, :C].set(wc.astype(f32)).astype(compute_dtype)
    bc_p = jnp.zeros((1, Cp), f32).at[:, :C].set(bc.astype(f32))  # f32

    return {"w_ab": w_ab, "b_ab": b_ab, "wc": wc_p, "bc": bc_p,
            "L": L, "Dp": Dp, "Cp": Cp, "n_classes": C}


def attn_net_gated(x, prepared, *, tile_m=1024):
    """x: (N, L).  Returns (A: (N, n_classes), x) like the PyTorch forward."""
    N, L = x.shape
    assert L == prepared["L"]
    Dp, Cp, C = prepared["Dp"], prepared["Cp"], prepared["n_classes"]
    w_ab, b_ab, wc, bc = prepared["w_ab"], prepared["b_ab"], prepared["wc"], prepared["bc"]

    out_dtype = jnp.bfloat16                      # lane-dense bf16 output slab
    budget, vmem_limit = _device_vmem_config()

    x_bytes = x.dtype.itemsize
    out_bytes = jnp.dtype(out_dtype).itemsize
    # Resident weights/biases (double-buffered by the Pallas pipeline).
    weight_bytes = 2 * (w_ab.size * w_ab.dtype.itemsize + b_ab.size * b_ab.dtype.itemsize
                        + wc.size * wc.dtype.itemsize + bc.size * bc.dtype.itemsize)

    # Cap tile_m so double-buffered (x tile + out tile) + weights fit the budget.
    def _tile_bytes(tm):
        return 2 * tm * (L * x_bytes + Cp * out_bytes) + weight_bytes
    while tile_m > _SUBLANES and _tile_bytes(tile_m) > budget:
        tile_m //= 2
    # Keep >= 2 grid steps so megacore (v7x, 2 TCs) shards the parallel axis;
    # also never exceed the (padded) problem size.
    if N > _SUBLANES:
        tile_m = min(tile_m, _round_up(pl.cdiv(N, 2), _SUBLANES))
    tile_m = max(_SUBLANES, (tile_m // _SUBLANES) * _SUBLANES)

    n_pad = _round_up(N, tile_m)
    x_p = x if n_pad == N else jnp.pad(x, ((0, n_pad - N), (0, 0)))

    grid = (n_pad // tile_m,)
    full = lambda i: (0, 0)

    cost = pl.CostEstimate(
        flops=2 * n_pad * L * (2 * Dp) + 2 * n_pad * Dp * Cp,
        transcendentals=2 * n_pad * Dp,
        bytes_accessed=(x_p.size * x_bytes + n_pad * Cp * out_bytes + weight_bytes // 2),
    )

    cp_kwargs = dict(dimension_semantics=("parallel",))
    if vmem_limit is not None:
        cp_kwargs["vmem_limit_bytes"] = vmem_limit

    a_pad = pl.pallas_call(
        _gated_attn_kernel,
        out_shape=jax.ShapeDtypeStruct((n_pad, Cp), out_dtype),
        grid_spec=pltpu.PrefetchScalarGridSpec(
            num_scalar_prefetch=0,
            grid=grid,
            in_specs=[
                pl.BlockSpec((tile_m, L), lambda i: (i, 0)),   # x tile
                pl.BlockSpec((L, 2 * Dp), full),               # fused W_a|W_b (bf16)
                pl.BlockSpec((1, 2 * Dp), full),               # fused b_a|b_b (f32)
                pl.BlockSpec((Dp, Cp), full),                  # padded W_c (bf16)
                pl.BlockSpec((1, Cp), full),                   # padded b_c (f32)
            ],
            out_specs=pl.BlockSpec((tile_m, Cp), lambda i: (i, 0)),
        ),
        compiler_params=pltpu.CompilerParams(**cp_kwargs),
        cost_estimate=cost,
    )(x_p, w_ab, b_ab, wc, bc)

    A = a_pad[:N, :C].astype(x.dtype)
    # x is returned untouched (the PyTorch forward returns (A, x)); no copy.
    return A, x


def init_params(key, L, D, n_classes, dtype=jnp.float32):
    """Deterministic synthetic parameters (nn.Linear shapes, pre-transposed)."""
    k = jax.random.split(key, 6)
    wa = (jax.random.normal(k[0], (L, D), dtype) * (1.0 / jnp.sqrt(L))).astype(dtype)
    ba = (jax.random.normal(k[1], (1, D), dtype) * 0.01).astype(dtype)
    wb = (jax.random.normal(k[2], (L, D), dtype) * (1.0 / jnp.sqrt(L))).astype(dtype)
    bb = (jax.random.normal(k[3], (1, D), dtype) * 0.01).astype(dtype)
    wc = (jax.random.normal(k[4], (D, n_classes), dtype) * (1.0 / jnp.sqrt(D))).astype(dtype)
    bc = (jax.random.normal(k[5], (1, n_classes), dtype) * 0.01).astype(dtype)
    return wa, ba, wb, bb, wc, bc


def reference_f32(x, wa, ba, wb, bb, wc, bc):
    hp = jax.lax.Precision.HIGHEST
    a = jnp.tanh(jnp.dot(x, wa, precision=hp) + ba)
    b = jax.nn.sigmoid(jnp.dot(x, wb, precision=hp) + bb)
    A = jnp.dot(a * b, wc, precision=hp) + bc
    return A, x


def reference_bf16(x, wa, ba, wb, bb, wc, bc):
    """Mirrors the kernel numerics: bf16 MXU operands, f32 accum, bf16 out."""
    bf = jnp.bfloat16
    xm = x.astype(bf)
    ha = jnp.dot(xm, wa.astype(bf), preferred_element_type=jnp.float32) + ba
    hb = jnp.dot(xm, wb.astype(bf), preferred_element_type=jnp.float32) + bb
    g = (jnp.tanh(ha) * jax.nn.sigmoid(hb)).astype(bf)
    A = jnp.dot(g, wc.astype(bf), preferred_element_type=jnp.float32) + bc
    return A.astype(bf).astype(x.dtype), x


if __name__ == "__main__":
    # Module-default feature sizes (L=1024, D=256, n_classes=1), modest N.
    N, L, D, n_classes = 512, 1024, 256, 1

    key = jax.random.PRNGKey(0)
    kx, kp = jax.random.split(key)
    x = jax.random.normal(kx, (N, L), jnp.float32)
    raw = init_params(kp, L, D, n_classes)
    prepared = prepare_params(*raw)   # one-time layout plumbing (hoisted)

    A, x_out = attn_net_gated(x, prepared)
    A = jax.block_until_ready(A)
    x_out = jax.block_until_ready(x_out)

    A_bf, _ = reference_bf16(x, *raw)
    A_f32, _ = reference_f32(x, *raw)

    assert A.shape == (N, n_classes)
    assert x_out.shape == (N, L)
    # Tight check vs a reference with the same (bf16-operand) numerics.
    assert jnp.allclose(A, A_bf, atol=2e-2, rtol=2e-2), "mismatch vs bf16 reference"
    # Loose check vs the full-f32 PyTorch-equivalent forward.
    assert jnp.allclose(A, A_f32, atol=5e-2, rtol=5e-2), "mismatch vs f32 reference"
    assert jnp.allclose(x_out, x)

    print("KERNEL_OK")
</pallas_src>

<mosaic_0001>
module attributes {stable_mosaic.version = 11 : i64} {
  func.func @_gated_attn_kernel(%arg0: i32, %arg1: memref<256x1024xf32, #tpu.memory_space<vmem>>, %arg2: memref<1024x512xbf16, #tpu.memory_space<vmem>>, %arg3: memref<1x512xf32, #tpu.memory_space<vmem>>, %arg4: memref<256x128xbf16, #tpu.memory_space<vmem>>, %arg5: memref<1x128xf32, #tpu.memory_space<vmem>>, %arg6: memref<256x128xbf16, #tpu.memory_space<vmem>>) attributes {dimension_semantics = [#tpu.dimension_semantics<parallel>], iteration_bounds = array<i64: 2>, scalar_prefetch = 0 : i64, scratch_operands = 0 : i64, tpu.core_type = #tpu.core_type<tc>, window_params = [{transform_indices = @transform_0, window_bounds = array<i64: 256, 1024>}, {pipeline_mode = #tpu.pipeline_mode<synchronous>, transform_indices = @transform_1, window_bounds = array<i64: 1024, 512>}, {pipeline_mode = #tpu.pipeline_mode<synchronous>, transform_indices = @transform_2, window_bounds = array<i64: 1, 512>}, {pipeline_mode = #tpu.pipeline_mode<synchronous>, transform_indices = @transform_3, window_bounds = array<i64: 256, 128>}, {pipeline_mode = #tpu.pipeline_mode<synchronous>, transform_indices = @transform_4, window_bounds = array<i64: 1, 128>}, {transform_indices = @transform_5, window_bounds = array<i64: 256, 128>}]} {
    %c0 = arith.constant 0 : index
    %c0_0 = arith.constant 0 : index
    %0 = vector.load %arg1[%c0, %c0_0] : memref<256x1024xf32, #tpu.memory_space<vmem>>, vector<256x1024xf32>
    %1 = arith.truncf %0 : vector<256x1024xf32> to vector<256x1024xbf16>
    %c0_1 = arith.constant 0 : index
    %c0_2 = arith.constant 0 : index
    %2 = vector.load %arg2[%c0_1, %c0_2] : memref<1024x512xbf16, #tpu.memory_space<vmem>>, vector<1024x512xbf16>
    %cst = arith.constant dense<0.000000e+00> : vector<256x512xf32>
    %3 = tpu.matmul %1, %2, %cst {dimension_numbers = #tpu.dot_dimension_numbers<[1], [0], [0], [1], [0, 0, 1, 1], [], []>} : vector<256x1024xbf16>, vector<1024x512xbf16>, vector<256x512xf32> -> vector<256x512xf32>
    %c0_3 = arith.constant 0 : index
    %c0_4 = arith.constant 0 : index
    %4 = vector.load %arg3[%c0_3, %c0_4] : memref<1x512xf32, #tpu.memory_space<vmem>>, vector<1x512xf32>
    %5 = vector.broadcast %4 : vector<1x512xf32> to vector<256x512xf32>
    %6 = arith.addf %3, %5 : vector<256x512xf32>
    %7 = vector.extract_strided_slice %6 {offsets = [0, 0], sizes = [256, 256], strides = [1, 1]} : vector<256x512xf32> to vector<256x256xf32>
    %8 = math.tanh %7 : vector<256x256xf32>
    %9 = vector.extract_strided_slice %6 {offsets = [0, 256], sizes = [256, 256], strides = [1, 1]} : vector<256x512xf32> to vector<256x256xf32>
    %10 = arith.negf %9 : vector<256x256xf32>
    %11 = math.exp %10 : vector<256x256xf32>
    %cst_5 = arith.constant 1.000000e+00 : f32
    %12 = vector.broadcast %cst_5 : f32 to vector<256x256xf32>
    %13 = arith.addf %12, %11 : vector<256x256xf32>
    %14 = arith.divf %12, %13 : vector<256x256xf32>
    %15 = arith.mulf %8, %14 : vector<256x256xf32>
    %16 = arith.truncf %15 : vector<256x256xf32> to vector<256x256xbf16>
    %c0_6 = arith.constant 0 : index
    %c0_7 = arith.constant 0 : index
    %17 = vector.load %arg4[%c0_6, %c0_7] : memref<256x128xbf16, #tpu.memory_space<vmem>>, vector<256x128xbf16>
    %cst_8 = arith.constant dense<0.000000e+00> : vector<256x128xf32>
    %18 = tpu.matmul %16, %17, %cst_8 {dimension_numbers = #tpu.dot_dimension_numbers<[1], [0], [0], [1], [0, 0, 1, 1], [], []>} : vector<256x256xbf16>, vector<256x128xbf16>, vector<256x128xf32> -> vector<256x128xf32>
    %c0_9 = arith.constant 0 : index
    %c0_10 = arith.constant 0 : index
    %19 = vector.load %arg5[%c0_9, %c0_10] : memref<1x128xf32, #tpu.memory_space<vmem>>, vector<1x128xf32>
    %20 = vector.broadcast %19 : vector<1x128xf32> to vector<256x128xf32>
    %21 = arith.addf %18, %20 : vector<256x128xf32>
    %22 = arith.truncf %21 : vector<256x128xf32> to vector<256x128xbf16>
    %c0_11 = arith.constant 0 : index
    %c0_12 = arith.constant 0 : index
    %23 = vector.load %arg6[%c0_11, %c0_12] : memref<256x128xbf16, #tpu.memory_space<vmem>>, vector<256x128xbf16>
    tpu.vector_store %arg6[%c0_11, %c0_12], %22 {strides = array<i32>} : memref<256x128xbf16, #tpu.memory_space<vmem>>, vector<256x128xbf16>,
    return
  }
  func.func @transform_0(%arg0: i32) -> (i32, i32) {
    %c0_i32 = arith.constant 0 : i32
    %c0_i32_0 = arith.constant 0 : i32
    return %arg0, %c0_i32 : i32, i32
  }
  func.func @transform_1(%arg0: i32) -> (i32, i32) {
    %c0_i32 = arith.constant 0 : i32
    %c0_i32_0 = arith.constant 0 : i32
    %c0_i32_1 = arith.constant 0 : i32
    return %c0_i32, %c0_i32_0 : i32, i32
  }
  func.func @transform_2(%arg0: i32) -> (i32, i32) {
    %c0_i32 = arith.constant 0 : i32
    %c0_i32_0 = arith.constant 0 : i32
    %c0_i32_1 = arith.constant 0 : i32
    return %c0_i32, %c0_i32_0 : i32, i32
  }
  func.func @transform_3(%arg0: i32) -> (i32, i32) {
    %c0_i32 = arith.constant 0 : i32
    %c0_i32_0 = arith.constant 0 : i32
    %c0_i32_1 = arith.constant 0 : i32
    return %c0_i32, %c0_i32_0 : i32, i32
  }
  func.func @transform_4(%arg0: i32) -> (i32, i32) {
    %c0_i32 = arith.constant 0 : i32
    %c0_i32_0 = arith.constant 0 : i32
    %c0_i32_1 = arith.constant 0 : i32
    return %c0_i32, %c0_i32_0 : i32, i32
  }
  func.func @transform_5(%arg0: i32) -> (i32, i32) {
    %c0_i32 = arith.constant 0 : i32
    %c0_i32_0 = arith.constant 0 : i32
    return %arg0, %c0_i32 : i32, i32
  }
}

</mosaic_0001>

<llo_original>
// kernel: tpu_custom_call.1
$region0: #{tpu_custom_call.1}
  #allocation0 [shape = 'u32[]', space=smem, size = 0x4, offset = 0x4, fixed_abs, tag = 'smem constant byte address 0x4 - core index']
  #allocation1 [shape = 'u32[144,128]{1,0:T(1,128)}', space=vmem, size = 0x12000, scoped, tag = 'internal scratch']
  %s0 = inlined_call_operand.hbm [shape: f32[512,1024], index: 0, kind: input, shape index: {}]
  %s1 = inlined_call_operand.hbm [shape: bf16[1024,512], index: 1, kind: input, shape index: {}]
  %s2 = inlined_call_operand.hbm [shape: f32[1,512], index: 2, kind: input, shape index: {}]
  %s3 = inlined_call_operand.hbm [shape: bf16[256,128], index: 3, kind: input, shape index: {}]
  %s4 = inlined_call_operand.hbm [shape: f32[1,128], index: 4, kind: input, shape index: {}]
  %s5 = inlined_call_operand.hbm [shape: bf16[512,128], index: 5, kind: output, shape index: {}]
  %s6 = sld [smem:[#allocation0]]
  $region73: #{tpu_custom_call.1} parent=0
    _
  %s8 = ssub.s32 1, %s6
  %s9 = scalar_select 0, %s8, %s6
  $region1: #{tpu_custom_call.1} parent=0
    #allocation2 [shape = 'u8[2097152]{0}', space=vmem, size = 0x200000, scoped, tag = 'input window, operand 0']
    #allocation3 [shape = 's32[2]{0}', space=sflag, size = 0x8, scoped, tag = 'scoped memory for tpu_custom_call.1']
    #allocation4 [shape = 's32[2]{0}', space=sflag, size = 0x8, scoped, tag = 'scoped memory for tpu_custom_call.1']
    #allocation5 [shape = 'u8[1048576]{0}', space=vmem, size = 0x100000, scoped, tag = 'input window, operand 1, single buffered']
    #allocation6 [shape = 's32[1]{0}', space=sflag, size = 0x4, scoped, tag = 'scoped memory for tpu_custom_call.1']
    #allocation7 [shape = 'u8[2048]{0}', space=vmem, size = 0x800, scoped, tag = 'input window, operand 2, single buffered']
    #allocation8 [shape = 'u8[65536]{0}', space=vmem, size = 0x10000, scoped, tag = 'input window, operand 3, single buffered']
    #allocation9 [shape = 's32[1]{0}', space=sflag, size = 0x4, scoped, tag = 'scoped memory for tpu_custom_call.1']
    #allocation10 [shape = 'u8[512]{0}', space=vmem, size = 0x400, scoped, tag = 'input window, operand 4, single buffered']
    #allocation11 [shape = 'u8[131072]{0}', space=vmem, size = 0x20000, scoped, tag = 'output window, operand 0']
    %10 = vsyncpa [#allocation3], 0
    %s11 = scalar_lea.sflag [#allocation3], 1
    %12 = vsyncpa %s11, 0
    %13 = vsyncpa [#allocation6], 0
    %14 = vsyncpa [#allocation9], 0
    %15 = vsyncpa [#allocation4], 0
    %s16 = scalar_lea.sflag [#allocation4], 1
    %17 = vsyncpa %s16, 0
    loop: start=0, step=1, limit=4
    $region2: #{tpu_custom_call.1} parent=1 // loop_pre_header
      _
    $region3: #{tpu_custom_call.1} parent=1 // loop_header
      %s19 = sphi 0, %s23
      %p20 = scmp.ge.s32.totalorder %s19, 4
      %s29 = sphi 0, %s31
      %s32 = sphi 0, %s29
      %s33 = sphi 0, %s32
      %s49 = sphi 0, %s33
      %s53 = sphi 0, %s53
      %s55 = sphi 0, %s53
      %s56 = sphi 0, %s55
      %s70 = sphi 0, %s56
      %s74 = sphi 0, %s74
      %s76 = sphi 0, %s74
      %s77 = sphi 0, %s76
      %s91 = sphi 0, %s77
      %s95 = sphi 0, %s95
      %s97 = sphi 0, %s95
      %s98 = sphi 0, %s97
      %s112 = sphi 0, %s98
      %s116 = sphi 0, %s116
      %s118 = sphi 0, %s116
      %s119 = sphi 0, %s118
      %s133 = sphi 0, %s119
      %s139 = sphi 0, %s141
      %s142 = sphi 0, %s139
      %s143 = sphi 0, %s142
      %s159 = sphi 0, %s143
    $region4: #{tpu_custom_call.1} parent=1 // loop_header_branch
      %22 = sbr.rel (%p20) target = $region8
    $region5: #{tpu_custom_call.1} parent=1 // loop_body
      %s24 = ssub.s32 %s19, 1
      %s25 = ssub.s32 %s19, 2
      %s26 = sadd.s32 %s19, 1
      %s27 = ssub.s32 %s19, %s26
      %p28 = scmp.eq.s32.totalorder %s27, 0
      %s30 = sadd.s32 %s29, 1
      %s31 = scalar_select %p28, %s29, %s30
      %p34 = pneg %p28
      %p35 = scmp.eq.s32.totalorder %s19, 1
      %p36 = por %p34, %p35
      %p37 = scmp.ne.s32.totalorder %s29, %s32
      %p38 = scmp.eq.s32.totalorder %s19, 0
      %p39 = por %p37, %p38
      %p40 = scmp.ne.s32.totalorder %s29, %s32
      %p41 = scmp.eq.s32.totalorder %s24, 1
      %p42 = por %p40, %p41
      %p43 = scmp.ne.s32.totalorder %s32, %s33
      %p44 = scmp.eq.s32.totalorder %s24, 0
      %p45 = por %p43, %p44
      %p46 = scmp.ne.s32.totalorder %s32, %s33
      %p47 = scmp.eq.s32.totalorder %s25, 1
      %p48 = por %p46, %p47
      %p50 = scmp.ne.s32.totalorder %s33, %s49
      %p51 = scmp.eq.s32.totalorder %s25, 0
      %p52 = por %p50, %p51
      %s54 = sadd.s32 %s53, 1
      %p57 = scmp.eq.s32.totalorder %s19, 1
      %p58 = scmp.ne.s32.totalorder %s53, %s55
      %p59 = scmp.eq.s32.totalorder %s19, 0
      %p60 = por %p58, %p59
      %p61 = scmp.ne.s32.totalorder %s53, %s55
      %p62 = scmp.eq.s32.totalorder %s24, 1
      %p63 = por %p61, %p62
      %p64 = scmp.ne.s32.totalorder %s55, %s56
      %p65 = scmp.eq.s32.totalorder %s24, 0
      %p66 = por %p64, %p65
      %p67 = scmp.ne.s32.totalorder %s55, %s56
      %p68 = scmp.eq.s32.totalorder %s25, 1
      %p69 = por %p67, %p68
      %p71 = scmp.ne.s32.totalorder %s56, %s70
      %p72 = scmp.eq.s32.totalorder %s25, 0
      %p73 = por %p71, %p72
      %s75 = sadd.s32 %s74, 1
      %p78 = scmp.eq.s32.totalorder %s19, 1
      %p79 = scmp.ne.s32.totalorder %s74, %s76
      %p80 = scmp.eq.s32.totalorder %s19, 0
      %p81 = por %p79, %p80
      %p82 = scmp.ne.s32.totalorder %s74, %s76
      %p83 = scmp.eq.s32.totalorder %s24, 1
      %p84 = por %p82, %p83
      %p85 = scmp.ne.s32.totalorder %s76, %s77
      %p86 = scmp.eq.s32.totalorder %s24, 0
      %p87 = por %p85, %p86
      %p88 = scmp.ne.s32.totalorder %s76, %s77
      %p89 = scmp.eq.s32.totalorder %s25, 1
      %p90 = por %p88, %p89
      %p92 = scmp.ne.s32.totalorder %s77, %s91
      %p93 = scmp.eq.s32.totalorder %s25, 0
      %p94 = por %p92, %p93
      %s96 = sadd.s32 %s95, 1
      %p99 = scmp.eq.s32.totalorder %s19, 1
      %p100 = scmp.ne.s32.totalorder %s95, %s97
      %p101 = scmp.eq.s32.totalorder %s19, 0
      %p102 = por %p100, %p101
      %p103 = scmp.ne.s32.totalorder %s95, %s97
      %p104 = scmp.eq.s32.totalorder %s24, 1
      %p105 = por %p103, %p104
      %p106 = scmp.ne.s32.totalorder %s97, %s98
      %p107 = scmp.eq.s32.totalorder %s24, 0
      %p108 = por %p106, %p107
      %p109 = scmp.ne.s32.totalorder %s97, %s98
      %p110 = scmp.eq.s32.totalorder %s25, 1
      %p111 = por %p109, %p110
      %p113 = scmp.ne.s32.totalorder %s98, %s112
      %p114 = scmp.eq.s32.totalorder %s25, 0
      %p115 = por %p113, %p114
      %s117 = sadd.s32 %s116, 1
      %p120 = scmp.eq.s32.totalorder %s19, 1
      %p121 = scmp.ne.s32.totalorder %s116, %s118
      %p122 = scmp.eq.s32.totalorder %s19, 0
      %p123 = por %p121, %p122
      %p124 = scmp.ne.s32.totalorder %s116, %s118
      %p125 = scmp.eq.s32.totalorder %s24, 1
      %p126 = por %p124, %p125
      %p127 = scmp.ne.s32.totalorder %s118, %s119
      %p128 = scmp.eq.s32.totalorder %s24, 0
      %p129 = por %p127, %p128
      %p130 = scmp.ne.s32.totalorder %s118, %s119
      %p131 = scmp.eq.s32.totalorder %s25, 1
      %p132 = por %p130, %p131
      %p134 = scmp.ne.s32.totalorder %s119, %s133
      %p135 = scmp.eq.s32.totalorder %s25, 0
      %p136 = por %p134, %p135
      %s137 = ssub.s32 %s19, %s26
      %p138 = scmp.eq.s32.totalorder %s137, 0
      %s140 = sadd.s32 %s139, 1
      %s141 = scalar_select %p138, %s139, %s140
      %p144 = pneg %p138
      %p145 = scmp.eq.s32.totalorder %s19, 1
      %p146 = por %p144, %p145
      %p147 = scmp.ne.s32.totalorder %s139, %s142
      %p148 = scmp.eq.s32.totalorder %s19, 0
      %p149 = por %p147, %p148
      %p150 = scmp.ne.s32.totalorder %s139, %s142
      %p151 = scmp.eq.s32.totalorder %s24, 1
      %p152 = por %p150, %p151
      %p153 = scmp.ne.s32.totalorder %s142, %s143
      %p154 = scmp.eq.s32.totalorder %s24, 0
      %p155 = por %p153, %p154
      %p156 = scmp.ne.s32.totalorder %s142, %s143
      %p157 = scmp.eq.s32.totalorder %s25, 1
      %p158 = por %p156, %p157
      %p160 = scmp.ne.s32.totalorder %s143, %s159
      %p161 = scmp.eq.s32.totalorder %s25, 0
      %p162 = por %p160, %p161
      %p163 = scmp.le.s32.totalorder 1, %s19
      %p164 = scmp.lt.s32.totalorder %s19, 3
      %p165 = pnand %p163, %p164
      %p166 = pneg %p165
      // Predicated region
      $region9: #{tpu_custom_call.1} parent=5 // pred_check
        _
      $region10: #{tpu_custom_call.1} parent=5 // pred_check_branch
        %168 = sbr.rel (%p165) target = $region12
      $region11: #{tpu_custom_call.1} parent=5 // pred_region
        %s169 = ssub.s32 %s19, 1
        // Predicated region
        $region13: #{tpu_custom_call.1} parent=11 // pred_check
          %p170 = pneg %p66
        $region14: #{tpu_custom_call.1} parent=11 // pred_check_branch
          %172 = sbr.rel (%p170) target = $region16
        $region15: #{tpu_custom_call.1} parent=11 // pred_region
          %s174 = ssub.s32 32768, 32768
          %175 = vsyncadd [#allocation6], %s174
          %s176 = sshll.u32 [#allocation5], 4
          %s177 = int_to_ptr.vmem [resolvable:$true] %s176
          %182 = dma.hbm_to_vmem [thread:$0]  %s1, 32768, %s177, [#allocation6], 256, 256, 16
        $region16: #{tpu_custom_call.1} parent=11 // pred_fallthru
          _
        // Predicated region
        $region17: #{tpu_custom_call.1} parent=11 // pred_check
          %p183 = pneg %p87
        $region18: #{tpu_custom_call.1} parent=11 // pred_check_branch
          %185 = sbr.rel (%p183) target = $region20
        $region19: #{tpu_custom_call.1} parent=11 // pred_region
          %s187 = ssub.s32 64, 64
          %188 = vsyncadd [#allocation6], %s187
          %s190 = sshll.u32 [#allocation7], 4
          %s191 = int_to_ptr.vmem [resolvable:$true] %s190
          %193 = dma.hbm_to_vmem [thread:$0]  %s2, 64, %s191, [#allocation6]
        $region20: #{tpu_custom_call.1} parent=11 // pred_fallthru
          _
        // Predicated region
        $region21: #{tpu_custom_call.1} parent=11 // pred_check
          %p194 = pneg %p108
        $region22: #{tpu_custom_call.1} parent=11 // pred_check_branch
          %196 = sbr.rel (%p194) target = $region24
        $region23: #{tpu_custom_call.1} parent=11 // pred_region
          %s198 = ssub.s32 2048, 2048
          %199 = vsyncadd [#allocation9], %s198
          %s200 = sshll.u32 [#allocation8], 4
          %s201 = int_to_ptr.vmem [resolvable:$true] %s200
          %206 = dma.hbm_to_vmem [thread:$0]  %s3, 2048, %s201, [#allocation9], 64, 64, 4
        $region24: #{tpu_custom_call.1} parent=11 // pred_fallthru
          _
        // Predicated region
        $region25: #{tpu_custom_call.1} parent=11 // pred_check
          %p207 = pneg %p129
        $region26: #{tpu_custom_call.1} parent=11 // pred_check_branch
          %209 = sbr.rel (%p207) target = $region28
        $region27: #{tpu_custom_call.1} parent=11 // pred_region
          %s211 = ssub.s32 16, 16
          %212 = vsyncadd [#allocation9], %s211
          %s214 = sshll.u32 [#allocation10], 4
          %s215 = int_to_ptr.vmem [resolvable:$true] %s214
          %217 = dma.hbm_to_vmem [thread:$0]  %s4, 16, %s215, [#allocation9]
        $region28: #{tpu_custom_call.1} parent=11 // pred_fallthru
          _
      $region12: #{tpu_custom_call.1} parent=5 // pred_fallthru
        _
      %p218 = scmp.lt.s32.totalorder %s19, 2
      // Predicated region
      $region29: #{tpu_custom_call.1} parent=5 // pred_check
        %p219 = pneg %p218
      $region30: #{tpu_custom_call.1} parent=5 // pred_check_branch
        %221 = sbr.rel (%p219) target = $region32
      $region31: #{tpu_custom_call.1} parent=5 // pred_region
        // Predicated region
        $region33: #{tpu_custom_call.1} parent=31 // pred_check
          %p222 = pneg %p39
        $region34: #{tpu_custom_call.1} parent=31 // pred_check_branch
          %224 = sbr.rel (%p222) target = $region36
        $region35: #{tpu_custom_call.1} parent=31 // pred_region
          %s225 = sand.u32 %s29, 1
          %s226 = scalar_lea.sflag [#allocation3], %s225
          %s227 = sand.u32 %s29, 1
          %s228 = smul.addr %s227, 2048
          %s229 = scalar_lea.vmem [#allocation2], %s228
          %s230 = smul.u32 32, %s19
          %s232 = ssub.s32 32768, 32768
          %233 = vsyncadd %s226, %s232
          %s234 = smul.addr %s230, 8
          %s235 = smul.addr %s234, 128
          %s236 = scalar_lea.hbm %s0, %s235
          %s237 = sshll.u32 %s229, 4
          %s238 = int_to_ptr.vmem [resolvable:$true] %s237
          %243 = dma.hbm_to_vmem [thread:$0]  %s236, 32768, %s238, %s226, 1024, 1024, 64
        $region36: #{tpu_custom_call.1} parent=31 // pred_fallthru
          _
      $region32: #{tpu_custom_call.1} parent=5 // pred_fallthru
        _
      %p244 = scmp.le.s32.totalorder 1, %s19
      %p245 = scmp.lt.s32.totalorder %s19, 3
      %p246 = pnand %p244, %p245
      %p247 = pneg %p246
      // Predicated region
      $region37: #{tpu_custom_call.1} parent=5 // pred_check
        _
      $region38: #{tpu_custom_call.1} parent=5 // pred_check_branch
        %249 = sbr.rel (%p246) target = $region40
      $region39: #{tpu_custom_call.1} parent=5 // pred_region
        %s250 = ssub.s32 %s19, 1
        %s251 = sand.u32 %s32, 1
        %s252 = scalar_lea.sflag [#allocation3], %s251
        %s253 = sand.u32 %s32, 1
        %s254 = smul.addr %s253, 2048
        %s255 = scalar_lea.vmem [#allocation2], %s254
        // Predicated region
        $region41: #{tpu_custom_call.1} parent=39 // pred_check
          %p256 = pneg %p45
        $region42: #{tpu_custom_call.1} parent=39 // pred_check_branch
          %258 = sbr.rel (%p256) target = $region44
        $region43: #{tpu_custom_call.1} parent=39 // pred_region
          %259 = dma.done %s252, 32768
        $region44: #{tpu_custom_call.1} parent=39 // pred_fallthru
          _
        // Predicated region
        $region45: #{tpu_custom_call.1} parent=39 // pred_check
          %p260 = pneg %p66
        $region46: #{tpu_custom_call.1} parent=39 // pred_check_branch
          %262 = sbr.rel (%p260) target = $region48
        $region47: #{tpu_custom_call.1} parent=39 // pred_region
          %263 = dma.done [#allocation6], 32768
        $region48: #{tpu_custom_call.1} parent=39 // pred_fallthru
          _
        // Predicated region
        $region49: #{tpu_custom_call.1} parent=39 // pred_check
          %p264 = pneg %p87
        $region50: #{tpu_custom_call.1} parent=39 // pred_check_branch
          %266 = sbr.rel (%p264) target = $region52
        $region51: #{tpu_custom_call.1} parent=39 // pred_region
          %267 = dma.done [#allocation6], 64
        $region52: #{tpu_custom_call.1} parent=39 // pred_fallthru
          _
        // Predicated region
        $region53: #{tpu_custom_call.1} parent=39 // pred_check
          %p268 = pneg %p108
        $region54: #{tpu_custom_call.1} parent=39 // pred_check_branch
          %270 = sbr.rel (%p268) target = $region56
        $region55: #{tpu_custom_call.1} parent=39 // pred_region
          %271 = dma.done [#allocation9], 2048
        $region56: #{tpu_custom_call.1} parent=39 // pred_fallthru
          _
        // Predicated region
        $region57: #{tpu_custom_call.1} parent=39 // pred_check
          %p272 = pneg %p129
        $region58: #{tpu_custom_call.1} parent=39 // pred_check_branch
          %274 = sbr.rel (%p272) target = $region60
        $region59: #{tpu_custom_call.1} parent=39 // pred_region
          %275 = dma.done [#allocation9], 16
        $region60: #{tpu_custom_call.1} parent=39 // pred_fallthru
          _
        %s276 = sand.u32 %s32, 1
        %s277 = scalar_lea.sflag [#allocation3], %s276
        %s278 = sand.u32 %s32, 1
        %s279 = smul.addr %s278, 2048
        %s280 = scalar_lea.vmem [#allocation2], %s279
        %p281 = pneg %p45
        %p282 = pneg %p42
        %p283 = pneg %p66
        %p284 = pneg %p63
        %p285 = pneg %p87
        %p286 = pneg %p84
        %p287 = pneg %p108
        %p288 = pneg %p105
        %p289 = pneg %p129
        %p290 = pneg %p126
        %p291 = pneg %p155
        %p292 = pneg %p152
        %s293 = sand.u32 %s142, 1
        %s294 = scalar_lea.sflag [#allocation4], %s293
        %s295 = sand.u32 %s142, 1
        %s296 = smul.addr %s295, 128
        %s297 = scalar_lea.vmem [#allocation11], %s296
        %s298 = smul.u32 32, %s24
        %s299 = smul.u32 32, %s24
        %v301 = vld [vmem:[%s255] sm:$0xff]
        %v302 = vld [vmem:[%s255 + $0x8] sm:$0xff]
        %v303 = vld [vmem:[%s255 + $0x10] sm:$0xff]
        %v304 = vld [vmem:[%s255 + $0x18] sm:$0xff]
        %v305 = vld [vmem:[%s255 + $0x20] sm:$0xff]
        %v306 = vld [vmem:[%s255 + $0x28] sm:$0xff]
        %v307 = vld [vmem:[%s255 + $0x30] sm:$0xff]
        %v308 = vld [vmem:[%s255 + $0x38] sm:$0xff]
        %v309 = vld [vmem:[%s255 + $0x40] sm:$0xff]
        %v310 = vld [vmem:[%s255 + $0x48] sm:$0xff]
        %v311 = vld [vmem:[%s255 + $0x50] sm:$0xff]
        %v312 = vld [vmem:[%s255 + $0x58] sm:$0xff]
        %v313 = vld [vmem:[%s255 + $0x60] sm:$0xff]
        %v314 = vld [vmem:[%s255 + $0x68] sm:$0xff]
        %v315 = vld [vmem:[%s255 + $0x70] sm:$0xff]
        %v316 = vld [vmem:[%s255 + $0x78] sm:$0xff]
        %v317 = vld [vmem:[%s255 + $0x80] sm:$0xff]
        %v318 = vld [vmem:[%s255 + $0x88] sm:$0xff]
        %v319 = vld [vmem:[%s255 + $0x90] sm:$0xff]
        %v320 = vld [vmem:[%s255 + $0x98] sm:$0xff]
        %v321 = vld [vmem:[%s255 + $0xa0] sm:$0xff]
        %v322 = vld [vmem:[%s255 + $0xa8] sm:$0xff]
        %v323 = vld [vmem:[%s255 + $0xb0] sm:$0xff]
        %v324 = vld [vmem:[%s255 + $0xb8] sm:$0xff]
        %v325 = vld [vmem:[%s255 + $0xc0] sm:$0xff]
        %v326 = vld [vmem:[%s255 + $0xc8] sm:$0xff]
        %v327 = vld [vmem:[%s255 + $0xd0] sm:$0xff]
        %v328 = vld [vmem:[%s255 + $0xd8] sm:$0xff]
        %v329 = vld [vmem:[%s255 + $0xe0] sm:$0xff]
        %v330 = vld [vmem:[%s255 + $0xe8] sm:$0xff]
        %v331 = vld [vmem:[%s255 + $0xf0] sm:$0xff]
        %v332 = vld [vmem:[%s255 + $0xf8] sm:$0xff]
        %v333 = vld [vmem:[%s255 + $0x100] sm:$0xff]
        %v334 = vld [vmem:[%s255 + $0x108] sm:$0xff]
        %v335 = vld [vmem:[%s255 + $0x110] sm:$0xff]
        %v336 = vld [vmem:[%s255 + $0x118] sm:$0xff]
        %v337 = vld [vmem:[%s255 + $0x120] sm:$0xff]
        %v338 = vld [vmem:[%s255 + $0x128] sm:$0xff]
        %v339 = vld [vmem:[%s255 + $0x130] sm:$0xff]
        %v340 = vld [vmem:[%s255 + $0x138] sm:$0xff]
        %v341 = vld [vmem:[%s255 + $0x140] sm:$0xff]
        %v342 = vld [vmem:[%s255 + $0x148] sm:$0xff]
        %v343 = vld [vmem:[%s255 + $0x150] sm:$0xff]
        %v344 = vld [vmem:[%s255 + $0x158] sm:$0xff]
        %v345 = vld [vmem:[%s255 + $0x160] sm:$0xff]
        %v346 = vld [vmem:[%s255 + $0x168] sm:$0xff]
        %v347 = vld [vmem:[%s255 + $0x170] sm:$0xff]
        %v348 = vld [vmem:[%s255 + $0x178] sm:$0xff]
        %v349 = vld [vmem:[%s255 + $0x180] sm:$0xff]
        %v350 = vld [vmem:[%s255 + $0x188] sm:$0xff]
        %v351 = vld [vmem:[%s255 + $0x190] sm:$0xff]
        %v352 = vld [vmem:[%s255 + $0x198] sm:$0xff]
        %v353 = vld [vmem:[%s255 + $0x1a0] sm:$0xff]
        %v354 = vld [vmem:[%s255 + $0x1a8] sm:$0xff]
        %v355 = vld [vmem:[%s255 + $0x1b0] sm:$0xff]
        %v356 = vld [vmem:[%s255 + $0x1b8] sm:$0xff]
        %v357 = vld [vmem:[%s255 + $0x1c0] sm:$0xff]
        %v358 = vld [vmem:[%s255 + $0x1c8] sm:$0xff]
        %v359 = vld [vmem:[%s255 + $0x1d0] sm:$0xff]
        %v360 = vld [vmem:[%s255 + $0x1d8] sm:$0xff]
        %v361 = vld [vmem:[%s255 + $0x1e0] sm:$0xff]
        %v362 = vld [vmem:[%s255 + $0x1e8] sm:$0xff]
        %v363 = vld [vmem:[%s255 + $0x1f0] sm:$0xff]
        %v364 = vld [vmem:[%s255 + $0x1f8] sm:$0xff]
        %v365 = vld [vmem:[%s255 + $0x200] sm:$0xff]
        %v366 = vld [vmem:[%s255 + $0x208] sm:$0xff]
        %v367 = vld [vmem:[%s255 + $0x210] sm:$0xff]
        %v368 = vld [vmem:[%s255 + $0x218] sm:$0xff]
        %v369 = vld [vmem:[%s255 + $0x220] sm:$0xff]
        %v370 = vld [vmem:[%s255 + $0x228] sm:$0xff]
        %v371 = vld [vmem:[%s255 + $0x230] sm:$0xff]
        %v372 = vld [vmem:[%s255 + $0x238] sm:$0xff]
        %v373 = vld [vmem:[%s255 + $0x240] sm:$0xff]
        %v374 = vld [vmem:[%s255 + $0x248] sm:$0xff]
        %v375 = vld [vmem:[%s255 + $0x250] sm:$0xff]
        %v376 = vld [vmem:[%s255 + $0x258] sm:$0xff]
        %v377 = vld [vmem:[%s255 + $0x260] sm:$0xff]
        %v378 = vld [vmem:[%s255 + $0x268] sm:$0xff]
        %v379 = vld [vmem:[%s255 + $0x270] sm:$0xff]
        %v380 = vld [vmem:[%s255 + $0x278] sm:$0xff]
        %v381 = vld [vmem:[%s255 + $0x280] sm:$0xff]
        %v382 = vld [vmem:[%s255 + $0x288] sm:$0xff]
        %v383 = vld [vmem:[%s255 + $0x290] sm:$0xff]
        %v384 = vld [vmem:[%s255 + $0x298] sm:$0xff]
        %v385 = vld [vmem:[%s255 + $0x2a0] sm:$0xff]
        %v386 = vld [vmem:[%s255 + $0x2a8] sm:$0xff]
        %v387 = vld [vmem:[%s255 + $0x2b0] sm:$0xff]
        %v388 = vld [vmem:[%s255 + $0x2b8] sm:$0xff]
        %v389 = vld [vmem:[%s255 + $0x2c0] sm:$0xff]
        %v390 = vld [vmem:[%s255 + $0x2c8] sm:$0xff]
        %v391 = vld [vmem:[%s255 + $0x2d0] sm:$0xff]
        %v392 = vld [vmem:[%s255 + $0x2d8] sm:$0xff]
        %v393 = vld [vmem:[%s255 + $0x2e0] sm:$0xff]
        %v394 = vld [vmem:[%s255 + $0x2e8] sm:$0xff]
        %v395 = vld [vmem:[%s255 + $0x2f0] sm:$0xff]
        %v396 = vld [vmem:[%s255 + $0x2f8] sm:$0xff]
        %v397 = vld [vmem:[%s255 + $0x300] sm:$0xff]
        %v398 = vld [vmem:[%s255 + $0x308] sm:$0xff]
        %v399 = vld [vmem:[%s255 + $0x310] sm:$0xff]
        %v400 = vld [vmem:[%s255 + $0x318] sm:$0xff]
        %v401 = vld [vmem:[%s255 + $0x320] sm:$0xff]
        %v402 = vld [vmem:[%s255 + $0x328] sm:$0xff]
        %v403 = vld [vmem:[%s255 + $0x330] sm:$0xff]
        %v404 = vld [vmem:[%s255 + $0x338] sm:$0xff]
        %v405 = vld [vmem:[%s255 + $0x340] sm:$0xff]
        %v406 = vld [vmem:[%s255 + $0x348] sm:$0xff]
        %v407 = vld [vmem:[%s255 + $0x350] sm:$0xff]
        %v408 = vld [vmem:[%s255 + $0x358] sm:$0xff]
        %v409 = vld [vmem:[%s255 + $0x360] sm:$0xff]
        %v410 = vld [vmem:[%s255 + $0x368] sm:$0xff]
        %v411 = vld [vmem:[%s255 + $0x370] sm:$0xff]
        %v412 = vld [vmem:[%s255 + $0x378] sm:$0xff]
        %v413 = vld [vmem:[%s255 + $0x380] sm:$0xff]
        %v414 = vld [vmem:[%s255 + $0x388] sm:$0xff]
        %v415 = vld [vmem:[%s255 + $0x390] sm:$0xff]
        %v416 = vld [vmem:[%s255 + $0x398] sm:$0xff]
        %v417 = vld [vmem:[%s255 + $0x3a0] sm:$0xff]
        %v418 = vld [vmem:[%s255 + $0x3a8] sm:$0xff]
        %v419 = vld [vmem:[%s255 + $0x3b0] sm:$0xff]
        %v420 = vld [vmem:[%s255 + $0x3b8] sm:$0xff]
        %v421 = vld [vmem:[%s255 + $0x3c0] sm:$0xff]
        %v422 = vld [vmem:[%s255 + $0x3c8] sm:$0xff]
        %v423 = vld [vmem:[%s255 + $0x3d0] sm:$0xff]
        %v424 = vld [vmem:[%s255 + $0x3d8] sm:$0xff]
        %v425 = vld [vmem:[%s255 + $0x3e0] sm:$0xff]
        %v426 = vld [vmem:[%s255 + $0x3e8] sm:$0xff]
        %v427 = vld [vmem:[%s255 + $0x3f0] sm:$0xff]
        %v428 = vld [vmem:[%s255 + $0x3f8] sm:$0xff]
        %v429 = vld [vmem:[%s255 + $0x400] sm:$0xff]
        %v430 = vld [vmem:[%s255 + $0x408] sm:$0xff]
        %v431 = vld [vmem:[%s255 + $0x410] sm:$0xff]
        %v432 = vld [vmem:[%s255 + $0x418] sm:$0xff]
        %v433 = vld [vmem:[%s255 + $0x420] sm:$0xff]
        %v434 = vld [vmem:[%s255 + $0x428] sm:$0xff]
        %v435 = vld [vmem:[%s255 + $0x430] sm:$0xff]
        %v436 = vld [vmem:[%s255 + $0x438] sm:$0xff]
        %v437 = vld [vmem:[%s255 + $0x440] sm:$0xff]
        %v438 = vld [vmem:[%s255 + $0x448] sm:$0xff]
        %v439 = vld [vmem:[%s255 + $0x450] sm:$0xff]
        %v440 = vld [vmem:[%s255 + $0x458] sm:$0xff]
        %v441 = vld [vmem:[%s255 + $0x460] sm:$0xff]
        %v442 = vld [vmem:[%s255 + $0x468] sm:$0xff]
        %v443 = vld [vmem:[%s255 + $0x470] sm:$0xff]
        %v444 = vld [vmem:[%s255 + $0x478] sm:$0xff]
        %v445 = vld [vmem:[%s255 + $0x480] sm:$0xff]
        %v446 = vld [vmem:[%s255 + $0x488] sm:$0xff]
        %v447 = vld [vmem:[%s255 + $0x490] sm:$0xff]
        %v448 = vld [vmem:[%s255 + $0x498] sm:$0xff]
        %v449 = vld [vmem:[%s255 + $0x4a0] sm:$0xff]
        %v450 = vld [vmem:[%s255 + $0x4a8] sm:$0xff]
        %v451 = vld [vmem:[%s255 + $0x4b0] sm:$0xff]
        %v452 = vld [vmem:[%s255 + $0x4b8] sm:$0xff]
        %v453 = vld [vmem:[%s255 + $0x4c0] sm:$0xff]
        %v454 = vld [vmem:[%s255 + $0x4c8] sm:$0xff]
        %v455 = vld [vmem:[%s255 + $0x4d0] sm:$0xff]
        %v456 = vld [vmem:[%s255 + $0x4d8] sm:$0xff]
        %v457 = vld [vmem:[%s255 + $0x4e0] sm:$0xff]
        %v458 = vld [vmem:[%s255 + $0x4e8] sm:$0xff]
        %v459 = vld [vmem:[%s255 + $0x4f0] sm:$0xff]
        %v460 = vld [vmem:[%s255 + $0x4f8] sm:$0xff]
        %v461 = vld [vmem:[%s255 + $0x500] sm:$0xff]
        %v462 = vld [vmem:[%s255 + $0x508] sm:$0xff]
        %v463 = vld [vmem:[%s255 + $0x510] sm:$0xff]
        %v464 = vld [vmem:[%s255 + $0x518] sm:$0xff]
        %v465 = vld [vmem:[%s255 + $0x520] sm:$0xff]
        %v466 = vld [vmem:[%s255 + $0x528] sm:$0xff]
        %v467 = vld [vmem:[%s255 + $0x530] sm:$0xff]
        %v468 = vld [vmem:[%s255 + $0x538] sm:$0xff]
        %v469 = vld [vmem:[%s255 + $0x540] sm:$0xff]
        %v470 = vld [vmem:[%s255 + $0x548] sm:$0xff]
        %v471 = vld [vmem:[%s255 + $0x550] sm:$0xff]
        %v472 = vld [vmem:[%s255 + $0x558] sm:$0xff]
        %v473 = vld [vmem:[%s255 + $0x560] sm:$0xff]
        %v474 = vld [vmem:[%s255 + $0x568] sm:$0xff]
        %v475 = vld [vmem:[%s255 + $0x570] sm:$0xff]
        %v476 = vld [vmem:[%s255 + $0x578] sm:$0xff]
        %v477 = vld [vmem:[%s255 + $0x580] sm:$0xff]
        %v478 = vld [vmem:[%s255 + $0x588] sm:$0xff]
        %v479 = vld [vmem:[%s255 + $0x590] sm:$0xff]
        %v480 = vld [vmem:[%s255 + $0x598] sm:$0xff]
        %v481 = vld [vmem:[%s255 + $0x5a0] sm:$0xff]
        %v482 = vld [vmem:[%s255 + $0x5a8] sm:$0xff]
        %v483 = vld [vmem:[%s255 + $0x5b0] sm:$0xff]
        %v484 = vld [vmem:[%s255 + $0x5b8] sm:$0xff]
        %v485 = vld [vmem:[%s255 + $0x5c0] sm:$0xff]
        %v486 = vld [vmem:[%s255 + $0x5c8] sm:$0xff]
        %v487 = vld [vmem:[%s255 + $0x5d0] sm:$0xff]
        %v488 = vld [vmem:[%s255 + $0x5d8] sm:$0xff]
        %v489 = vld [vmem:[%s255 + $0x5e0] sm:$0xff]
        %v490 = vld [vmem:[%s255 + $0x5e8] sm:$0xff]
        %v491 = vld [vmem:[%s255 + $0x5f0] sm:$0xff]
        %v492 = vld [vmem:[%s255 + $0x5f8] sm:$0xff]
        %v493 = vld [vmem:[%s255 + $0x600] sm:$0xff]
        %v494 = vld [vmem:[%s255 + $0x608] sm:$0xff]
        %v495 = vld [vmem:[%s255 + $0x610] sm:$0xff]
        %v496 = vld [vmem:[%s255 + $0x618] sm:$0xff]
        %v497 = vld [vmem:[%s255 + $0x620] sm:$0xff]
        %v498 = vld [vmem:[%s255 + $0x628] sm:$0xff]
        %v499 = vld [vmem:[%s255 + $0x630] sm:$0xff]
        %v500 = vld [vmem:[%s255 + $0x638] sm:$0xff]
        %v501 = vld [vmem:[%s255 + $0x640] sm:$0xff]
        %v502 = vld [vmem:[%s255 + $0x648] sm:$0xff]
        %v503 = vld [vmem:[%s255 + $0x650] sm:$0xff]
        %v504 = vld [vmem:[%s255 + $0x658] sm:$0xff]
        %v505 = vld [vmem:[%s255 + $0x660] sm:$0xff]
        %v506 = vld [vmem:[%s255 + $0x668] sm:$0xff]
        %v507 = vld [vmem:[%s255 + $0x670] sm:$0xff]
        %v508 = vld [vmem:[%s255 + $0x678] sm:$0xff]
        %v509 = vld [vmem:[%s255 + $0x680] sm:$0xff]
        %v510 = vld [vmem:[%s255 + $0x688] sm:$0xff]
        %v511 = vld [vmem:[%s255 + $0x690] sm:$0xff]
        %v512 = vld [vmem:[%s255 + $0x698] sm:$0xff]
        %v513 = vld [vmem:[%s255 + $0x6a0] sm:$0xff]
        %v514 = vld [vmem:[%s255 + $0x6a8] sm:$0xff]
        %v515 = vld [vmem:[%s255 + $0x6b0] sm:$0xff]
        %v516 = vld [vmem:[%s255 + $0x6b8] sm:$0xff]
        %v517 = vld [vmem:[%s255 + $0x6c0] sm:$0xff]
        %v518 = vld [vmem:[%s255 + $0x6c8] sm:$0xff]
        %v519 = vld [vmem:[%s255 + $0x6d0] sm:$0xff]
        %v520 = vld [vmem:[%s255 + $0x6d8] sm:$0xff]
        %v521 = vld [vmem:[%s255 + $0x6e0] sm:$0xff]
        %v522 = vld [vmem:[%s255 + $0x6e8] sm:$0xff]
        %v523 = vld [vmem:[%s255 + $0x6f0] sm:$0xff]
        %v524 = vld [vmem:[%s255 + $0x6f8] sm:$0xff]
        %v525 = vld [vmem:[%s255 + $0x700] sm:$0xff]
        %v526 = vld [vmem:[%s255 + $0x708] sm:$0xff]
        %v527 = vld [vmem:[%s255 + $0x710] sm:$0xff]
        %v528 = vld [vmem:[%s255 + $0x718] sm:$0xff]
        %v529 = vld [vmem:[%s255 + $0x720] sm:$0xff]
        %v530 = vld [vmem:[%s255 + $0x728] sm:$0xff]
        %v531 = vld [vmem:[%s255 + $0x730] sm:$0xff]
        %v532 = vld [vmem:[%s255 + $0x738] sm:$0xff]
        %v533 = vld [vmem:[%s255 + $0x740] sm:$0xff]
        %v534 = vld [vmem:[%s255 + $0x748] sm:$0xff]
        %v535 = vld [vmem:[%s255 + $0x750] sm:$0xff]
        %v536 = vld [vmem:[%s255 + $0x758] sm:$0xff]
        %v537 = vld [vmem:[%s255 + $0x760] sm:$0xff]
        %v538 = vld [vmem:[%s255 + $0x768] sm:$0xff]
        %v539 = vld [vmem:[%s255 + $0x770] sm:$0xff]
        %v540 = vld [vmem:[%s255 + $0x778] sm:$0xff]
        %v541 = vld [vmem:[%s255 + $0x780] sm:$0xff]
        %v542 = vld [vmem:[%s255 + $0x788] sm:$0xff]
        %v543 = vld [vmem:[%s255 + $0x790] sm:$0xff]
        %v544 = vld [vmem:[%s255 + $0x798] sm:$0xff]
        %v545 = vld [vmem:[%s255 + $0x7a0] sm:$0xff]
        %v546 = vld [vmem:[%s255 + $0x7a8] sm:$0xff]
        %v547 = vld [vmem:[%s255 + $0x7b0] sm:$0xff]
        %v548 = vld [vmem:[%s255 + $0x7b8] sm:$0xff]
        %v549 = vld [vmem:[%s255 + $0x7c0] sm:$0xff]
        %v550 = vld [vmem:[%s255 + $0x7c8] sm:$0xff]
        %v551 = vld [vmem:[%s255 + $0x7d0] sm:$0xff]
        %v552 = vld [vmem:[%s255 + $0x7d8] sm:$0xff]
        %v553 = vld [vmem:[%s255 + $0x7e0] sm:$0xff]
        %v554 = vld [vmem:[%s255 + $0x7e8] sm:$0xff]
        %v555 = vld [vmem:[%s255 + $0x7f0] sm:$0xff]
        %v556 = vld [vmem:[%s255 + $0x7f8] sm:$0xff]
        %v557 = vpack.c.bf16 %v309, %v301
        %v558 = vpack.c.bf16 %v310, %v302
        %v559 = vpack.c.bf16 %v311, %v303
        %v560 = vpack.c.bf16 %v312, %v304
        %v561 = vpack.c.bf16 %v313, %v305
        %v562 = vpack.c.bf16 %v314, %v306
        %v563 = vpack.c.bf16 %v315, %v307
        %v564 = vpack.c.bf16 %v316, %v308
        %v565 = vpack.c.bf16 %v325, %v317
        %v566 = vpack.c.bf16 %v326, %v318
        %v567 = vpack.c.bf16 %v327, %v319
        %v568 = vpack.c.bf16 %v328, %v320
        %v569 = vpack.c.bf16 %v329, %v321
        %v570 = vpack.c.bf16 %v330, %v322
        %v571 = vpack.c.bf16 %v331, %v323
        %v572 = vpack.c.bf16 %v332, %v324
        %v573 = vpack.c.bf16 %v341, %v333
        %v574 = vpack.c.bf16 %v342, %v334
        %v575 = vpack.c.bf16 %v343, %v335
        %v576 = vpack.c.bf16 %v344, %v336
        %v577 = vpack.c.bf16 %v345, %v337
        %v578 = vpack.c.bf16 %v346, %v338
        %v579 = vpack.c.bf16 %v347, %v339
        %v580 = vpack.c.bf16 %v348, %v340
        %v581 = vpack.c.bf16 %v357, %v349
        %v582 = vpack.c.bf16 %v358, %v350
        %v583 = vpack.c.bf16 %v359, %v351
        %v584 = vpack.c.bf16 %v360, %v352
        %v585 = vpack.c.bf16 %v361, %v353
        %v586 = vpack.c.bf16 %v362, %v354
        %v587 = vpack.c.bf16 %v363, %v355
        %v588 = vpack.c.bf16 %v364, %v356
        %v589 = vpack.c.bf16 %v373, %v365
        %v590 = vpack.c.bf16 %v374, %v366
        %v591 = vpack.c.bf16 %v375, %v367
        %v592 = vpack.c.bf16 %v376, %v368
        %v593 = vpack.c.bf16 %v377, %v369
        %v594 = vpack.c.bf16 %v378, %v370
        %v595 = vpack.c.bf16 %v379, %v371
        %v596 = vpack.c.bf16 %v380, %v372
        %v597 = vpack.c.bf16 %v389, %v381
        %v598 = vpack.c.bf16 %v390, %v382
        %v599 = vpack.c.bf16 %v391, %v383
        %v600 = vpack.c.bf16 %v392, %v384
        %v601 = vpack.c.bf16 %v393, %v385
        %v602 = vpack.c.bf16 %v394, %v386
        %v603 = vpack.c.bf16 %v395, %v387
        %v604 = vpack.c.bf16 %v396, %v388
        %v605 = vpack.c.bf16 %v405, %v397
        %v606 = vpack.c.bf16 %v406, %v398
        %v607 = vpack.c.bf16 %v407, %v399
        %v608 = vpack.c.bf16 %v408, %v400
        %v609 = vpack.c.bf16 %v409, %v401
        %v610 = vpack.c.bf16 %v410, %v402
        %v611 = vpack.c.bf16 %v411, %v403
        %v612 = vpack.c.bf16 %v412, %v404
        %v613 = vpack.c.bf16 %v421, %v413
        %v614 = vpack.c.bf16 %v422, %v414
        %v615 = vpack.c.bf16 %v423, %v415
        %v616 = vpack.c.bf16 %v424, %v416
        %v617 = vpack.c.bf16 %v425, %v417
        %v618 = vpack.c.bf16 %v426, %v418
        %v619 = vpack.c.bf16 %v427, %v419
        %v620 = vpack.c.bf16 %v428, %v420
        %v621 = vpack.c.bf16 %v437, %v429
        %v622 = vpack.c.bf16 %v438, %v430
        %v623 = vpack.c.bf16 %v439, %v431
        %v624 = vpack.c.bf16 %v440, %v432
        %v625 = vpack.c.bf16 %v441, %v433
        %v626 = vpack.c.bf16 %v442, %v434
        %v627 = vpack.c.bf16 %v443, %v435
        %v628 = vpack.c.bf16 %v444, %v436
        %v629 = vpack.c.bf16 %v453, %v445
        %v630 = vpack.c.bf16 %v454, %v446
        %v631 = vpack.c.bf16 %v455, %v447
        %v632 = vpack.c.bf16 %v456, %v448
        %v633 = vpack.c.bf16 %v457, %v449
        %v634 = vpack.c.bf16 %v458, %v450
        %v635 = vpack.c.bf16 %v459, %v451
        %v636 = vpack.c.bf16 %v460, %v452
        %v637 = vpack.c.bf16 %v469, %v461
        %v638 = vpack.c.bf16 %v470, %v462
        %v639 = vpack.c.bf16 %v471, %v463
        %v640 = vpack.c.bf16 %v472, %v464
        %v641 = vpack.c.bf16 %v473, %v465
        %v642 = vpack.c.bf16 %v474, %v466
        %v643 = vpack.c.bf16 %v475, %v467
        %v644 = vpack.c.bf16 %v476, %v468
        %v645 = vpack.c.bf16 %v485, %v477
        %v646 = vpack.c.bf16 %v486, %v478
        %v647 = vpack.c.bf16 %v487, %v479
        %v648 = vpack.c.bf16 %v488, %v480
        %v649 = vpack.c.bf16 %v489, %v481
        %v650 = vpack.c.bf16 %v490, %v482
        %v651 = vpack.c.bf16 %v491, %v483
        %v652 = vpack.c.bf16 %v492, %v484
        %v653 = vpack.c.bf16 %v501, %v493
        %v654 = vpack.c.bf16 %v502, %v494
        %v655 = vpack.c.bf16 %v503, %v495
        %v656 = vpack.c.bf16 %v504, %v496
        %v657 = vpack.c.bf16 %v505, %v497
        %v658 = vpack.c.bf16 %v506, %v498
        %v659 = vpack.c.bf16 %v507, %v499
        %v660 = vpack.c.bf16 %v508, %v500
        %v661 = vpack.c.bf16 %v517, %v509
        %v662 = vpack.c.bf16 %v518, %v510
        %v663 = vpack.c.bf16 %v519, %v511
        %v664 = vpack.c.bf16 %v520, %v512
        %v665 = vpack.c.bf16 %v521, %v513
        %v666 = vpack.c.bf16 %v522, %v514
        %v667 = vpack.c.bf16 %v523, %v515
        %v668 = vpack.c.bf16 %v524, %v516
        %v669 = vpack.c.bf16 %v533, %v525
        %v670 = vpack.c.bf16 %v534, %v526
        %v671 = vpack.c.bf16 %v535, %v527
        %v672 = vpack.c.bf16 %v536, %v528
        %v673 = vpack.c.bf16 %v537, %v529
        %v674 = vpack.c.bf16 %v538, %v530
        %v675 = vpack.c.bf16 %v539, %v531
        %v676 = vpack.c.bf16 %v540, %v532
        %v677 = vpack.c.bf16 %v549, %v541
        %v678 = vpack.c.bf16 %v550, %v542
        %v679 = vpack.c.bf16 %v551, %v543
        %v680 = vpack.c.bf16 %v552, %v544
        %v681 = vpack.c.bf16 %v553, %v545
        %v682 = vpack.c.bf16 %v554, %v546
        %v683 = vpack.c.bf16 %v555, %v547
        %v684 = vpack.c.bf16 %v556, %v548
        %v685 = vld [vmem:[#allocation5] sm:$0xff]
        %v686 = vld [vmem:[#allocation5 + $0x8] sm:$0xff]
        %v687 = vld [vmem:[#allocation5 + $0x10] sm:$0xff]
        %v688 = vld [vmem:[#allocation5 + $0x18] sm:$0xff]
        %v689 = vld [vmem:[#allocation5 + $0x20] sm:$0xff]
        %v690 = vld [vmem:[#allocation5 + $0x28] sm:$0xff]
        %v691 = vld [vmem:[#allocation5 + $0x30] sm:$0xff]
        %v692 = vld [vmem:[#allocation5 + $0x38] sm:$0xff]
        %v693 = vld [vmem:[#allocation5 + $0x40] sm:$0xff]
        %v694 = vld [vmem:[#allocation5 + $0x48] sm:$0xff]
        %v695 = vld [vmem:[#allocation5 + $0x50] sm:$0xff]
        %v696 = vld [vmem:[#allocation5 + $0x58] sm:$0xff]
        %v697 = vld [vmem:[#allocation5 + $0x60] sm:$0xff]
        %v698 = vld [vmem:[#allocation5 + $0x68] sm:$0xff]
        %v699 = vld [vmem:[#allocation5 + $0x70] sm:$0xff]
        %v700 = vld [vmem:[#allocation5 + $0x78] sm:$0xff]
        %v701 = vld [vmem:[#allocation5 + $0x80] sm:$0xff]
        %v702 = vld [vmem:[#allocation5 + $0x88] sm:$0xff]
        %v703 = vld [vmem:[#allocation5 + $0x90] sm:$0xff]
        %v704 = vld [vmem:[#allocation5 + $0x98] sm:$0xff]
        %v705 = vld [vmem:[#allocation5 + $0xa0] sm:$0xff]
        %v706 = vld [vmem:[#allocation5 + $0xa8] sm:$0xff]
        %v707 = vld [vmem:[#allocation5 + $0xb0] sm:$0xff]
        %v708 = vld [vmem:[#allocation5 + $0xb8] sm:$0xff]
        %v709 = vld [vmem:[#allocation5 + $0xc0] sm:$0xff]
        %v710 = vld [vmem:[#allocation5 + $0xc8] sm:$0xff]
        %v711 = vld [vmem:[#allocation5 + $0xd0] sm:$0xff]
        %v712 = vld [vmem:[#allocation5 + $0xd8] sm:$0xff]
        %v713 = vld [vmem:[#allocation5 + $0xe0] sm:$0xff]
        %v714 = vld [vmem:[#allocation5 + $0xe8] sm:$0xff]
        %v715 = vld [vmem:[#allocation5 + $0xf0] sm:$0xff]
        %v716 = vld [vmem:[#allocation5 + $0xf8] sm:$0xff]
        %v717 = vld [vmem:[#allocation5 + $0x100] sm:$0xff]
        %v718 = vld [vmem:[#allocation5 + $0x108] sm:$0xff]
        %v719 = vld [vmem:[#allocation5 + $0x110] sm:$0xff]
        %v720 = vld [vmem:[#allocation5 + $0x118] sm:$0xff]
        %v721 = vld [vmem:[#allocation5 + $0x120] sm:$0xff]
        %v722 = vld [vmem:[#allocation5 + $0x128] sm:$0xff]
        %v723 = vld [vmem:[#allocation5 + $0x130] sm:$0xff]
        %v724 = vld [vmem:[#allocation5 + $0x138] sm:$0xff]
        %v725 = vld [vmem:[#allocation5 + $0x140] sm:$0xff]
        %v726 = vld [vmem:[#allocation5 + $0x148] sm:$0xff]
        %v727 = vld [vmem:[#allocation5 + $0x150] sm:$0xff]
        %v728 = vld [vmem:[#allocation5 + $0x158] sm:$0xff]
        %v729 = vld [vmem:[#allocation5 + $0x160] sm:$0xff]
        %v730 = vld [vmem:[#allocation5 + $0x168] sm:$0xff]
        %v731 = vld [vmem:[#allocation5 + $0x170] sm:$0xff]
        %v732 = vld [vmem:[#allocation5 + $0x178] sm:$0xff]
        %v733 = vld [vmem:[#allocation5 + $0x180] sm:$0xff]
        %v734 = vld [vmem:[#allocation5 + $0x188] sm:$0xff]
        %v735 = vld [vmem:[#allocation5 + $0x190] sm:$0xff]
        %v736 = vld [vmem:[#allocation5 + $0x198] sm:$0xff]
        %v737 = vld [vmem:[#allocation5 + $0x1a0] sm:$0xff]
        %v738 = vld [vmem:[#allocation5 + $0x1a8] sm:$0xff]
        %v739 = vld [vmem:[#allocation5 + $0x1b0] sm:$0xff]
        %v740 = vld [vmem:[#allocation5 + $0x1b8] sm:$0xff]
        %v741 = vld [vmem:[#allocation5 + $0x1c0] sm:$0xff]
        %v742 = vld [vmem:[#allocation5 + $0x1c8] sm:$0xff]
        %v743 = vld [vmem:[#allocation5 + $0x1d0] sm:$0xff]
        %v744 = vld [vmem:[#allocation5 + $0x1d8] sm:$0xff]
        %v745 = vld [vmem:[#allocation5 + $0x1e0] sm:$0xff]
        %v746 = vld [vmem:[#allocation5 + $0x1e8] sm:$0xff]
        %v747 = vld [vmem:[#allocation5 + $0x1f0] sm:$0xff]
        %v748 = vld [vmem:[#allocation5 + $0x1f8] sm:$0xff]
        %v749 = vld [vmem:[#allocation5 + $0x200] sm:$0xff]
        %v750 = vld [vmem:[#allocation5 + $0x208] sm:$0xff]
        %v751 = vld [vmem:[#allocation5 + $0x210] sm:$0xff]
        %v752 = vld [vmem:[#allocation5 + $0x218] sm:$0xff]
        %v753 = vld [vmem:[#allocation5 + $0x220] sm:$0xff]
        %v754 = vld [vmem:[#allocation5 + $0x228] sm:$0xff]
        %v755 = vld [vmem:[#allocation5 + $0x230] sm:$0xff]
        %v756 = vld [vmem:[#allocation5 + $0x238] sm:$0xff]
        %v757 = vld [vmem:[#allocation5 + $0x240] sm:$0xff]
        %v758 = vld [vmem:[#allocation5 + $0x248] sm:$0xff]
        %v759 = vld [vmem:[#allocation5 + $0x250] sm:$0xff]
        %v760 = vld [vmem:[#allocation5 + $0x258] sm:$0xff]
        %v761 = vld [vmem:[#allocation5 + $0x260] sm:$0xff]
        %v762 = vld [vmem:[#allocation5 + $0x268] sm:$0xff]
        %v763 = vld [vmem:[#allocation5 + $0x270] sm:$0xff]
        %v764 = vld [vmem:[#allocation5 + $0x278] sm:$0xff]
        %v765 = vld [vmem:[#allocation5 + $0x280] sm:$0xff]
        %v766 = vld [vmem:[#allocation5 + $0x288] sm:$0xff]
        %v767 = vld [vmem:[#allocation5 + $0x290] sm:$0xff]
        %v768 = vld [vmem:[#allocation5 + $0x298] sm:$0xff]
        %v769 = vld [vmem:[#allocation5 + $0x2a0] sm:$0xff]
        %v770 = vld [vmem:[#allocation5 + $0x2a8] sm:$0xff]
        %v771 = vld [vmem:[#allocation5 + $0x2b0] sm:$0xff]
        %v772 = vld [vmem:[#allocation5 + $0x2b8] sm:$0xff]
        %v773 = vld [vmem:[#allocation5 + $0x2c0] sm:$0xff]
        %v774 = vld [vmem:[#allocation5 + $0x2c8] sm:$0xff]
        %v775 = vld [vmem:[#allocation5 + $0x2d0] sm:$0xff]
        %v776 = vld [vmem:[#allocation5 + $0x2d8] sm:$0xff]
        %v777 = vld [vmem:[#allocation5 + $0x2e0] sm:$0xff]
        %v778 = vld [vmem:[#allocation5 + $0x2e8] sm:$0xff]
        %v779 = vld [vmem:[#allocation5 + $0x2f0] sm:$0xff]
        %v780 = vld [vmem:[#allocation5 + $0x2f8] sm:$0xff]
        %v781 = vld [vmem:[#allocation5 + $0x300] sm:$0xff]
        %v782 = vld [vmem:[#allocation5 + $0x308] sm:$0xff]
        %v783 = vld [vmem:[#allocation5 + $0x310] sm:$0xff]
        %v784 = vld [vmem:[#allocation5 + $0x318] sm:$0xff]
        %v785 = vld [vmem:[#allocation5 + $0x320] sm:$0xff]
        %v786 = vld [vmem:[#allocation5 + $0x328] sm:$0xff]
        %v787 = vld [vmem:[#allocation5 + $0x330] sm:$0xff]
        %v788 = vld [vmem:[#allocation5 + $0x338] sm:$0xff]
        %v789 = vld [vmem:[#allocation5 + $0x340] sm:$0xff]
        %v790 = vld [vmem:[#allocation5 + $0x348] sm:$0xff]
        %v791 = vld [vmem:[#allocation5 + $0x350] sm:$0xff]
        %v792 = vld [vmem:[#allocation5 + $0x358] sm:$0xff]
        %v793 = vld [vmem:[#allocation5 + $0x360] sm:$0xff]
        %v794 = vld [vmem:[#allocation5 + $0x368] sm:$0xff]
        %v795 = vld [vmem:[#allocation5 + $0x370] sm:$0xff]
        %v796 = vld [vmem:[#allocation5 + $0x378] sm:$0xff]
        %v797 = vld [vmem:[#allocation5 + $0x380] sm:$0xff]
        %v798 = vld [vmem:[#allocation5 + $0x388] sm:$0xff]
        %v799 = vld [vmem:[#allocation5 + $0x390] sm:$0xff]
        %v800 = vld [vmem:[#allocation5 + $0x398] sm:$0xff]
        %v801 = vld [vmem:[#allocation5 + $0x3a0] sm:$0xff]
        %v802 = vld [vmem:[#allocation5 + $0x3a8] sm:$0xff]
        %v803 = vld [vmem:[#allocation5 + $0x3b0] sm:$0xff]
        %v804 = vld [vmem:[#allocation5 + $0x3b8] sm:$0xff]
        %v805 = vld [vmem:[#allocation5 + $0x3c0] sm:$0xff]
        %v806 = vld [vmem:[#allocation5 + $0x3c8] sm:$0xff]
        %v807 = vld [vmem:[#allocation5 + $0x3d0] sm:$0xff]
        %v808 = vld [vmem:[#allocation5 + $0x3d8] sm:$0xff]
        %v809 = vld [vmem:[#allocation5 + $0x3e0] sm:$0xff]
        %v810 = vld [vmem:[#allocation5 + $0x3e8] sm:$0xff]
        %v811 = vld [vmem:[#allocation5 + $0x3f0] sm:$0xff]
        %v812 = vld [vmem:[#allocation5 + $0x3f8] sm:$0xff]
        %v813 = vld [vmem:[#allocation5 + $0x400] sm:$0xff]
        %v814 = vld [vmem:[#allocation5 + $0x408] sm:$0xff]
        %v815 = vld [vmem:[#allocation5 + $0x410] sm:$0xff]
        %v816 = vld [vmem:[#allocation5 + $0x418] sm:$0xff]
        %v817 = vld [vmem:[#allocation5 + $0x420] sm:$0xff]
        %v818 = vld [vmem:[#allocation5 + $0x428] sm:$0xff]
        %v819 = vld [vmem:[#allocation5 + $0x430] sm:$0xff]
        %v820 = vld [vmem:[#allocation5 + $0x438] sm:$0xff]
        %v821 = vld [vmem:[#allocation5 + $0x440] sm:$0xff]
        %v822 = vld [vmem:[#allocation5 + $0x448] sm:$0xff]
        %v823 = vld [vmem:[#allocation5 + $0x450] sm:$0xff]
        %v824 = vld [vmem:[#allocation5 + $0x458] sm:$0xff]
        %v825 = vld [vmem:[#allocation5 + $0x460] sm:$0xff]
        %v826 = vld [vmem:[#allocation5 + $0x468] sm:$0xff]
        %v827 = vld [vmem:[#allocation5 + $0x470] sm:$0xff]
        %v828 = vld [vmem:[#allocation5 + $0x478] sm:$0xff]
        %v829 = vld [vmem:[#allocation5 + $0x480] sm:$0xff]
        %v830 = vld [vmem:[#allocation5 + $0x488] sm:$0xff]
        %v831 = vld [vmem:[#allocation5 + $0x490] sm:$0xff]
        %v832 = vld [vmem:[#allocation5 + $0x498] sm:$0xff]
        %v833 = vld [vmem:[#allocation5 + $0x4a0] sm:$0xff]
        %v834 = vld [vmem:[#allocation5 + $0x4a8] sm:$0xff]
        %v835 = vld [vmem:[#allocation5 + $0x4b0] sm:$0xff]
        %v836 = vld [vmem:[#allocation5 + $0x4b8] sm:$0xff]
        %v837 = vld [vmem:[#allocation5 + $0x4c0] sm:$0xff]
        %v838 = vld [vmem:[#allocation5 + $0x4c8] sm:$0xff]
        %v839 = vld [vmem:[#allocation5 + $0x4d0] sm:$0xff]
        %v840 = vld [vmem:[#allocation5 + $0x4d8] sm:$0xff]
        %v841 = vld [vmem:[#allocation5 + $0x4e0] sm:$0xff]
        %v842 = vld [vmem:[#allocation5 + $0x4e8] sm:$0xff]
        %v843 = vld [vmem:[#allocation5 + $0x4f0] sm:$0xff]
        %v844 = vld [vmem:[#allocation5 + $0x4f8] sm:$0xff]
        %v845 = vld [vmem:[#allocation5 + $0x500] sm:$0xff]
        %v846 = vld [vmem:[#allocation5 + $0x508] sm:$0xff]
        %v847 = vld [vmem:[#allocation5 + $0x510] sm:$0xff]
        %v848 = vld [vmem:[#allocation5 + $0x518] sm:$0xff]
        %v849 = vld [vmem:[#allocation5 + $0x520] sm:$0xff]
        %v850 = vld [vmem:[#allocation5 + $0x528] sm:$0xff]
        %v851 = vld [vmem:[#allocation5 + $0x530] sm:$0xff]
        %v852 = vld [vmem:[#allocation5 + $0x538] sm:$0xff]
        %v853 = vld [vmem:[#allocation5 + $0x540] sm:$0xff]
        %v854 = vld [vmem:[#allocation5 + $0x548] sm:$0xff]
        %v855 = vld [vmem:[#allocation5 + $0x550] sm:$0xff]
        %v856 = vld [vmem:[#allocation5 + $0x558] sm:$0xff]
        %v857 = vld [vmem:[#allocation5 + $0x560] sm:$0xff]
        %v858 = vld [vmem:[#allocation5 + $0x568] sm:$0xff]
        %v859 = vld [vmem:[#allocation5 + $0x570] sm:$0xff]
        %v860 = vld [vmem:[#allocation5 + $0x578] sm:$0xff]
        %v861 = vld [vmem:[#allocation5 + $0x580] sm:$0xff]
        %v862 = vld [vmem:[#allocation5 + $0x588] sm:$0xff]
        %v863 = vld [vmem:[#allocation5 + $0x590] sm:$0xff]
        %v864 = vld [vmem:[#allocation5 + $0x598] sm:$0xff]
        %v865 = vld [vmem:[#allocation5 + $0x5a0] sm:$0xff]
        %v866 = vld [vmem:[#allocation5 + $0x5a8] sm:$0xff]
        %v867 = vld [vmem:[#allocation5 + $0x5b0] sm:$0xff]
        %v868 = vld [vmem:[#allocation5 + $0x5b8] sm:$0xff]
        %v869 = vld [vmem:[#allocation5 + $0x5c0] sm:$0xff]
        %v870 = vld [vmem:[#allocation5 + $0x5c8] sm:$0xff]
        %v871 = vld [vmem:[#allocation5 + $0x5d0] sm:$0xff]
        %v872 = vld [vmem:[#allocation5 + $0x5d8] sm:$0xff]
        %v873 = vld [vmem:[#allocation5 + $0x5e0] sm:$0xff]
        %v874 = vld [vmem:[#allocation5 + $0x5e8] sm:$0xff]
        %v875 = vld [vmem:[#allocation5 + $0x5f0] sm:$0xff]
        %v876 = vld [vmem:[#allocation5 + $0x5f8] sm:$0xff]
        %v877 = vld [vmem:[#allocation5 + $0x600] sm:$0xff]
        %v878 = vld [vmem:[#allocation5 + $0x608] sm:$0xff]
        %v879 = vld [vmem:[#allocation5 + $0x610] sm:$0xff]
        %v880 = vld [vmem:[#allocation5 + $0x618] sm:$0xff]
        %v881 = vld [vmem:[#allocation5 + $0x620] sm:$0xff]
        %v882 = vld [vmem:[#allocation5 + $0x628] sm:$0xff]
        %v883 = vld [vmem:[#allocation5 + $0x630] sm:$0xff]
        %v884 = vld [vmem:[#allocation5 + $0x638] sm:$0xff]
        %v885 = vld [vmem:[#allocation5 + $0x640] sm:$0xff]
        %v886 = vld [vmem:[#allocation5 + $0x648] sm:$0xff]
        %v887 = vld [vmem:[#allocation5 + $0x650] sm:$0xff]
        %v888 = vld [vmem:[#allocation5 + $0x658] sm:$0xff]
        %v889 = vld [vmem:[#allocation5 + $0x660] sm:$0xff]
        %v890 = vld [vmem:[#allocation5 + $0x668] sm:$0xff]
        %v891 = vld [vmem:[#allocation5 + $0x670] sm:$0xff]
        %v892 = vld [vmem:[#allocation5 + $0x678] sm:$0xff]
        %v893 = vld [vmem:[#allocation5 + $0x680] sm:$0xff]
        %v894 = vld [vmem:[#allocation5 + $0x688] sm:$0xff]
        %v895 = vld [vmem:[#allocation5 + $0x690] sm:$0xff]
        %v896 = vld [vmem:[#allocation5 + $0x698] sm:$0xff]
        %v897 = vld [vmem:[#allocation5 + $0x6a0] sm:$0xff]
        %v898 = vld [vmem:[#allocation5 + $0x6a8] sm:$0xff]
        %v899 = vld [vmem:[#allocation5 + $0x6b0] sm:$0xff]
        %v900 = vld [vmem:[#allocation5 + $0x6b8] sm:$0xff]
        %v901 = vld [vmem:[#allocation5 + $0x6c0] sm:$0xff]
        %v902 = vld [vmem:[#allocation5 + $0x6c8] sm:$0xff]
        %v903 = vld [vmem:[#allocation5 + $0x6d0] sm:$0xff]
        %v904 = vld [vmem:[#allocation5 + $0x6d8] sm:$0xff]
        %v905 = vld [vmem:[#allocation5 + $0x6e0] sm:$0xff]
        %v906 = vld [vmem:[#allocation5 + $0x6e8] sm:$0xff]
        %v907 = vld [vmem:[#allocation5 + $0x6f0] sm:$0xff]
        %v908 = vld [vmem:[#allocation5 + $0x6f8] sm:$0xff]
        %v909 = vld [vmem:[#allocation5 + $0x700] sm:$0xff]
        %v910 = vld [vmem:[#allocation5 + $0x708] sm:$0xff]
        %v911 = vld [vmem:[#allocation5 + $0x710] sm:$0xff]
        %v912 = vld [vmem:[#allocation5 + $0x718] sm:$0xff]
        %v913 = vld [vmem:[#allocation5 + $0x720] sm:$0xff]
        %v914 = vld [vmem:[#allocation5 + $0x728] sm:$0xff]
        %v915 = vld [vmem:[#allocation5 + $0x730] sm:$0xff]
        %v916 = vld [vmem:[#allocation5 + $0x738] sm:$0xff]
        %v917 = vld [vmem:[#allocation5 + $0x740] sm:$0xff]
        %v918 = vld [vmem:[#allocation5 + $0x748] sm:$0xff]
        %v919 = vld [vmem:[#allocation5 + $0x750] sm:$0xff]
        %v920 = vld [vmem:[#allocation5 + $0x758] sm:$0xff]
        %v921 = vld [vmem:[#allocation5 + $0x760] sm:$0xff]
        %v922 = vld [vmem:[#allocation5 + $0x768] sm:$0xff]
        %v923 = vld [vmem:[#allocation5 + $0x770] sm:$0xff]
        %v924 = vld [vmem:[#allocation5 + $0x778] sm:$0xff]
        %v925 = vld [vmem:[#allocation5 + $0x780] sm:$0xff]
        %v926 = vld [vmem:[#allocation5 + $0x788] sm:$0xff]
        %v927 = vld [vmem:[#allocation5 + $0x790] sm:$0xff]
        %v928 = vld [vmem:[#allocation5 + $0x798] sm:$0xff]
        %v929 = vld [vmem:[#allocation5 + $0x7a0] sm:$0xff]
        %v930 = vld [vmem:[#allocation5 + $0x7a8] sm:$0xff]
        %v931 = vld [vmem:[#allocation5 + $0x7b0] sm:$0xff]
        %v932 = vld [vmem:[#allocation5 + $0x7b8] sm:$0xff]
        %v933 = vld [vmem:[#allocation5 + $0x7c0] sm:$0xff]
        %v934 = vld [vmem:[#allocation5 + $0x7c8] sm:$0xff]
        %v935 = vld [vmem:[#allocation5 + $0x7d0] sm:$0xff]
        %v936 = vld [vmem:[#allocation5 + $0x7d8] sm:$0xff]
        %v937 = vld [vmem:[#allocation5 + $0x7e0] sm:$0xff]
        %v938 = vld [vmem:[#allocation5 + $0x7e8] sm:$0xff]
        %v939 = vld [vmem:[#allocation5 + $0x7f0] sm:$0xff]
        %v940 = vld [vmem:[#allocation5 + $0x7f8] sm:$0xff]
        %v941 = vld [vmem:[#allocation7] sm:$0xf]
        %v943 = vlaneseq
        %v944 = vshrl.u32 %v943, 7
        %v945 = vsub.s32 0, %v944
        %v946 = vrot.slane %v941, %v945
        %v947 = vlaneseq
        %v948 = vshrl.u32 %v947, 7
        %v949 = vsub.s32 1, %v948
        %v950 = vrot.slane %v941, %v949
        %v951 = vlaneseq
        %v952 = vshrl.u32 %v951, 7
        %v953 = vsub.s32 2, %v952
        %v954 = vrot.slane %v941, %v953
        %v955 = vlaneseq
        %v956 = vshrl.u32 %v955, 7
        %v957 = vsub.s32 3, %v956
        %v958 = vrot.slane %v941, %v957
        %v1219 = vunpack.c.l.b16 %v685
        %v1220 = vunpack.c.h.b16 %v685
        %v1221 = vunpack.c.l.b16 %v686
        %v1222 = vunpack.c.h.b16 %v686
        %v1223 = vunpack.c.l.b16 %v687
        %v1224 = vunpack.c.h.b16 %v687
        %v1225 = vunpack.c.l.b16 %v688
        %v1226 = vunpack.c.h.b16 %v688
        %v1227 = vunpack.c.l.b16 %v689
        %v1228 = vunpack.c.h.b16 %v689
        %v1229 = vunpack.c.l.b16 %v690
        %v1230 = vunpack.c.h.b16 %v690
        %v1231 = vunpack.c.l.b16 %v691
        %v1232 = vunpack.c.h.b16 %v691
        %v1233 = vunpack.c.l.b16 %v692
        %v1234 = vunpack.c.h.b16 %v692
        %v1235 = vunpack.c.l.b16 %v693
        %v1236 = vunpack.c.h.b16 %v693
        %v1237 = vunpack.c.l.b16 %v694
        %v1238 = vunpack.c.h.b16 %v694
        %v1239 = vunpack.c.l.b16 %v695
        %v1240 = vunpack.c.h.b16 %v695
        %v1241 = vunpack.c.l.b16 %v696
        %v1242 = vunpack.c.h.b16 %v696
        %v1243 = vunpack.c.l.b16 %v697
        %v1244 = vunpack.c.h.b16 %v697
        %v1245 = vunpack.c.l.b16 %v698
        %v1246 = vunpack.c.h.b16 %v698
        %v1247 = vunpack.c.l.b16 %v699
        %v1248 = vunpack.c.h.b16 %v699
        %v1249 = vunpack.c.l.b16 %v700
        %v1250 = vunpack.c.h.b16 %v700
        %v1251 = vunpack.c.l.b16 %v701
        %v1252 = vunpack.c.h.b16 %v701
        %v1253 = vunpack.c.l.b16 %v702
        %v1254 = vunpack.c.h.b16 %v702
        %v1255 = vunpack.c.l.b16 %v703
        %v1256 = vunpack.c.h.b16 %v703
        %v1257 = vunpack.c.l.b16 %v704
        %v1258 = vunpack.c.h.b16 %v704
        %v1259 = vunpack.c.l.b16 %v705
        %v1260 = vunpack.c.h.b16 %v705
        %v1261 = vunpack.c.l.b16 %v706
        %v1262 = vunpack.c.h.b16 %v706
        %v1263 = vunpack.c.l.b16 %v707
        %v1264 = vunpack.c.h.b16 %v707
        %v1265 = vunpack.c.l.b16 %v708
        %v1266 = vunpack.c.h.b16 %v708
        %v1267 = vunpack.c.l.b16 %v709
        %v1268 = vunpack.c.h.b16 %v709
        %v1269 = vunpack.c.l.b16 %v710
        %v1270 = vunpack.c.h.b16 %v710
        %v1271 = vunpack.c.l.b16 %v711
        %v1272 = vunpack.c.h.b16 %v711
        %v1273 = vunpack.c.l.b16 %v712
        %v1274 = vunpack.c.h.b16 %v712
        %v1275 = vunpack.c.l.b16 %v713
        %v1276 = vunpack.c.h.b16 %v713
        %v1277 = vunpack.c.l.b16 %v714
        %v1278 = vunpack.c.h.b16 %v714
        %v1279 = vunpack.c.l.b16 %v715
        %v1280 = vunpack.c.h.b16 %v715
        %v1281 = vunpack.c.l.b16 %v716
        %v1282 = vunpack.c.h.b16 %v716
        %v1283 = vunpack.c.l.b16 %v717
        %v1284 = vunpack.c.h.b16 %v717
        %v1285 = vunpack.c.l.b16 %v718
        %v1286 = vunpack.c.h.b16 %v718
        %v1287 = vunpack.c.l.b16 %v719
        %v1288 = vunpack.c.h.b16 %v719
        %v1289 = vunpack.c.l.b16 %v720
        %v1290 = vunpack.c.h.b16 %v720
        %v1291 = vunpack.c.l.b16 %v721
        %v1292 = vunpack.c.h.b16 %v721
        %v1293 = vunpack.c.l.b16 %v722
        %v1294 = vunpack.c.h.b16 %v722
        %v1295 = vunpack.c.l.b16 %v723
        %v1296 = vunpack.c.h.b16 %v723
        %v1297 = vunpack.c.l.b16 %v724
        %v1298 = vunpack.c.h.b16 %v724
        %v1299 = vunpack.c.l.b16 %v725
        %v1300 = vunpack.c.h.b16 %v725
        %v1301 = vunpack.c.l.b16 %v726
        %v1302 = vunpack.c.h.b16 %v726
        %v1303 = vunpack.c.l.b16 %v727
        %v1304 = vunpack.c.h.b16 %v727
        %v1305 = vunpack.c.l.b16 %v728
        %v1306 = vunpack.c.h.b16 %v728
        %v1307 = vunpack.c.l.b16 %v729
        %v1308 = vunpack.c.h.b16 %v729
        %v1309 = vunpack.c.l.b16 %v730
        %v1310 = vunpack.c.h.b16 %v730
        %v1311 = vunpack.c.l.b16 %v731
        %v1312 = vunpack.c.h.b16 %v731
        %v1313 = vunpack.c.l.b16 %v732
        %v1314 = vunpack.c.h.b16 %v732
        %v1315 = vunpack.c.l.b16 %v733
        %v1316 = vunpack.c.h.b16 %v733
        %v1317 = vunpack.c.l.b16 %v734
        %v1318 = vunpack.c.h.b16 %v734
        %v1319 = vunpack.c.l.b16 %v735
        %v1320 = vunpack.c.h.b16 %v735
        %v1321 = vunpack.c.l.b16 %v736
        %v1322 = vunpack.c.h.b16 %v736
        %v1323 = vunpack.c.l.b16 %v737
        %v1324 = vunpack.c.h.b16 %v737
        %v1325 = vunpack.c.l.b16 %v738
        %v1326 = vunpack.c.h.b16 %v738
        %v1327 = vunpack.c.l.b16 %v739
        %v1328 = vunpack.c.h.b16 %v739
        %v1329 = vunpack.c.l.b16 %v740
        %v1330 = vunpack.c.h.b16 %v740
        %v1331 = vunpack.c.l.b16 %v741
        %v1332 = vunpack.c.h.b16 %v741
        %v1333 = vunpack.c.l.b16 %v742
        %v1334 = vunpack.c.h.b16 %v742
        %v1335 = vunpack.c.l.b16 %v743
        %v1336 = vunpack.c.h.b16 %v743
        %v1337 = vunpack.c.l.b16 %v744
        %v1338 = vunpack.c.h.b16 %v744
        %v1339 = vunpack.c.l.b16 %v745
        %v1340 = vunpack.c.h.b16 %v745
        %v1341 = vunpack.c.l.b16 %v746
        %v1342 = vunpack.c.h.b16 %v746
        %v1343 = vunpack.c.l.b16 %v747
        %v1344 = vunpack.c.h.b16 %v747
        %v1345 = vunpack.c.l.b16 %v748
        %v1346 = vunpack.c.h.b16 %v748
        %v1347 = vunpack.c.l.b16 %v749
        %v1348 = vunpack.c.h.b16 %v749
        %v1349 = vunpack.c.l.b16 %v750
        %v1350 = vunpack.c.h.b16 %v750
        %v1351 = vunpack.c.l.b16 %v751
        %v1352 = vunpack.c.h.b16 %v751
        %v1353 = vunpack.c.l.b16 %v752
        %v1354 = vunpack.c.h.b16 %v752
        %v1355 = vunpack.c.l.b16 %v753
        %v1356 = vunpack.c.h.b16 %v753
        %v1357 = vunpack.c.l.b16 %v754
        %v1358 = vunpack.c.h.b16 %v754
        %v1359 = vunpack.c.l.b16 %v755
        %v1360 = vunpack.c.h.b16 %v755
        %v1361 = vunpack.c.l.b16 %v756
        %v1362 = vunpack.c.h.b16 %v756
        %v1363 = vunpack.c.l.b16 %v757
        %v1364 = vunpack.c.h.b16 %v757
        %v1365 = vunpack.c.l.b16 %v758
        %v1366 = vunpack.c.h.b16 %v758
        %v1367 = vunpack.c.l.b16 %v759
        %v1368 = vunpack.c.h.b16 %v759
        %v1369 = vunpack.c.l.b16 %v760
        %v1370 = vunpack.c.h.b16 %v760
        %v1371 = vunpack.c.l.b16 %v761
        %v1372 = vunpack.c.h.b16 %v761
        %v1373 = vunpack.c.l.b16 %v762
        %v1374 = vunpack.c.h.b16 %v762
        %v1375 = vunpack.c.l.b16 %v763
        %v1376 = vunpack.c.h.b16 %v763
        %v1377 = vunpack.c.l.b16 %v764
        %v1378 = vunpack.c.h.b16 %v764
        %v1379 = vunpack.c.l.b16 %v765
        %v1380 = vunpack.c.h.b16 %v765
        %v1381 = vunpack.c.l.b16 %v766
        %v1382 = vunpack.c.h.b16 %v766
        %v1383 = vunpack.c.l.b16 %v767
        %v1384 = vunpack.c.h.b16 %v767
        %v1385 = vunpack.c.l.b16 %v768
        %v1386 = vunpack.c.h.b16 %v768
        %v1387 = vunpack.c.l.b16 %v769
        %v1388 = vunpack.c.h.b16 %v769
        %v1389 = vunpack.c.l.b16 %v770
        %v1390 = vunpack.c.h.b16 %v770
        %v1391 = vunpack.c.l.b16 %v771
        %v1392 = vunpack.c.h.b16 %v771
        %v1393 = vunpack.c.l.b16 %v772
        %v1394 = vunpack.c.h.b16 %v772
        %v1395 = vunpack.c.l.b16 %v773
        %v1396 = vunpack.c.h.b16 %v773
        %v1397 = vunpack.c.l.b16 %v774
        %v1398 = vunpack.c.h.b16 %v774
        %v1399 = vunpack.c.l.b16 %v775
        %v1400 = vunpack.c.h.b16 %v775
        %v1401 = vunpack.c.l.b16 %v776
        %v1402 = vunpack.c.h.b16 %v776
        %v1403 = vunpack.c.l.b16 %v777
        %v1404 = vunpack.c.h.b16 %v777
        %v1405 = vunpack.c.l.b16 %v778
        %v1406 = vunpack.c.h.b16 %v778
        %v1407 = vunpack.c.l.b16 %v779
        %v1408 = vunpack.c.h.b16 %v779
        %v1409 = vunpack.c.l.b16 %v780
        %v1410 = vunpack.c.h.b16 %v780
        %v1411 = vunpack.c.l.b16 %v781
        %v1412 = vunpack.c.h.b16 %v781
        %v1413 = vunpack.c.l.b16 %v782
        %v1414 = vunpack.c.h.b16 %v782
        %v1415 = vunpack.c.l.b16 %v783
        %v1416 = vunpack.c.h.b16 %v783
        %v1417 = vunpack.c.l.b16 %v784
        %v1418 = vunpack.c.h.b16 %v784
        %v1419 = vunpack.c.l.b16 %v785
        %v1420 = vunpack.c.h.b16 %v785
        %v1421 = vunpack.c.l.b16 %v786
        %v1422 = vunpack.c.h.b16 %v786
        %v1423 = vunpack.c.l.b16 %v787
        %v1424 = vunpack.c.h.b16 %v787
        %v1425 = vunpack.c.l.b16 %v788
        %v1426 = vunpack.c.h.b16 %v788
        %v1427 = vunpack.c.l.b16 %v789
        %v1428 = vunpack.c.h.b16 %v789
        %v1429 = vunpack.c.l.b16 %v790
        %v1430 = vunpack.c.h.b16 %v790
        %v1431 = vunpack.c.l.b16 %v791
        %v1432 = vunpack.c.h.b16 %v791
        %v1433 = vunpack.c.l.b16 %v792
        %v1434 = vunpack.c.h.b16 %v792
        %v1435 = vunpack.c.l.b16 %v793
        %v1436 = vunpack.c.h.b16 %v793
        %v1437 = vunpack.c.l.b16 %v794
        %v1438 = vunpack.c.h.b16 %v794
        %v1439 = vunpack.c.l.b16 %v795
        %v1440 = vunpack.c.h.b16 %v795
        %v1441 = vunpack.c.l.b16 %v796
        %v1442 = vunpack.c.h.b16 %v796
        %v1443 = vunpack.c.l.b16 %v797
        %v1444 = vunpack.c.h.b16 %v797
        %v1445 = vunpack.c.l.b16 %v798
        %v1446 = vunpack.c.h.b16 %v798
        %v1447 = vunpack.c.l.b16 %v799
        %v1448 = vunpack.c.h.b16 %v799
        %v1449 = vunpack.c.l.b16 %v800
        %v1450 = vunpack.c.h.b16 %v800
        %v1451 = vunpack.c.l.b16 %v801
        %v1452 = vunpack.c.h.b16 %v801
        %v1453 = vunpack.c.l.b16 %v802
        %v1454 = vunpack.c.h.b16 %v802
        %v1455 = vunpack.c.l.b16 %v803
        %v1456 = vunpack.c.h.b16 %v803
        %v1457 = vunpack.c.l.b16 %v804
        %v1458 = vunpack.c.h.b16 %v804
        %v1459 = vunpack.c.l.b16 %v805
        %v1460 = vunpack.c.h.b16 %v805
        %v1461 = vunpack.c.l.b16 %v806
        %v1462 = vunpack.c.h.b16 %v806
        %v1463 = vunpack.c.l.b16 %v807
        %v1464 = vunpack.c.h.b16 %v807
        %v1465 = vunpack.c.l.b16 %v808
        %v1466 = vunpack.c.h.b16 %v808
        %v1467 = vunpack.c.l.b16 %v809
        %v1468 = vunpack.c.h.b16 %v809
        %v1469 = vunpack.c.l.b16 %v810
        %v1470 = vunpack.c.h.b16 %v810
        %v1471 = vunpack.c.l.b16 %v811
        %v1472 = vunpack.c.h.b16 %v811
        %v1473 = vunpack.c.l.b16 %v812
        %v1474 = vunpack.c.h.b16 %v812
        %v1475 = vunpack.c.l.b16 %v813
        %v1476 = vunpack.c.h.b16 %v813
        %v1477 = vunpack.c.l.b16 %v814
        %v1478 = vunpack.c.h.b16 %v814
        %v1479 = vunpack.c.l.b16 %v815
        %v1480 = vunpack.c.h.b16 %v815
        %v1481 = vunpack.c.l.b16 %v816
        %v1482 = vunpack.c.h.b16 %v816
        %v1483 = vunpack.c.l.b16 %v817
        %v1484 = vunpack.c.h.b16 %v817
        %v1485 = vunpack.c.l.b16 %v818
        %v1486 = vunpack.c.h.b16 %v818
        %v1487 = vunpack.c.l.b16 %v819
        %v1488 = vunpack.c.h.b16 %v819
        %v1489 = vunpack.c.l.b16 %v820
        %v1490 = vunpack.c.h.b16 %v820
        %v1491 = vunpack.c.l.b16 %v821
        %v1492 = vunpack.c.h.b16 %v821
        %v1493 = vunpack.c.l.b16 %v822
        %v1494 = vunpack.c.h.b16 %v822
        %v1495 = vunpack.c.l.b16 %v823
        %v1496 = vunpack.c.h.b16 %v823
        %v1497 = vunpack.c.l.b16 %v824
        %v1498 = vunpack.c.h.b16 %v824
        %v1499 = vunpack.c.l.b16 %v825
        %v1500 = vunpack.c.h.b16 %v825
        %v1501 = vunpack.c.l.b16 %v826
        %v1502 = vunpack.c.h.b16 %v826
        %v1503 = vunpack.c.l.b16 %v827
        %v1504 = vunpack.c.h.b16 %v827
        %v1505 = vunpack.c.l.b16 %v828
        %v1506 = vunpack.c.h.b16 %v828
        %v1507 = vunpack.c.l.b16 %v829
        %v1508 = vunpack.c.h.b16 %v829
        %v1509 = vunpack.c.l.b16 %v830
        %v1510 = vunpack.c.h.b16 %v830
        %v1511 = vunpack.c.l.b16 %v831
        %v1512 = vunpack.c.h.b16 %v831
        %v1513 = vunpack.c.l.b16 %v832
        %v1514 = vunpack.c.h.b16 %v832
        %v1515 = vunpack.c.l.b16 %v833
        %v1516 = vunpack.c.h.b16 %v833
        %v1517 = vunpack.c.l.b16 %v834
        %v1518 = vunpack.c.h.b16 %v834
        %v1519 = vunpack.c.l.b16 %v835
        %v1520 = vunpack.c.h.b16 %v835
        %v1521 = vunpack.c.l.b16 %v836
        %v1522 = vunpack.c.h.b16 %v836
        %v1523 = vunpack.c.l.b16 %v837
        %v1524 = vunpack.c.h.b16 %v837
        %v1525 = vunpack.c.l.b16 %v838
        %v1526 = vunpack.c.h.b16 %v838
        %v1527 = vunpack.c.l.b16 %v839
        %v1528 = vunpack.c.h.b16 %v839
        %v1529 = vunpack.c.l.b16 %v840
        %v1530 = vunpack.c.h.b16 %v840
        %v1531 = vunpack.c.l.b16 %v841
        %v1532 = vunpack.c.h.b16 %v841
        %v1533 = vunpack.c.l.b16 %v842
        %v1534 = vunpack.c.h.b16 %v842
        %v1535 = vunpack.c.l.b16 %v843
        %v1536 = vunpack.c.h.b16 %v843
        %v1537 = vunpack.c.l.b16 %v844
        %v1538 = vunpack.c.h.b16 %v844
        %v1539 = vunpack.c.l.b16 %v845
        %v1540 = vunpack.c.h.b16 %v845
        %v1541 = vunpack.c.l.b16 %v846
        %v1542 = vunpack.c.h.b16 %v846
        %v1543 = vunpack.c.l.b16 %v847
        %v1544 = vunpack.c.h.b16 %v847
        %v1545 = vunpack.c.l.b16 %v848
        %v1546 = vunpack.c.h.b16 %v848
        %v1547 = vunpack.c.l.b16 %v849
        %v1548 = vunpack.c.h.b16 %v849
        %v1549 = vunpack.c.l.b16 %v850
        %v1550 = vunpack.c.h.b16 %v850
        %v1551 = vunpack.c.l.b16 %v851
        %v1552 = vunpack.c.h.b16 %v851
        %v1553 = vunpack.c.l.b16 %v852
        %v1554 = vunpack.c.h.b16 %v852
        %v1555 = vunpack.c.l.b16 %v853
        %v1556 = vunpack.c.h.b16 %v853
        %v1557 = vunpack.c.l.b16 %v854
        %v1558 = vunpack.c.h.b16 %v854
        %v1559 = vunpack.c.l.b16 %v855
        %v1560 = vunpack.c.h.b16 %v855
        %v1561 = vunpack.c.l.b16 %v856
        %v1562 = vunpack.c.h.b16 %v856
        %v1563 = vunpack.c.l.b16 %v857
        %v1564 = vunpack.c.h.b16 %v857
        %v1565 = vunpack.c.l.b16 %v858
        %v1566 = vunpack.c.h.b16 %v858
        %v1567 = vunpack.c.l.b16 %v859
        %v1568 = vunpack.c.h.b16 %v859
        %v1569 = vunpack.c.l.b16 %v860
        %v1570 = vunpack.c.h.b16 %v860
        %v1571 = vunpack.c.l.b16 %v861
        %v1572 = vunpack.c.h.b16 %v861
        %v1573 = vunpack.c.l.b16 %v862
        %v1574 = vunpack.c.h.b16 %v862
        %v1575 = vunpack.c.l.b16 %v863
        %v1576 = vunpack.c.h.b16 %v863
        %v1577 = vunpack.c.l.b16 %v864
        %v1578 = vunpack.c.h.b16 %v864
        %v1579 = vunpack.c.l.b16 %v865
        %v1580 = vunpack.c.h.b16 %v865
        %v1581 = vunpack.c.l.b16 %v866
        %v1582 = vunpack.c.h.b16 %v866
        %v1583 = vunpack.c.l.b16 %v867
        %v1584 = vunpack.c.h.b16 %v867
        %v1585 = vunpack.c.l.b16 %v868
        %v1586 = vunpack.c.h.b16 %v868
        %v1587 = vunpack.c.l.b16 %v869
        %v1588 = vunpack.c.h.b16 %v869
        %v1589 = vunpack.c.l.b16 %v870
        %v1590 = vunpack.c.h.b16 %v870
        %v1591 = vunpack.c.l.b16 %v871
        %v1592 = vunpack.c.h.b16 %v871
        %v1593 = vunpack.c.l.b16 %v872
        %v1594 = vunpack.c.h.b16 %v872
        %v1595 = vunpack.c.l.b16 %v873
        %v1596 = vunpack.c.h.b16 %v873
        %v1597 = vunpack.c.l.b16 %v874
        %v1598 = vunpack.c.h.b16 %v874
        %v1599 = vunpack.c.l.b16 %v875
        %v1600 = vunpack.c.h.b16 %v875
        %v1601 = vunpack.c.l.b16 %v876
        %v1602 = vunpack.c.h.b16 %v876
        %v1603 = vunpack.c.l.b16 %v877
        %v1604 = vunpack.c.h.b16 %v877
        %v1605 = vunpack.c.l.b16 %v878
        %v1606 = vunpack.c.h.b16 %v878
        %v1607 = vunpack.c.l.b16 %v879
        %v1608 = vunpack.c.h.b16 %v879
        %v1609 = vunpack.c.l.b16 %v880
        %v1610 = vunpack.c.h.b16 %v880
        %v1611 = vunpack.c.l.b16 %v881
        %v1612 = vunpack.c.h.b16 %v881
        %v1613 = vunpack.c.l.b16 %v882
        %v1614 = vunpack.c.h.b16 %v882
        %v1615 = vunpack.c.l.b16 %v883
        %v1616 = vunpack.c.h.b16 %v883
        %v1617 = vunpack.c.l.b16 %v884
        %v1618 = vunpack.c.h.b16 %v884
        %v1619 = vunpack.c.l.b16 %v885
        %v1620 = vunpack.c.h.b16 %v885
        %v1621 = vunpack.c.l.b16 %v886
        %v1622 = vunpack.c.h.b16 %v886
        %v1623 = vunpack.c.l.b16 %v887
        %v1624 = vunpack.c.h.b16 %v887
        %v1625 = vunpack.c.l.b16 %v888
        %v1626 = vunpack.c.h.b16 %v888
        %v1627 = vunpack.c.l.b16 %v889
        %v1628 = vunpack.c.h.b16 %v889
        %v1629 = vunpack.c.l.b16 %v890
        %v1630 = vunpack.c.h.b16 %v890
        %v1631 = vunpack.c.l.b16 %v891
        %v1632 = vunpack.c.h.b16 %v891
        %v1633 = vunpack.c.l.b16 %v892
        %v1634 = vunpack.c.h.b16 %v892
        %v1635 = vunpack.c.l.b16 %v893
        %v1636 = vunpack.c.h.b16 %v893
        %v1637 = vunpack.c.l.b16 %v894
        %v1638 = vunpack.c.h.b16 %v894
        %v1639 = vunpack.c.l.b16 %v895
        %v1640 = vunpack.c.h.b16 %v895
        %v1641 = vunpack.c.l.b16 %v896
        %v1642 = vunpack.c.h.b16 %v896
        %v1643 = vunpack.c.l.b16 %v897
        %v1644 = vunpack.c.h.b16 %v897
        %v1645 = vunpack.c.l.b16 %v898
        %v1646 = vunpack.c.h.b16 %v898
        %v1647 = vunpack.c.l.b16 %v899
        %v1648 = vunpack.c.h.b16 %v899
        %v1649 = vunpack.c.l.b16 %v900
        %v1650 = vunpack.c.h.b16 %v900
        %v1651 = vunpack.c.l.b16 %v901
        %v1652 = vunpack.c.h.b16 %v901
        %v1653 = vunpack.c.l.b16 %v902
        %v1654 = vunpack.c.h.b16 %v902
        %v1655 = vunpack.c.l.b16 %v903
        %v1656 = vunpack.c.h.b16 %v903
        %v1657 = vunpack.c.l.b16 %v904
        %v1658 = vunpack.c.h.b16 %v904
        %v1659 = vunpack.c.l.b16 %v905
        %v1660 = vunpack.c.h.b16 %v905
        %v1661 = vunpack.c.l.b16 %v906
        %v1662 = vunpack.c.h.b16 %v906
        %v1663 = vunpack.c.l.b16 %v907
        %v1664 = vunpack.c.h.b16 %v907
        %v1665 = vunpack.c.l.b16 %v908
        %v1666 = vunpack.c.h.b16 %v908
        %v1667 = vunpack.c.l.b16 %v909
        %v1668 = vunpack.c.h.b16 %v909
        %v1669 = vunpack.c.l.b16 %v910
        %v1670 = vunpack.c.h.b16 %v910
        %v1671 = vunpack.c.l.b16 %v911
        %v1672 = vunpack.c.h.b16 %v911
        %v1673 = vunpack.c.l.b16 %v912
        %v1674 = vunpack.c.h.b16 %v912
        %v1675 = vunpack.c.l.b16 %v913
        %v1676 = vunpack.c.h.b16 %v913
        %v1677 = vunpack.c.l.b16 %v914
        %v1678 = vunpack.c.h.b16 %v914
        %v1679 = vunpack.c.l.b16 %v915
        %v1680 = vunpack.c.h.b16 %v915
        %v1681 = vunpack.c.l.b16 %v916
        %v1682 = vunpack.c.h.b16 %v916
        %v1683 = vunpack.c.l.b16 %v917
        %v1684 = vunpack.c.h.b16 %v917
        %v1685 = vunpack.c.l.b16 %v918
        %v1686 = vunpack.c.h.b16 %v918
        %v1687 = vunpack.c.l.b16 %v919
        %v1688 = vunpack.c.h.b16 %v919
        %v1689 = vunpack.c.l.b16 %v920
        %v1690 = vunpack.c.h.b16 %v920
        %v1691 = vunpack.c.l.b16 %v921
        %v1692 = vunpack.c.h.b16 %v921
        %v1693 = vunpack.c.l.b16 %v922
        %v1694 = vunpack.c.h.b16 %v922
        %v1695 = vunpack.c.l.b16 %v923
        %v1696 = vunpack.c.h.b16 %v923
        %v1697 = vunpack.c.l.b16 %v924
        %v1698 = vunpack.c.h.b16 %v924
        %v1699 = vunpack.c.l.b16 %v925
        %v1700 = vunpack.c.h.b16 %v925
        %v1701 = vunpack.c.l.b16 %v926
        %v1702 = vunpack.c.h.b16 %v926
        %v1703 = vunpack.c.l.b16 %v927
        %v1704 = vunpack.c.h.b16 %v927
        %v1705 = vunpack.c.l.b16 %v928
        %v1706 = vunpack.c.h.b16 %v928
        %v1707 = vunpack.c.l.b16 %v929
        %v1708 = vunpack.c.h.b16 %v929
        %v1709 = vunpack.c.l.b16 %v930
        %v1710 = vunpack.c.h.b16 %v930
        %v1711 = vunpack.c.l.b16 %v931
        %v1712 = vunpack.c.h.b16 %v931
        %v1713 = vunpack.c.l.b16 %v932
        %v1714 = vunpack.c.h.b16 %v932
        %v1715 = vunpack.c.l.b16 %v933
        %v1716 = vunpack.c.h.b16 %v933
        %v1717 = vunpack.c.l.b16 %v934
        %v1718 = vunpack.c.h.b16 %v934
        %v1719 = vunpack.c.l.b16 %v935
        %v1720 = vunpack.c.h.b16 %v935
        %v1721 = vunpack.c.l.b16 %v936
        %v1722 = vunpack.c.h.b16 %v936
        %v1723 = vunpack.c.l.b16 %v937
        %v1724 = vunpack.c.h.b16 %v937
        %v1725 = vunpack.c.l.b16 %v938
        %v1726 = vunpack.c.h.b16 %v938
        %v1727 = vunpack.c.l.b16 %v939
        %v1728 = vunpack.c.h.b16 %v939
        %v1729 = vunpack.c.l.b16 %v940
        %v1730 = vunpack.c.h.b16 %v940
        %v1731 = vpack.c.b16 %v1223, %v1219
        %v1732 = vpack.c.b16 %v1224, %v1220
        %v1733 = vpack.c.b16 %v1225, %v1221
        %v1734 = vpack.c.b16 %v1226, %v1222
        %v1735 = vpack.c.b16 %v1231, %v1227
        %v1736 = vpack.c.b16 %v1232, %v1228
        %v1737 = vpack.c.b16 %v1233, %v1229
        %v1738 = vpack.c.b16 %v1234, %v1230
        %v1739 = vpack.c.b16 %v1239, %v1235
        %v1740 = vpack.c.b16 %v1240, %v1236
        %v1741 = vpack.c.b16 %v1241, %v1237
        %v1742 = vpack.c.b16 %v1242, %v1238
        %v1743 = vpack.c.b16 %v1247, %v1243
        %v1744 = vpack.c.b16 %v1248, %v1244
        %v1745 = vpack.c.b16 %v1249, %v1245
        %v1746 = vpack.c.b16 %v1250, %v1246
        %v1747 = vpack.c.b16 %v1255, %v1251
        %v1748 = vpack.c.b16 %v1256, %v1252
        %v1749 = vpack.c.b16 %v1257, %v1253
        %v1750 = vpack.c.b16 %v1258, %v1254
        %v1751 = vpack.c.b16 %v1263, %v1259
        %v1752 = vpack.c.b16 %v1264, %v1260
        %v1753 = vpack.c.b16 %v1265, %v1261
        %v1754 = vpack.c.b16 %v1266, %v1262
        %v1755 = vpack.c.b16 %v1271, %v1267
        %v1756 = vpack.c.b16 %v1272, %v1268
        %v1757 = vpack.c.b16 %v1273, %v1269
        %v1758 = vpack.c.b16 %v1274, %v1270
        %v1759 = vpack.c.b16 %v1279, %v1275
        %v1760 = vpack.c.b16 %v1280, %v1276
        %v1761 = vpack.c.b16 %v1281, %v1277
        %v1762 = vpack.c.b16 %v1282, %v1278
        %v1763 = vpack.c.b16 %v1287, %v1283
        %v1764 = vpack.c.b16 %v1288, %v1284
        %v1765 = vpack.c.b16 %v1289, %v1285
        %v1766 = vpack.c.b16 %v1290, %v1286
        %v1767 = vpack.c.b16 %v1295, %v1291
        %v1768 = vpack.c.b16 %v1296, %v1292
        %v1769 = vpack.c.b16 %v1297, %v1293
        %v1770 = vpack.c.b16 %v1298, %v1294
        %v1771 = vpack.c.b16 %v1303, %v1299
        %v1772 = vpack.c.b16 %v1304, %v1300
        %v1773 = vpack.c.b16 %v1305, %v1301
        %v1774 = vpack.c.b16 %v1306, %v1302
        %v1775 = vpack.c.b16 %v1311, %v1307
        %v1776 = vpack.c.b16 %v1312, %v1308
        %v1777 = vpack.c.b16 %v1313, %v1309
        %v1778 = vpack.c.b16 %v1314, %v1310
        %v1779 = vpack.c.b16 %v1319, %v1315
        %v1780 = vpack.c.b16 %v1320, %v1316
        %v1781 = vpack.c.b16 %v1321, %v1317
        %v1782 = vpack.c.b16 %v1322, %v1318
        %v1783 = vpack.c.b16 %v1327, %v1323
        %v1784 = vpack.c.b16 %v1328, %v1324
        %v1785 = vpack.c.b16 %v1329, %v1325
        %v1786 = vpack.c.b16 %v1330, %v1326
        %v1787 = vpack.c.b16 %v1335, %v1331
        %v1788 = vpack.c.b16 %v1336, %v1332
        %v1789 = vpack.c.b16 %v1337, %v1333
        %v1790 = vpack.c.b16 %v1338, %v1334
        %v1791 = vpack.c.b16 %v1343, %v1339
        %v1792 = vpack.c.b16 %v1344, %v1340
        %v1793 = vpack.c.b16 %v1345, %v1341
        %v1794 = vpack.c.b16 %v1346, %v1342
        %v1795 = vpack.c.b16 %v1351, %v1347
        %v1796 = vpack.c.b16 %v1352, %v1348
        %v1797 = vpack.c.b16 %v1353, %v1349
        %v1798 = vpack.c.b16 %v1354, %v1350
        %v1799 = vpack.c.b16 %v1359, %v1355
        %v1800 = vpack.c.b16 %v1360, %v1356
        %v1801 = vpack.c.b16 %v1361, %v1357
        %v1802 = vpack.c.b16 %v1362, %v1358
        %v1803 = vpack.c.b16 %v1367, %v1363
        %v1804 = vpack.c.b16 %v1368, %v1364
        %v1805 = vpack.c.b16 %v1369, %v1365
        %v1806 = vpack.c.b16 %v1370, %v1366
        %v1807 = vpack.c.b16 %v1375, %v1371
        %v1808 = vpack.c.b16 %v1376, %v1372
        %v1809 = vpack.c.b16 %v1377, %v1373
        %v1810 = vpack.c.b16 %v1378, %v1374
        %v1811 = vpack.c.b16 %v1383, %v1379
        %v1812 = vpack.c.b16 %v1384, %v1380
        %v1813 = vpack.c.b16 %v1385, %v1381
        %v1814 = vpack.c.b16 %v1386, %v1382
        %v1815 = vpack.c.b16 %v1391, %v1387
        %v1816 = vpack.c.b16 %v1392, %v1388
        %v1817 = vpack.c.b16 %v1393, %v1389
        %v1818 = vpack.c.b16 %v1394, %v1390
        %v1819 = vpack.c.b16 %v1399, %v1395
        %v1820 = vpack.c.b16 %v1400, %v1396
        %v1821 = vpack.c.b16 %v1401, %v1397
        %v1822 = vpack.c.b16 %v1402, %v1398
        %v1823 = vpack.c.b16 %v1407, %v1403
        %v1824 = vpack.c.b16 %v1408, %v1404
        %v1825 = vpack.c.b16 %v1409, %v1405
        %v1826 = vpack.c.b16 %v1410, %v1406
        %v1827 = vpack.c.b16 %v1415, %v1411
        %v1828 = vpack.c.b16 %v1416, %v1412
        %v1829 = vpack.c.b16 %v1417, %v1413
        %v1830 = vpack.c.b16 %v1418, %v1414
        %v1831 = vpack.c.b16 %v1423, %v1419
        %v1832 = vpack.c.b16 %v1424, %v1420
        %v1833 = vpack.c.b16 %v1425, %v1421
        %v1834 = vpack.c.b16 %v1426, %v1422
        %v1835 = vpack.c.b16 %v1431, %v1427
        %v1836 = vpack.c.b16 %v1432, %v1428
        %v1837 = vpack.c.b16 %v1433, %v1429
        %v1838 = vpack.c.b16 %v1434, %v1430
        %v1839 = vpack.c.b16 %v1439, %v1435
        %v1840 = vpack.c.b16 %v1440, %v1436
        %v1841 = vpack.c.b16 %v1441, %v1437
        %v1842 = vpack.c.b16 %v1442, %v1438
        %v1843 = vpack.c.b16 %v1447, %v1443
        %v1844 = vpack.c.b16 %v1448, %v1444
        %v1845 = vpack.c.b16 %v1449, %v1445
        %v1846 = vpack.c.b16 %v1450, %v1446
        %v1847 = vpack.c.b16 %v1455, %v1451
        %v1848 = vpack.c.b16 %v1456, %v1452
        %v1849 = vpack.c.b16 %v1457, %v1453
        %v1850 = vpack.c.b16 %v1458, %v1454
        %v1851 = vpack.c.b16 %v1463, %v1459
        %v1852 = vpack.c.b16 %v1464, %v1460
        %v1853 = vpack.c.b16 %v1465, %v1461
        %v1854 = vpack.c.b16 %v1466, %v1462
        %v1855 = vpack.c.b16 %v1471, %v1467
        %v1856 = vpack.c.b16 %v1472, %v1468
        %v1857 = vpack.c.b16 %v1473, %v1469
        %v1858 = vpack.c.b16 %v1474, %v1470
        %v1859 = vpack.c.b16 %v1479, %v1475
        %v1860 = vpack.c.b16 %v1480, %v1476
        %v1861 = vpack.c.b16 %v1481, %v1477
        %v1862 = vpack.c.b16 %v1482, %v1478
        %v1863 = vpack.c.b16 %v1487, %v1483
        %v1864 = vpack.c.b16 %v1488, %v1484
        %v1865 = vpack.c.b16 %v1489, %v1485
        %v1866 = vpack.c.b16 %v1490, %v1486
        %v1867 = vpack.c.b16 %v1495, %v1491
        %v1868 = vpack.c.b16 %v1496, %v1492
        %v1869 = vpack.c.b16 %v1497, %v1493
        %v1870 = vpack.c.b16 %v1498, %v1494
        %v1871 = vpack.c.b16 %v1503, %v1499
        %v1872 = vpack.c.b16 %v1504, %v1500
        %v1873 = vpack.c.b16 %v1505, %v1501
        %v1874 = vpack.c.b16 %v1506, %v1502
        %v1875 = vpack.c.b16 %v1511, %v1507
        %v1876 = vpack.c.b16 %v1512, %v1508
        %v1877 = vpack.c.b16 %v1513, %v1509
        %v1878 = vpack.c.b16 %v1514, %v1510
        %v1879 = vpack.c.b16 %v1519, %v1515
        %v1880 = vpack.c.b16 %v1520, %v1516
        %v1881 = vpack.c.b16 %v1521, %v1517
        %v1882 = vpack.c.b16 %v1522, %v1518
        %v1883 = vpack.c.b16 %v1527, %v1523
        %v1884 = vpack.c.b16 %v1528, %v1524
        %v1885 = vpack.c.b16 %v1529, %v1525
        %v1886 = vpack.c.b16 %v1530, %v1526
        %v1887 = vpack.c.b16 %v1535, %v1531
        %v1888 = vpack.c.b16 %v1536, %v1532
        %v1889 = vpack.c.b16 %v1537, %v1533
        %v1890 = vpack.c.b16 %v1538, %v1534
        %v1891 = vpack.c.b16 %v1543, %v1539
        %v1892 = vpack.c.b16 %v1544, %v1540
        %v1893 = vpack.c.b16 %v1545, %v1541
        %v1894 = vpack.c.b16 %v1546, %v1542
        %v1895 = vpack.c.b16 %v1551, %v1547
        %v1896 = vpack.c.b16 %v1552, %v1548
        %v1897 = vpack.c.b16 %v1553, %v1549
        %v1898 = vpack.c.b16 %v1554, %v1550
        %v1899 = vpack.c.b16 %v1559, %v1555
        %v1900 = vpack.c.b16 %v1560, %v1556
        %v1901 = vpack.c.b16 %v1561, %v1557
        %v1902 = vpack.c.b16 %v1562, %v1558
        %v1903 = vpack.c.b16 %v1567, %v1563
        %v1904 = vpack.c.b16 %v1568, %v1564
        %v1905 = vpack.c.b16 %v1569, %v1565
        %v1906 = vpack.c.b16 %v1570, %v1566
        %v1907 = vpack.c.b16 %v1575, %v1571
        %v1908 = vpack.c.b16 %v1576, %v1572
        %v1909 = vpack.c.b16 %v1577, %v1573
        %v1910 = vpack.c.b16 %v1578, %v1574
        %v1911 = vpack.c.b16 %v1583, %v1579
        %v1912 = vpack.c.b16 %v1584, %v1580
        %v1913 = vpack.c.b16 %v1585, %v1581
        %v1914 = vpack.c.b16 %v1586, %v1582
        %v1915 = vpack.c.b16 %v1591, %v1587
        %v1916 = vpack.c.b16 %v1592, %v1588
        %v1917 = vpack.c.b16 %v1593, %v1589
        %v1918 = vpack.c.b16 %v1594, %v1590
        %v1919 = vpack.c.b16 %v1599, %v1595
        %v1920 = vpack.c.b16 %v1600, %v1596
        %v1921 = vpack.c.b16 %v1601, %v1597
        %v1922 = vpack.c.b16 %v1602, %v1598
        %v1923 = vpack.c.b16 %v1607, %v1603
        %v1924 = vpack.c.b16 %v1608, %v1604
        %v1925 = vpack.c.b16 %v1609, %v1605
        %v1926 = vpack.c.b16 %v1610, %v1606
        %v1927 = vpack.c.b16 %v1615, %v1611
        %v1928 = vpack.c.b16 %v1616, %v1612
        %v1929 = vpack.c.b16 %v1617, %v1613
        %v1930 = vpack.c.b16 %v1618, %v1614
        %v1931 = vpack.c.b16 %v1623, %v1619
        %v1932 = vpack.c.b16 %v1624, %v1620
        %v1933 = vpack.c.b16 %v1625, %v1621
        %v1934 = vpack.c.b16 %v1626, %v1622
        %v1935 = vpack.c.b16 %v1631, %v1627
        %v1936 = vpack.c.b16 %v1632, %v1628
        %v1937 = vpack.c.b16 %v1633, %v1629
        %v1938 = vpack.c.b16 %v1634, %v1630
        %v1939 = vpack.c.b16 %v1639, %v1635
        %v1940 = vpack.c.b16 %v1640, %v1636
        %v1941 = vpack.c.b16 %v1641, %v1637
        %v1942 = vpack.c.b16 %v1642, %v1638
        %v1943 = vpack.c.b16 %v1647, %v1643
        %v1944 = vpack.c.b16 %v1648, %v1644
        %v1945 = vpack.c.b16 %v1649, %v1645
        %v1946 = vpack.c.b16 %v1650, %v1646
        %v1947 = vpack.c.b16 %v1655, %v1651
        %v1948 = vpack.c.b16 %v1656, %v1652
        %v1949 = vpack.c.b16 %v1657, %v1653
        %v1950 = vpack.c.b16 %v1658, %v1654
        %v1951 = vpack.c.b16 %v1663, %v1659
        %v1952 = vpack.c.b16 %v1664, %v1660
        %v1953 = vpack.c.b16 %v1665, %v1661
        %v1954 = vpack.c.b16 %v1666, %v1662
        %v1955 = vpack.c.b16 %v1671, %v1667
        %v1956 = vpack.c.b16 %v1672, %v1668
        %v1957 = vpack.c.b16 %v1673, %v1669
        %v1958 = vpack.c.b16 %v1674, %v1670
        %v1959 = vpack.c.b16 %v1679, %v1675
        %v1960 = vpack.c.b16 %v1680, %v1676
        %v1961 = vpack.c.b16 %v1681, %v1677
        %v1962 = vpack.c.b16 %v1682, %v1678
        %v1963 = vpack.c.b16 %v1687, %v1683
        %v1964 = vpack.c.b16 %v1688, %v1684
        %v1965 = vpack.c.b16 %v1689, %v1685
        %v1966 = vpack.c.b16 %v1690, %v1686
        %v1967 = vpack.c.b16 %v1695, %v1691
        %v1968 = vpack.c.b16 %v1696, %v1692
        %v1969 = vpack.c.b16 %v1697, %v1693
        %v1970 = vpack.c.b16 %v1698, %v1694
        %v1971 = vpack.c.b16 %v1703, %v1699
        %v1972 = vpack.c.b16 %v1704, %v1700
        %v1973 = vpack.c.b16 %v1705, %v1701
        %v1974 = vpack.c.b16 %v1706, %v1702
        %v1975 = vpack.c.b16 %v1711, %v1707
        %v1976 = vpack.c.b16 %v1712, %v1708
        %v1977 = vpack.c.b16 %v1713, %v1709
        %v1978 = vpack.c.b16 %v1714, %v1710
        %v1979 = vpack.c.b16 %v1719, %v1715
        %v1980 = vpack.c.b16 %v1720, %v1716
        %v1981 = vpack.c.b16 %v1721, %v1717
        %v1982 = vpack.c.b16 %v1722, %v1718
        %v1983 = vpack.c.b16 %v1727, %v1723
        %v1984 = vpack.c.b16 %v1728, %v1724
        %v1985 = vpack.c.b16 %v1729, %v1725
        %v1986 = vpack.c.b16 %v1730, %v1726
        %2243 = vmatprep.subr.bf16.mxu0 %v1732
        %2244 = vmatpush1.bf16.msra.mxu0 %v1731
        %2245 = vmatprep.subr.bf16.mxu0 %v1736
        %2246 = vmatpush1.bf16.msra.mxu0 %v1735
        %2247 = vmatprep.subr.bf16.mxu0 %v1740
        %2248 = vmatpush1.bf16.msra.mxu0 %v1739
        %2249 = vmatprep.subr.bf16.mxu0 %v1744
        %2250 = vmatpush1.bf16.msra.mxu0 %v1743
        %2251 = vmatprep.subr.bf16.mxu0 %v1748
        %2252 = vmatpush1.bf16.msra.mxu0 %v1747
        %2253 = vmatprep.subr.bf16.mxu0 %v1752
        %2254 = vmatpush1.bf16.msra.mxu0 %v1751
        %2255 = vmatprep.subr.bf16.mxu0 %v1756
        %2256 = vmatpush1.bf16.msra.mxu0 %v1755
        %2257 = vmatprep.subr.bf16.mxu0 %v1760
        %2258 = vmatpush1.bf16.msra.mxu0 %v1759
        %2259 = vmatprep.subr.bf16.mxu0 %v1764
        %2260 = vmatpush1.bf16.msra.mxu0 %v1763
        %2261 = vmatprep.subr.bf16.mxu0 %v1768
        %2262 = vmatpush1.bf16.msra.mxu0 %v1767
        %2263 = vmatprep.subr.bf16.mxu0 %v1772
        %2264 = vmatpush1.bf16.msra.mxu0 %v1771
        %2265 = vmatprep.subr.bf16.mxu0 %v1776
        %2266 = vmatpush1.bf16.msra.mxu0 %v1775
        %2267 = vmatprep.subr.bf16.mxu0 %v1780
        %2268 = vmatpush1.bf16.msra.mxu0 %v1779
        %2269 = vmatprep.subr.bf16.mxu0 %v1784
        %2270 = vmatpush1.bf16.msra.mxu0 %v1783
        %2271 = vmatprep.subr.bf16.mxu0 %v1788
        %2272 = vmatpush1.bf16.msra.mxu0 %v1787
        %2273 = vmatprep.subr.bf16.mxu0 %v1792
        %2274 = vmatpush1.bf16.msra.mxu0 %v1791
        %2275 = vmatprep.mubr.bf16.mxu0 %v558
        %2276 = vmatmul.mubr.bf16.gmra.mrb[0].mxu0 %v557
        %v2277 = vpop.f32.mrb[0].mxu0
        %v2278 = vadd.f32 %v946, %v2277
        %v2279 = vpop.f32.mrb[0].mxu0
        %v2280 = vadd.f32 %v950, %v2279
        %v2281 = vpop.f32.mrb[0].mxu0
        %v2282 = vadd.f32 %v946, %v2281
        %v2283 = vpop.f32.mrb[0].mxu0
        %v2284 = vadd.f32 %v950, %v2283
        %2285 = vmatprep.mubr.bf16.mxu0 %v566
        %2286 = vmatmul.mubr.bf16.gmra.mrb[0].mxu0 %v565
        %v2287 = vpop.f32.mrb[0].mxu0
        %v2288 = vadd.f32 %v946, %v2287
        %v2289 = vpop.f32.mrb[0].mxu0
        %v2290 = vadd.f32 %v950, %v2289
        %v2291 = vpop.f32.mrb[0].mxu0
        %v2292 = vadd.f32 %v946, %v2291
        %v2293 = vpop.f32.mrb[0].mxu0
        %v2294 = vadd.f32 %v950, %v2293
        %2295 = vmatprep.mubr.bf16.mxu0 %v574
        %2296 = vmatmul.mubr.bf16.gmra.mrb[0].mxu0 %v573
        %v2297 = vpop.f32.mrb[0].mxu0
        %v2298 = vadd.f32 %v946, %v2297
        %v2299 = vpop.f32.mrb[0].mxu0
        %v2300 = vadd.f32 %v950, %v2299
        %v2301 = vpop.f32.mrb[0].mxu0
        %v2302 = vadd.f32 %v946, %v2301
        %v2303 = vpop.f32.mrb[0].mxu0
        %v2304 = vadd.f32 %v950, %v2303
        %2305 = vmatprep.mubr.bf16.mxu0 %v582
        %2306 = vmatmul.mubr.bf16.gmra.mrb[0].mxu0 %v581
        %v2307 = vpop.f32.mrb[0].mxu0
        %v2308 = vadd.f32 %v946, %v2307
        %v2309 = vpop.f32.mrb[0].mxu0
        %v2310 = vadd.f32 %v950, %v2309
        %v2311 = vpop.f32.mrb[0].mxu0
        %v2312 = vadd.f32 %v946, %v2311
        %v2313 = vpop.f32.mrb[0].mxu0
        %v2314 = vadd.f32 %v950, %v2313
        %2315 = vmatprep.mubr.bf16.mxu0 %v590
        %2316 = vmatmul.mubr.bf16.gmra.mrb[0].mxu0 %v589
        %v2317 = vpop.f32.mrb[0].mxu0
        %v2318 = vadd.f32 %v946, %v2317
        %v2319 = vpop.f32.mrb[0].mxu0
        %v2320 = vadd.f32 %v950, %v2319
        %v2321 = vpop.f32.mrb[0].mxu0
        %v2322 = vadd.f32 %v946, %v2321
        %v2323 = vpop.f32.mrb[0].mxu0
        %v2324 = vadd.f32 %v950, %v2323
        %2325 = vmatprep.mubr.bf16.mxu0 %v598
        %2326 = vmatmul.mubr.bf16.gmra.mrb[0].mxu0 %v597
        %v2327 = vpop.f32.mrb[0].mxu0
        %v2328 = vadd.f32 %v946, %v2327
        %v2329 = vpop.f32.mrb[0].mxu0
        %v2330 = vadd.f32 %v950, %v2329
        %v2331 = vpop.f32.mrb[0].mxu0
        %v2332 = vadd.f32 %v946, %v2331
        %v2333 = vpop.f32.mrb[0].mxu0
        %v2334 = vadd.f32 %v950, %v2333
        %2335 = vmatprep.mubr.bf16.mxu0 %v606
        %2336 = vmatmul.mubr.bf16.gmra.mrb[0].mxu0 %v605
        %v2337 = vpop.f32.mrb[0].mxu0
        %v2338 = vadd.f32 %v946, %v2337
        %v2339 = vpop.f32.mrb[0].mxu0
        %v2340 = vadd.f32 %v950, %v2339
        %v2341 = vpop.f32.mrb[0].mxu0
        %v2342 = vadd.f32 %v946, %v2341
        %v2343 = vpop.f32.mrb[0].mxu0
        %v2344 = vadd.f32 %v950, %v2343
        %2345 = vmatprep.mubr.bf16.mxu0 %v614
        %2346 = vmatmul.mubr.bf16.gmra.mrb[0].mxu0 %v613
        %v2347 = vpop.f32.mrb[0].mxu0
        %v2348 = vadd.f32 %v946, %v2347
        %v2349 = vpop.f32.mrb[0].mxu0
        %v2350 = vadd.f32 %v950, %v2349
        %v2351 = vpop.f32.mrb[0].mxu0
        %v2352 = vadd.f32 %v946, %v2351
        %v2353 = vpop.f32.mrb[0].mxu0
        %v2354 = vadd.f32 %v950, %v2353
        %2355 = vmatprep.mubr.bf16.mxu0 %v622
        %2356 = vmatmul.mubr.bf16.gmra.mrb[0].mxu0 %v621
        %v2357 = vpop.f32.mrb[0].mxu0
        %v2358 = vadd.f32 %v946, %v2357
        %v2359 = vpop.f32.mrb[0].mxu0
        %v2360 = vadd.f32 %v950, %v2359
        %v2361 = vpop.f32.mrb[0].mxu0
        %v2362 = vadd.f32 %v946, %v2361
        %v2363 = vpop.f32.mrb[0].mxu0
        %v2364 = vadd.f32 %v950, %v2363
        %2365 = vmatprep.mubr.bf16.mxu0 %v630
        %2366 = vmatmul.mubr.bf16.gmra.mrb[0].mxu0 %v629
        %v2367 = vpop.f32.mrb[0].mxu0
        %v2368 = vadd.f32 %v946, %v2367
        %v2369 = vpop.f32.mrb[0].mxu0
        %v2370 = vadd.f32 %v950, %v2369
        %v2371 = vpop.f32.mrb[0].mxu0
        %v2372 = vadd.f32 %v946, %v2371
        %v2373 = vpop.f32.mrb[0].mxu0
        %v2374 = vadd.f32 %v950, %v2373
        %2375 = vmatprep.mubr.bf16.mxu0 %v638
        %2376 = vmatmul.mubr.bf16.gmra.mrb[0].mxu0 %v637
        %v2377 = vpop.f32.mrb[0].mxu0
        %v2378 = vadd.f32 %v946, %v2377
        %v2379 = vpop.f32.mrb[0].mxu0
        %v2380 = vadd.f32 %v950, %v2379
        %v2381 = vpop.f32.mrb[0].mxu0
        %v2382 = vadd.f32 %v946, %v2381
        %v2383 = vpop.f32.mrb[0].mxu0
        %v2384 = vadd.f32 %v950, %v2383
        %2385 = vmatprep.mubr.bf16.mxu0 %v646
        %2386 = vmatmul.mubr.bf16.gmra.mrb[0].mxu0 %v645
        %v2387 = vpop.f32.mrb[0].mxu0
        %v2388 = vadd.f32 %v946, %v2387
        %v2389 = vpop.f32.mrb[0].mxu0
        %v2390 = vadd.f32 %v950, %v2389
        %v2391 = vpop.f32.mrb[0].mxu0
        %v2392 = vadd.f32 %v946, %v2391
        %v2393 = vpop.f32.mrb[0].mxu0
        %v2394 = vadd.f32 %v950, %v2393
        %2395 = vmatprep.mubr.bf16.mxu0 %v654
        %2396 = vmatmul.mubr.bf16.gmra.mrb[0].mxu0 %v653
        %v2397 = vpop.f32.mrb[0].mxu0
        %v2398 = vadd.f32 %v946, %v2397
        %v2399 = vpop.f32.mrb[0].mxu0
        %v2400 = vadd.f32 %v950, %v2399
        %v2401 = vpop.f32.mrb[0].mxu0
        %v2402 = vadd.f32 %v946, %v2401
        %v2403 = vpop.f32.mrb[0].mxu0
        %v2404 = vadd.f32 %v950, %v2403
        %2405 = vmatprep.mubr.bf16.mxu0 %v662
        %2406 = vmatmul.mubr.bf16.gmra.mrb[0].mxu0 %v661
        %v2407 = vpop.f32.mrb[0].mxu0
        %v2408 = vadd.f32 %v946, %v2407
        %v2409 = vpop.f32.mrb[0].mxu0
        %v2410 = vadd.f32 %v950, %v2409
        %v2411 = vpop.f32.mrb[0].mxu0
        %v2412 = vadd.f32 %v946, %v2411
        %v2413 = vpop.f32.mrb[0].mxu0
        %v2414 = vadd.f32 %v950, %v2413
        %2415 = vmatprep.mubr.bf16.mxu0 %v670
        %2416 = vmatmul.mubr.bf16.gmra.mrb[0].mxu0 %v669
        %v2417 = vpop.f32.mrb[0].mxu0
        %v2418 = vadd.f32 %v946, %v2417
        %v2419 = vpop.f32.mrb[0].mxu0
        %v2420 = vadd.f32 %v950, %v2419
        %v2421 = vpop.f32.mrb[0].mxu0
        %v2422 = vadd.f32 %v946, %v2421
        %v2423 = vpop.f32.mrb[0].mxu0
        %v2424 = vadd.f32 %v950, %v2423
        %2425 = vmatprep.mubr.bf16.mxu0 %v678
        %2426 = vmatmul.mubr.bf16.gmra.mrb[0].mxu0 %v677
        %v2427 = vpop.f32.mrb[0].mxu0
        %v2428 = vadd.f32 %v946, %v2427
        %v2429 = vpop.f32.mrb[0].mxu0
        %v2430 = vadd.f32 %v950, %v2429
        %v2431 = vpop.f32.mrb[0].mxu0
        %v2432 = vadd.f32 %v946, %v2431
        %v2433 = vpop.f32.mrb[0].mxu0
        %v2434 = vadd.f32 %v950, %v2433
        %2435 = vdwg.mxu0
        %2436 = vmatprep.subr.bf16.mxu0 %v1796
        %2437 = vmatpush1.bf16.msra.mxu0 %v1795
        %2438 = vmatprep.subr.bf16.mxu0 %v1800
        %2439 = vmatpush1.bf16.msra.mxu0 %v1799
        %2440 = vmatprep.subr.bf16.mxu0 %v1804
        %2441 = vmatpush1.bf16.msra.mxu0 %v1803
        %2442 = vmatprep.subr.bf16.mxu0 %v1808
        %2443 = vmatpush1.bf16.msra.mxu0 %v1807
        %2444 = vmatprep.subr.bf16.mxu0 %v1812
        %2445 = vmatpush1.bf16.msra.mxu0 %v1811
        %2446 = vmatprep.subr.bf16.mxu0 %v1816
        %2447 = vmatpush1.bf16.msra.mxu0 %v1815
        %2448 = vmatprep.subr.bf16.mxu0 %v1820
        %2449 = vmatpush1.bf16.msra.mxu0 %v1819
        %2450 = vmatprep.subr.bf16.mxu0 %v1824
        %2451 = vmatpush1.bf16.msra.mxu0 %v1823
        %2452 = vmatprep.subr.bf16.mxu0 %v1828
        %2453 = vmatpush1.bf16.msra.mxu0 %v1827
        %2454 = vmatprep.subr.bf16.mxu0 %v1832
        %2455 = vmatpush1.bf16.msra.mxu0 %v1831
        %2456 = vmatprep.subr.bf16.mxu0 %v1836
        %2457 = vmatpush1.bf16.msra.mxu0 %v1835
        %2458 = vmatprep.subr.bf16.mxu0 %v1840
        %2459 = vmatpush1.bf16.msra.mxu0 %v1839
        %2460 = vmatprep.subr.bf16.mxu0 %v1844
        %2461 = vmatpush1.bf16.msra.mxu0 %v1843
        %2462 = vmatprep.subr.bf16.mxu0 %v1848
        %2463 = vmatpush1.bf16.msra.mxu0 %v1847
        %2464 = vmatprep.subr.bf16.mxu0 %v1852
        %2465 = vmatpush1.bf16.msra.mxu0 %v1851
        %2466 = vmatprep.subr.bf16.mxu0 %v1856
        %2467 = vmatpush1.bf16.msra.mxu0 %v1855
        %2468 = vmatprep.mubr.bf16.mxu0 %v560
        %2469 = vmatmul.mubr.bf16.gmra.mrb[0].mxu0 %v559
        %v2470 = vpop.f32.mrb[0].mxu0
        %v2471 = vadd.f32 %v2278, %v2470
        %v2472 = vpop.f32.mrb[0].mxu0
        %v2473 = vadd.f32 %v2280, %v2472
        %v2474 = vpop.f32.mrb[0].mxu0
        %v2475 = vadd.f32 %v2282, %v2474
        %v2476 = vpop.f32.mrb[0].mxu0
        %v2477 = vadd.f32 %v2284, %v2476
        %2478 = vmatprep.mubr.bf16.mxu0 %v568
        %2479 = vmatmul.mubr.bf16.gmra.mrb[0].mxu0 %v567
        %v2480 = vpop.f32.mrb[0].mxu0
        %v2481 = vadd.f32 %v2288, %v2480
        %v2482 = vpop.f32.mrb[0].mxu0
        %v2483 = vadd.f32 %v2290, %v2482
        %v2484 = vpop.f32.mrb[0].mxu0
        %v2485 = vadd.f32 %v2292, %v2484
        %v2486 = vpop.f32.mrb[0].mxu0
        %v2487 = vadd.f32 %v2294, %v2486
        %2488 = vmatprep.mubr.bf16.mxu0 %v576
        %2489 = vmatmul.mubr.bf16.gmra.mrb[0].mxu0 %v575
        %v2490 = vpop.f32.mrb[0].mxu0
        %v2491 = vadd.f32 %v2298, %v2490
        %v2492 = vpop.f32.mrb[0].mxu0
        %v2493 = vadd.f32 %v2300, %v2492
        %v2494 = vpop.f32.mrb[0].mxu0
        %v2495 = vadd.f32 %v2302, %v2494
        %v2496 = vpop.f32.mrb[0].mxu0
        %v2497 = vadd.f32 %v2304, %v2496
        %2498 = vmatprep.mubr.bf16.mxu0 %v584
        %2499 = vmatmul.mubr.bf16.gmra.mrb[0].mxu0 %v583
        %v2500 = vpop.f32.mrb[0].mxu0
        %v2501 = vadd.f32 %v2308, %v2500
        %v2502 = vpop.f32.mrb[0].mxu0
        %v2503 = vadd.f32 %v2310, %v2502
        %v2504 = vpop.f32.mrb[0].mxu0
        %v2505 = vadd.f32 %v2312, %v2504
        %v2506 = vpop.f32.mrb[0].mxu0
        %v2507 = vadd.f32 %v2314, %v2506
        %2508 = vmatprep.mubr.bf16.mxu0 %v592
        %2509 = vmatmul.mubr.bf16.gmra.mrb[0].mxu0 %v591
        %v2510 = vpop.f32.mrb[0].mxu0
        %v2511 = vadd.f32 %v2318, %v2510
        %v2512 = vpop.f32.mrb[0].mxu0
        %v2513 = vadd.f32 %v2320, %v2512
        %v2514 = vpop.f32.mrb[0].mxu0
        %v2515 = vadd.f32 %v2322, %v2514
        %v2516 = vpop.f32.mrb[0].mxu0
        %v2517 = vadd.f32 %v2324, %v2516
        %2518 = vmatprep.mubr.bf16.mxu0 %v600
        %2519 = vmatmul.mubr.bf16.gmra.mrb[0].mxu0 %v599
        %v2520 = vpop.f32.mrb[0].mxu0
        %v2521 = vadd.f32 %v2328, %v2520
        %v2522 = vpop.f32.mrb[0].mxu0
        %v2523 = vadd.f32 %v2330, %v2522
        %v2524 = vpop.f32.mrb[0].mxu0
        %v2525 = vadd.f32 %v2332, %v2524
        %v2526 = vpop.f32.mrb[0].mxu0
        %v2527 = vadd.f32 %v2334, %v2526
        %2528 = vmatprep.mubr.bf16.mxu0 %v608
        %2529 = vmatmul.mubr.bf16.gmra.mrb[0].mxu0 %v607
        %v2530 = vpop.f32.mrb[0].mxu0
        %v2531 = vadd.f32 %v2338, %v2530
        %v2532 = vpop.f32.mrb[0].mxu0
        %v2533 = vadd.f32 %v2340, %v2532
        %v2534 = vpop.f32.mrb[0].mxu0
        %v2535 = vadd.f32 %v2342, %v2534
        %v2536 = vpop.f32.mrb[0].mxu0
        %v2537 = vadd.f32 %v2344, %v2536
        %2538 = vmatprep.mubr.bf16.mxu0 %v616
        %2539 = vmatmul.mubr.bf16.gmra.mrb[0].mxu0 %v615
        %v2540 = vpop.f32.mrb[0].mxu0
        %v2541 = vadd.f32 %v2348, %v2540
        %v2542 = vpop.f32.mrb[0].mxu0
        %v2543 = vadd.f32 %v2350, %v2542
        %v2544 = vpop.f32.mrb[0].mxu0
        %v2545 = vadd.f32 %v2352, %v2544
        %v2546 = vpop.f32.mrb[0].mxu0
        %v2547 = vadd.f32 %v2354, %v2546
        %2548 = vmatprep.mubr.bf16.mxu0 %v624
        %2549 = vmatmul.mubr.bf16.gmra.mrb[0].mxu0 %v623
        %v2550 = vpop.f32.mrb[0].mxu0
        %v2551 = vadd.f32 %v2358, %v2550
        %v2552 = vpop.f32.mrb[0].mxu0
        %v2553 = vadd.f32 %v2360, %v2552
        %v2554 = vpop.f32.mrb[0].mxu0
        %v2555 = vadd.f32 %v2362, %v2554
        %v2556 = vpop.f32.mrb[0].mxu0
        %v2557 = vadd.f32 %v2364, %v2556
        %2558 = vmatprep.mubr.bf16.mxu0 %v632
        %2559 = vmatmul.mubr.bf16.gmra.mrb[0].mxu0 %v631
        %v2560 = vpop.f32.mrb[0].mxu0
        %v2561 = vadd.f32 %v2368, %v2560
        %v2562 = vpop.f32.mrb[0].mxu0
        %v2563 = vadd.f32 %v2370, %v2562
        %v2564 = vpop.f32.mrb[0].mxu0
        %v2565 = vadd.f32 %v2372, %v2564
        %v2566 = vpop.f32.mrb[0].mxu0
        %v2567 = vadd.f32 %v2374, %v2566
        %2568 = vmatprep.mubr.bf16.mxu0 %v640
        %2569 = vmatmul.mubr.bf16.gmra.mrb[0].mxu0 %v639
        %v2570 = vpop.f32.mrb[0].mxu0
        %v2571 = vadd.f32 %v2378, %v2570
        %v2572 = vpop.f32.mrb[0].mxu0
        %v2573 = vadd.f32 %v2380, %v2572
        %v2574 = vpop.f32.mrb[0].mxu0
        %v2575 = vadd.f32 %v2382, %v2574
        %v2576 = vpop.f32.mrb[0].mxu0
        %v2577 = vadd.f32 %v2384, %v2576
        %2578 = vmatprep.mubr.bf16.mxu0 %v648
        %2579 = vmatmul.mubr.bf16.gmra.mrb[0].mxu0 %v647
        %v2580 = vpop.f32.mrb[0].mxu0
        %v2581 = vadd.f32 %v2388, %v2580
        %v2582 = vpop.f32.mrb[0].mxu0
        %v2583 = vadd.f32 %v2390, %v2582
        %v2584 = vpop.f32.mrb[0].mxu0
        %v2585 = vadd.f32 %v2392, %v2584
        %v2586 = vpop.f32.mrb[0].mxu0
        %v2587 = vadd.f32 %v2394, %v2586
        %2588 = vmatprep.mubr.bf16.mxu0 %v656
        %2589 = vmatmul.mubr.bf16.gmra.mrb[0].mxu0 %v655
        %v2590 = vpop.f32.mrb[0].mxu0
        %v2591 = vadd.f32 %v2398, %v2590
        %v2592 = vpop.f32.mrb[0].mxu0
        %v2593 = vadd.f32 %v2400, %v2592
        %v2594 = vpop.f32.mrb[0].mxu0
        %v2595 = vadd.f32 %v2402, %v2594
        %v2596 = vpop.f32.mrb[0].mxu0
        %v2597 = vadd.f32 %v2404, %v2596
        %2598 = vmatprep.mubr.bf16.mxu0 %v664
        %2599 = vmatmul.mubr.bf16.gmra.mrb[0].mxu0 %v663
        %v2600 = vpop.f32.mrb[0].mxu0
        %v2601 = vadd.f32 %v2408, %v2600
        %v2602 = vpop.f32.mrb[0].mxu0
        %v2603 = vadd.f32 %v2410, %v2602
        %v2604 = vpop.f32.mrb[0].mxu0
        %v2605 = vadd.f32 %v2412, %v2604
        %v2606 = vpop.f32.mrb[0].mxu0
        %v2607 = vadd.f32 %v2414, %v2606
        %2608 = vmatprep.mubr.bf16.mxu0 %v672
        %2609 = vmatmul.mubr.bf16.gmra.mrb[0].mxu0 %v671
        %v2610 = vpop.f32.mrb[0].mxu0
        %v2611 = vadd.f32 %v2418, %v2610
        %v2612 = vpop.f32.mrb[0].mxu0
        %v2613 = vadd.f32 %v2420, %v2612
        %v2614 = vpop.f32.mrb[0].mxu0
        %v2615 = vadd.f32 %v2422, %v2614
        %v2616 = vpop.f32.mrb[0].mxu0
        %v2617 = vadd.f32 %v2424, %v2616
        %2618 = vmatprep.mubr.bf16.mxu0 %v680
        %2619 = vmatmul.mubr.bf16.gmra.mrb[0].mxu0 %v679
        %v2620 = vpop.f32.mrb[0].mxu0
        %v2621 = vadd.f32 %v2428, %v2620
        %v2622 = vpop.f32.mrb[0].mxu0
        %v2623 = vadd.f32 %v2430, %v2622
        %v2624 = vpop.f32.mrb[0].mxu0
        %v2625 = vadd.f32 %v2432, %v2624
        %v2626 = vpop.f32.mrb[0].mxu0
        %v2627 = vadd.f32 %v2434, %v2626
        %2628 = vdwg.mxu0
        %2629 = vmatprep.subr.bf16.mxu0 %v1860
        %2630 = vmatpush1.bf16.msra.mxu0 %v1859
        %2631 = vmatprep.subr.bf16.mxu0 %v1864
        %2632 = vmatpush1.bf16.msra.mxu0 %v1863
        %2633 = vmatprep.subr.bf16.mxu0 %v1868
        %2634 = vmatpush1.bf16.msra.mxu0 %v1867
        %2635 = vmatprep.subr.bf16.mxu0 %v1872
        %2636 = vmatpush1.bf16.msra.mxu0 %v1871
        %2637 = vmatprep.subr.bf16.mxu0 %v1876
        %2638 = vmatpush1.bf16.msra.mxu0 %v1875
        %2639 = vmatprep.subr.bf16.mxu0 %v1880
        %2640 = vmatpush1.bf16.msra.mxu0 %v1879
        %2641 = vmatprep.subr.bf16.mxu0 %v1884
        %2642 = vmatpush1.bf16.msra.mxu0 %v1883
        %2643 = vmatprep.subr.bf16.mxu0 %v1888
        %2644 = vmatpush1.bf16.msra.mxu0 %v1887
        %2645 = vmatprep.subr.bf16.mxu0 %v1892
        %2646 = vmatpush1.bf16.msra.mxu0 %v1891
        %2647 = vmatprep.subr.bf16.mxu0 %v1896
        %2648 = vmatpush1.bf16.msra.mxu0 %v1895
        %2649 = vmatprep.subr.bf16.mxu0 %v1900
        %2650 = vmatpush1.bf16.msra.mxu0 %v1899
        %2651 = vmatprep.subr.bf16.mxu0 %v1904
        %2652 = vmatpush1.bf16.msra.mxu0 %v1903
        %2653 = vmatprep.subr.bf16.mxu0 %v1908
        %2654 = vmatpush1.bf16.msra.mxu0 %v1907
        %2655 = vmatprep.subr.bf16.mxu0 %v1912
        %2656 = vmatpush1.bf16.msra.mxu0 %v1911
        %2657 = vmatprep.subr.bf16.mxu0 %v1916
        %2658 = vmatpush1.bf16.msra.mxu0 %v1915
        %2659 = vmatprep.subr.bf16.mxu0 %v1920
        %2660 = vmatpush1.bf16.msra.mxu0 %v1919
        %2661 = vmatprep.mubr.bf16.mxu0 %v562
        %2662 = vmatmul.mubr.bf16.gmra.mrb[0].mxu0 %v561
        %v2663 = vpop.f32.mrb[0].mxu0
        %v2664 = vadd.f32 %v2471, %v2663
        %v2665 = vpop.f32.mrb[0].mxu0
        %v2666 = vadd.f32 %v2473, %v2665
        %v2667 = vpop.f32.mrb[0].mxu0
        %v2668 = vadd.f32 %v2475, %v2667
        %v2669 = vpop.f32.mrb[0].mxu0
        %v2670 = vadd.f32 %v2477, %v2669
        %2671 = vmatprep.mubr.bf16.mxu0 %v570
        %2672 = vmatmul.mubr.bf16.gmra.mrb[0].mxu0 %v569
        %v2673 = vpop.f32.mrb[0].mxu0
        %v2674 = vadd.f32 %v2481, %v2673
        %v2675 = vpop.f32.mrb[0].mxu0
        %v2676 = vadd.f32 %v2483, %v2675
        %v2677 = vpop.f32.mrb[0].mxu0
        %v2678 = vadd.f32 %v2485, %v2677
        %v2679 = vpop.f32.mrb[0].mxu0
        %v2680 = vadd.f32 %v2487, %v2679
        %2681 = vmatprep.mubr.bf16.mxu0 %v578
        %2682 = vmatmul.mubr.bf16.gmra.mrb[0].mxu0 %v577
        %v2683 = vpop.f32.mrb[0].mxu0
        %v2684 = vadd.f32 %v2491, %v2683
        %v2685 = vpop.f32.mrb[0].mxu0
        %v2686 = vadd.f32 %v2493, %v2685
        %v2687 = vpop.f32.mrb[0].mxu0
        %v2688 = vadd.f32 %v2495, %v2687
        %v2689 = vpop.f32.mrb[0].mxu0
        %v2690 = vadd.f32 %v2497, %v2689
        %2691 = vmatprep.mubr.bf16.mxu0 %v586
        %2692 = vmatmul.mubr.bf16.gmra.mrb[0].mxu0 %v585
        %v2693 = vpop.f32.mrb[0].mxu0
        %v2694 = vadd.f32 %v2501, %v2693
        %v2695 = vpop.f32.mrb[0].mxu0
        %v2696 = vadd.f32 %v2503, %v2695
        %v2697 = vpop.f32.mrb[0].mxu0
        %v2698 = vadd.f32 %v2505, %v2697
        %v2699 = vpop.f32.mrb[0].mxu0
        %v2700 = vadd.f32 %v2507, %v2699
        %2701 = vmatprep.mubr.bf16.mxu0 %v594
        %2702 = vmatmul.mubr.bf16.gmra.mrb[0].mxu0 %v593
        %v2703 = vpop.f32.mrb[0].mxu0
        %v2704 = vadd.f32 %v2511, %v2703
        %v2705 = vpop.f32.mrb[0].mxu0
        %v2706 = vadd.f32 %v2513, %v2705
        %v2707 = vpop.f32.mrb[0].mxu0
        %v2708 = vadd.f32 %v2515, %v2707
        %v2709 = vpop.f32.mrb[0].mxu0
        %v2710 = vadd.f32 %v2517, %v2709
        %2711 = vmatprep.mubr.bf16.mxu0 %v602
        %2712 = vmatmul.mubr.bf16.gmra.mrb[0].mxu0 %v601
        %v2713 = vpop.f32.mrb[0].mxu0
        %v2714 = vadd.f32 %v2521, %v2713
        %v2715 = vpop.f32.mrb[0].mxu0
        %v2716 = vadd.f32 %v2523, %v2715
        %v2717 = vpop.f32.mrb[0].mxu0
        %v2718 = vadd.f32 %v2525, %v2717
        %v2719 = vpop.f32.mrb[0].mxu0
        %v2720 = vadd.f32 %v2527, %v2719
        %2721 = vmatprep.mubr.bf16.mxu0 %v610
        %2722 = vmatmul.mubr.bf16.gmra.mrb[0].mxu0 %v609
        %v2723 = vpop.f32.mrb[0].mxu0
        %v2724 = vadd.f32 %v2531, %v2723
        %v2725 = vpop.f32.mrb[0].mxu0
        %v2726 = vadd.f32 %v2533, %v2725
        %v2727 = vpop.f32.mrb[0].mxu0
        %v2728 = vadd.f32 %v2535, %v2727
        %v2729 = vpop.f32.mrb[0].mxu0
        %v2730 = vadd.f32 %v2537, %v2729
        %2731 = vmatprep.mubr.bf16.mxu0 %v618
        %2732 = vmatmul.mubr.bf16.gmra.mrb[0].mxu0 %v617
        %v2733 = vpop.f32.mrb[0].mxu0
        %v2734 = vadd.f32 %v2541, %v2733
        %v2735 = vpop.f32.mrb[0].mxu0
        %v2736 = vadd.f32 %v2543, %v2735
        %v2737 = vpop.f32.mrb[0].mxu0
        %v2738 = vadd.f32 %v2545, %v2737
        %v2739 = vpop.f32.mrb[0].mxu0
        %v2740 = vadd.f32 %v2547, %v2739
        %2741 = vmatprep.mubr.bf16.mxu0 %v626
        %2742 = vmatmul.mubr.bf16.gmra.mrb[0].mxu0 %v625
        %v2743 = vpop.f32.mrb[0].mxu0
        %v2744 = vadd.f32 %v2551, %v2743
        %v2745 = vpop.f32.mrb[0].mxu0
        %v2746 = vadd.f32 %v2553, %v2745
        %v2747 = vpop.f32.mrb[0].mxu0
        %v2748 = vadd.f32 %v2555, %v2747
        %v2749 = vpop.f32.mrb[0].mxu0
        %v2750 = vadd.f32 %v2557, %v2749
        %2751 = vmatprep.mubr.bf16.mxu0 %v634
        %2752 = vmatmul.mubr.bf16.gmra.mrb[0].mxu0 %v633
        %v2753 = vpop.f32.mrb[0].mxu0
        %v2754 = vadd.f32 %v2561, %v2753
        %v2755 = vpop.f32.mrb[0].mxu0
        %v2756 = vadd.f32 %v2563, %v2755
        %v2757 = vpop.f32.mrb[0].mxu0
        %v2758 = vadd.f32 %v2565, %v2757
        %v2759 = vpop.f32.mrb[0].mxu0
        %v2760 = vadd.f32 %v2567, %v2759
        %2761 = vmatprep.mubr.bf16.mxu0 %v642
        %2762 = vmatmul.mubr.bf16.gmra.mrb[0].mxu0 %v641
        %v2763 = vpop.f32.mrb[0].mxu0
        %v2764 = vadd.f32 %v2571, %v2763
        %v2765 = vpop.f32.mrb[0].mxu0
        %v2766 = vadd.f32 %v2573, %v2765
        %v2767 = vpop.f32.mrb[0].mxu0
        %v2768 = vadd.f32 %v2575, %v2767
        %v2769 = vpop.f32.mrb[0].mxu0
        %v2770 = vadd.f32 %v2577, %v2769
        %2771 = vmatprep.mubr.bf16.mxu0 %v650
        %2772 = vmatmul.mubr.bf16.gmra.mrb[0].mxu0 %v649
        %v2773 = vpop.f32.mrb[0].mxu0
        %v2774 = vadd.f32 %v2581, %v2773
        %v2775 = vpop.f32.mrb[0].mxu0
        %v2776 = vadd.f32 %v2583, %v2775
        %v2777 = vpop.f32.mrb[0].mxu0
        %v2778 = vadd.f32 %v2585, %v2777
        %v2779 = vpop.f32.mrb[0].mxu0
        %v2780 = vadd.f32 %v2587, %v2779
        %2781 = vmatprep.mubr.bf16.mxu0 %v658
        %2782 = vmatmul.mubr.bf16.gmra.mrb[0].mxu0 %v657
        %v2783 = vpop.f32.mrb[0].mxu0
        %v2784 = vadd.f32 %v2591, %v2783
        %v2785 = vpop.f32.mrb[0].mxu0
        %v2786 = vadd.f32 %v2593, %v2785
        %v2787 = vpop.f32.mrb[0].mxu0
        %v2788 = vadd.f32 %v2595, %v2787
        %v2789 = vpop.f32.mrb[0].mxu0
        %v2790 = vadd.f32 %v2597, %v2789
        %2791 = vmatprep.mubr.bf16.mxu0 %v666
        %2792 = vmatmul.mubr.bf16.gmra.mrb[0].mxu0 %v665
        %v2793 = vpop.f32.mrb[0].mxu0
        %v2794 = vadd.f32 %v2601, %v2793
        %v2795 = vpop.f32.mrb[0].mxu0
        %v2796 = vadd.f32 %v2603, %v2795
        %v2797 = vpop.f32.mrb[0].mxu0
        %v2798 = vadd.f32 %v2605, %v2797
        %v2799 = vpop.f32.mrb[0].mxu0
        %v2800 = vadd.f32 %v2607, %v2799
        %2801 = vmatprep.mubr.bf16.mxu0 %v674
        %2802 = vmatmul.mubr.bf16.gmra.mrb[0].mxu0 %v673
        %v2803 = vpop.f32.mrb[0].mxu0
        %v2804 = vadd.f32 %v2611, %v2803
        %v2805 = vpop.f32.mrb[0].mxu0
        %v2806 = vadd.f32 %v2613, %v2805
        %v2807 = vpop.f32.mrb[0].mxu0
        %v2808 = vadd.f32 %v2615, %v2807
        %v2809 = vpop.f32.mrb[0].mxu0
        %v2810 = vadd.f32 %v2617, %v2809
        %2811 = vmatprep.mubr.bf16.mxu0 %v682
        %2812 = vmatmul.mubr.bf16.gmra.mrb[0].mxu0 %v681
        %v2813 = vpop.f32.mrb[0].mxu0
        %v2814 = vadd.f32 %v2621, %v2813
        %v2815 = vpop.f32.mrb[0].mxu0
        %v2816 = vadd.f32 %v2623, %v2815
        %v2817 = vpop.f32.mrb[0].mxu0
        %v2818 = vadd.f32 %v2625, %v2817
        %v2819 = vpop.f32.mrb[0].mxu0
        %v2820 = vadd.f32 %v2627, %v2819
        %2821 = vdwg.mxu0
        %2822 = vmatprep.subr.bf16.mxu0 %v1924
        %2823 = vmatpush1.bf16.msra.mxu0 %v1923
        %2824 = vmatprep.subr.bf16.mxu0 %v1928
        %2825 = vmatpush1.bf16.msra.mxu0 %v1927
        %2826 = vmatprep.subr.bf16.mxu0 %v1932
        %2827 = vmatpush1.bf16.msra.mxu0 %v1931
        %2828 = vmatprep.subr.bf16.mxu0 %v1936
        %2829 = vmatpush1.bf16.msra.mxu0 %v1935
        %2830 = vmatprep.subr.bf16.mxu0 %v1940
        %2831 = vmatpush1.bf16.msra.mxu0 %v1939
        %2832 = vmatprep.subr.bf16.mxu0 %v1944
        %2833 = vmatpush1.bf16.msra.mxu0 %v1943
        %2834 = vmatprep.subr.bf16.mxu0 %v1948
        %2835 = vmatpush1.bf16.msra.mxu0 %v1947
        %2836 = vmatprep.subr.bf16.mxu0 %v1952
        %2837 = vmatpush1.bf16.msra.mxu0 %v1951
        %2838 = vmatprep.subr.bf16.mxu0 %v1956
        %2839 = vmatpush1.bf16.msra.mxu0 %v1955
        %2840 = vmatprep.subr.bf16.mxu0 %v1960
        %2841 = vmatpush1.bf16.msra.mxu0 %v1959
        %2842 = vmatprep.subr.bf16.mxu0 %v1964
        %2843 = vmatpush1.bf16.msra.mxu0 %v1963
        %2844 = vmatprep.subr.bf16.mxu0 %v1968
        %2845 = vmatpush1.bf16.msra.mxu0 %v1967
        %2846 = vmatprep.subr.bf16.mxu0 %v1972
        %2847 = vmatpush1.bf16.msra.mxu0 %v1971
        %2848 = vmatprep.subr.bf16.mxu0 %v1976
        %2849 = vmatpush1.bf16.msra.mxu0 %v1975
        %2850 = vmatprep.subr.bf16.mxu0 %v1980
        %2851 = vmatpush1.bf16.msra.mxu0 %v1979
        %2852 = vmatprep.subr.bf16.mxu0 %v1984
        %2853 = vmatpush1.bf16.msra.mxu0 %v1983
        %2854 = vmatprep.mubr.bf16.mxu0 %v564
        %2855 = vmatmul.mubr.bf16.gmra.mrb[0].mxu0 %v563
        %v2856 = vpop.f32.mrb[0].mxu0
        %v2857 = vadd.f32 %v2664, %v2856
        %v2858 = vpop.f32.mrb[0].mxu0
        %v2859 = vadd.f32 %v2666, %v2858
        %v2860 = vpop.f32.mrb[0].mxu0
        %v2861 = vadd.f32 %v2668, %v2860
        %v2862 = vpop.f32.mrb[0].mxu0
        %v2863 = vadd.f32 %v2670, %v2862
        %2864 = vmatprep.mubr.bf16.mxu0 %v572
        %2865 = vmatmul.mubr.bf16.gmra.mrb[0].mxu0 %v571
        %v2866 = vpop.f32.mrb[0].mxu0
        %v2867 = vadd.f32 %v2674, %v2866
        %v2868 = vpop.f32.mrb[0].mxu0
        %v2869 = vadd.f32 %v2676, %v2868
        %v2870 = vpop.f32.mrb[0].mxu0
        %v2871 = vadd.f32 %v2678, %v2870
        %v2872 = vpop.f32.mrb[0].mxu0
        %v2873 = vadd.f32 %v2680, %v2872
        %2874 = vmatprep.mubr.bf16.mxu0 %v580
        %2875 = vmatmul.mubr.bf16.gmra.mrb[0].mxu0 %v579
        %v2876 = vpop.f32.mrb[0].mxu0
        %v2877 = vadd.f32 %v2684, %v2876
        %v2878 = vpop.f32.mrb[0].mxu0
        %v2879 = vadd.f32 %v2686, %v2878
        %v2880 = vpop.f32.mrb[0].mxu0
        %v2881 = vadd.f32 %v2688, %v2880
        %v2882 = vpop.f32.mrb[0].mxu0
        %v2883 = vadd.f32 %v2690, %v2882
        %2884 = vmatprep.mubr.bf16.mxu0 %v588
        %2885 = vmatmul.mubr.bf16.gmra.mrb[0].mxu0 %v587
        %v2886 = vpop.f32.mrb[0].mxu0
        %v2887 = vadd.f32 %v2694, %v2886
        %v2888 = vpop.f32.mrb[0].mxu0
        %v2889 = vadd.f32 %v2696, %v2888
        %v2890 = vpop.f32.mrb[0].mxu0
        %v2891 = vadd.f32 %v2698, %v2890
        %v2892 = vpop.f32.mrb[0].mxu0
        %v2893 = vadd.f32 %v2700, %v2892
        %2894 = vmatprep.mubr.bf16.mxu0 %v596
        %2895 = vmatmul.mubr.bf16.gmra.mrb[0].mxu0 %v595
        %v2896 = vpop.f32.mrb[0].mxu0
        %v2897 = vadd.f32 %v2704, %v2896
        %v2898 = vpop.f32.mrb[0].mxu0
        %v2899 = vadd.f32 %v2706, %v2898
        %v2900 = vpop.f32.mrb[0].mxu0
        %v2901 = vadd.f32 %v2708, %v2900
        %v2902 = vpop.f32.mrb[0].mxu0
        %v2903 = vadd.f32 %v2710, %v2902
        %2904 = vmatprep.mubr.bf16.mxu0 %v604
        %2905 = vmatmul.mubr.bf16.gmra.mrb[0].mxu0 %v603
        %v2906 = vpop.f32.mrb[0].mxu0
        %v2907 = vadd.f32 %v2714, %v2906
        %v2908 = vpop.f32.mrb[0].mxu0
        %v2909 = vadd.f32 %v2716, %v2908
        %v2910 = vpop.f32.mrb[0].mxu0
        %v2911 = vadd.f32 %v2718, %v2910
        %v2912 = vpop.f32.mrb[0].mxu0
        %v2913 = vadd.f32 %v2720, %v2912
        %2914 = vmatprep.mubr.bf16.mxu0 %v612
        %2915 = vmatmul.mubr.bf16.gmra.mrb[0].mxu0 %v611
        %v2916 = vpop.f32.mrb[0].mxu0
        %v2917 = vadd.f32 %v2724, %v2916
        %v2918 = vpop.f32.mrb[0].mxu0
        %v2919 = vadd.f32 %v2726, %v2918
        %v2920 = vpop.f32.mrb[0].mxu0
        %v2921 = vadd.f32 %v2728, %v2920
        %v2922 = vpop.f32.mrb[0].mxu0
        %v2923 = vadd.f32 %v2730, %v2922
        %2924 = vmatprep.mubr.bf16.mxu0 %v620
        %2925 = vmatmul.mubr.bf16.gmra.mrb[0].mxu0 %v619
        %v2926 = vpop.f32.mrb[0].mxu0
        %v2927 = vadd.f32 %v2734, %v2926
        %v2928 = vpop.f32.mrb[0].mxu0
        %v2929 = vadd.f32 %v2736, %v2928
        %v2930 = vpop.f32.mrb[0].mxu0
        %v2931 = vadd.f32 %v2738, %v2930
        %v2932 = vpop.f32.mrb[0].mxu0
        %v2933 = vadd.f32 %v2740, %v2932
        %2934 = vmatprep.mubr.bf16.mxu0 %v628
        %2935 = vmatmul.mubr.bf16.gmra.mrb[0].mxu0 %v627
        %v2936 = vpop.f32.mrb[0].mxu0
        %v2937 = vadd.f32 %v2744, %v2936
        %v2938 = vpop.f32.mrb[0].mxu0
        %v2939 = vadd.f32 %v2746, %v2938
        %v2940 = vpop.f32.mrb[0].mxu0
        %v2941 = vadd.f32 %v2748, %v2940
        %v2942 = vpop.f32.mrb[0].mxu0
        %v2943 = vadd.f32 %v2750, %v2942
        %2944 = vmatprep.mubr.bf16.mxu0 %v636
        %2945 = vmatmul.mubr.bf16.gmra.mrb[0].mxu0 %v635
        %v2946 = vpop.f32.mrb[0].mxu0
        %v2947 = vadd.f32 %v2754, %v2946
        %v2948 = vpop.f32.mrb[0].mxu0
        %v2949 = vadd.f32 %v2756, %v2948
        %v2950 = vpop.f32.mrb[0].mxu0
        %v2951 = vadd.f32 %v2758, %v2950
        %v2952 = vpop.f32.mrb[0].mxu0
        %v2953 = vadd.f32 %v2760, %v2952
        %2954 = vmatprep.mubr.bf16.mxu0 %v644
        %2955 = vmatmul.mubr.bf16.gmra.mrb[0].mxu0 %v643
        %v2956 = vpop.f32.mrb[0].mxu0
        %v2957 = vadd.f32 %v2764, %v2956
        %v2958 = vpop.f32.mrb[0].mxu0
        %v2959 = vadd.f32 %v2766, %v2958
        %v2960 = vpop.f32.mrb[0].mxu0
        %v2961 = vadd.f32 %v2768, %v2960
        %v2962 = vpop.f32.mrb[0].mxu0
        %v2963 = vadd.f32 %v2770, %v2962
        %2964 = vmatprep.mubr.bf16.mxu0 %v652
        %2965 = vmatmul.mubr.bf16.gmra.mrb[0].mxu0 %v651
        %v2966 = vpop.f32.mrb[0].mxu0
        %v2967 = vadd.f32 %v2774, %v2966
        %v2968 = vpop.f32.mrb[0].mxu0
        %v2969 = vadd.f32 %v2776, %v2968
        %v2970 = vpop.f32.mrb[0].mxu0
        %v2971 = vadd.f32 %v2778, %v2970
        %v2972 = vpop.f32.mrb[0].mxu0
        %v2973 = vadd.f32 %v2780, %v2972
        %2974 = vmatprep.mubr.bf16.mxu0 %v660
        %2975 = vmatmul.mubr.bf16.gmra.mrb[0].mxu0 %v659
        %v2976 = vpop.f32.mrb[0].mxu0
        %v2977 = vadd.f32 %v2784, %v2976
        %v2978 = vpop.f32.mrb[0].mxu0
        %v2979 = vadd.f32 %v2786, %v2978
        %v2980 = vpop.f32.mrb[0].mxu0
        %v2981 = vadd.f32 %v2788, %v2980
        %v2982 = vpop.f32.mrb[0].mxu0
        %v2983 = vadd.f32 %v2790, %v2982
        %2984 = vmatprep.mubr.bf16.mxu0 %v668
        %2985 = vmatmul.mubr.bf16.gmra.mrb[0].mxu0 %v667
        %v2986 = vpop.f32.mrb[0].mxu0
        %v2987 = vadd.f32 %v2794, %v2986
        %v2988 = vpop.f32.mrb[0].mxu0
        %v2989 = vadd.f32 %v2796, %v2988
        %v2990 = vpop.f32.mrb[0].mxu0
        %v2991 = vadd.f32 %v2798, %v2990
        %v2992 = vpop.f32.mrb[0].mxu0
        %v2993 = vadd.f32 %v2800, %v2992
        %2994 = vmatprep.mubr.bf16.mxu0 %v676
        %2995 = vmatmul.mubr.bf16.gmra.mrb[0].mxu0 %v675
        %v2996 = vpop.f32.mrb[0].mxu0
        %v2997 = vadd.f32 %v2804, %v2996
        %v2998 = vpop.f32.mrb[0].mxu0
        %v2999 = vadd.f32 %v2806, %v2998
        %v3000 = vpop.f32.mrb[0].mxu0
        %v3001 = vadd.f32 %v2808, %v3000
        %v3002 = vpop.f32.mrb[0].mxu0
        %v3003 = vadd.f32 %v2810, %v3002
        %3004 = vmatprep.mubr.bf16.mxu0 %v684
        %3005 = vmatmul.mubr.bf16.gmra.mrb[0].mxu0 %v683
        %v3006 = vpop.f32.mrb[0].mxu0
        %v3007 = vadd.f32 %v2814, %v3006
        %v3008 = vpop.f32.mrb[0].mxu0
        %v3009 = vadd.f32 %v2816, %v3008
        %v3010 = vpop.f32.mrb[0].mxu0
        %v3011 = vadd.f32 %v2818, %v3010
        %v3012 = vpop.f32.mrb[0].mxu0
        %v3013 = vadd.f32 %v2820, %v3012
        %3014 = vdwg.mxu0
        %3015 = vmatprep.subr.bf16.mxu0 %v1734
        %3016 = vmatpush1.bf16.msra.mxu0 %v1733
        %3017 = vmatprep.subr.bf16.mxu0 %v1738
        %3018 = vmatpush1.bf16.msra.mxu0 %v1737
        %3019 = vmatprep.subr.bf16.mxu0 %v1742
        %3020 = vmatpush1.bf16.msra.mxu0 %v1741
        %3021 = vmatprep.subr.bf16.mxu0 %v1746
        %3022 = vmatpush1.bf16.msra.mxu0 %v1745
        %3023 = vmatprep.subr.bf16.mxu0 %v1750
        %3024 = vmatpush1.bf16.msra.mxu0 %v1749
        %3025 = vmatprep.subr.bf16.mxu0 %v1754
        %3026 = vmatpush1.bf16.msra.mxu0 %v1753
        %3027 = vmatprep.subr.bf16.mxu0 %v1758
        %3028 = vmatpush1.bf16.msra.mxu0 %v1757
        %3029 = vmatprep.subr.bf16.mxu0 %v1762
        %3030 = vmatpush1.bf16.msra.mxu0 %v1761
        %3031 = vmatprep.subr.bf16.mxu0 %v1766
        %3032 = vmatpush1.bf16.msra.mxu0 %v1765
        %3033 = vmatprep.subr.bf16.mxu0 %v1770
        %3034 = vmatpush1.bf16.msra.mxu0 %v1769
        %3035 = vmatprep.subr.bf16.mxu0 %v1774
        %3036 = vmatpush1.bf16.msra.mxu0 %v1773
        %3037 = vmatprep.subr.bf16.mxu0 %v1778
        %3038 = vmatpush1.bf16.msra.mxu0 %v1777
        %3039 = vmatprep.subr.bf16.mxu0 %v1782
        %3040 = vmatpush1.bf16.msra.mxu0 %v1781
        %3041 = vmatprep.subr.bf16.mxu0 %v1786
        %3042 = vmatpush1.bf16.msra.mxu0 %v1785
        %3043 = vmatprep.subr.bf16.mxu0 %v1790
        %3044 = vmatpush1.bf16.msra.mxu0 %v1789
        %3045 = vmatprep.subr.bf16.mxu0 %v1794
        %3046 = vmatpush1.bf16.msra.mxu0 %v1793
        %3047 = vmatprep.mubr.bf16.mxu0 %v558
        %3048 = vmatmul.mubr.bf16.gmra.mrb[0].mxu0 %v557
        %v3049 = vpop.f32.mrb[0].mxu0
        %v3050 = vadd.f32 %v954, %v3049
        %v3051 = vpop.f32.mrb[0].mxu0
        %v3052 = vadd.f32 %v958, %v3051
        %v3053 = vpop.f32.mrb[0].mxu0
        %v3054 = vadd.f32 %v954, %v3053
        %v3055 = vpop.f32.mrb[0].mxu0
        %v3056 = vadd.f32 %v958, %v3055
        %3057 = vmatprep.mubr.bf16.mxu0 %v566
        %3058 = vmatmul.mubr.bf16.gmra.mrb[0].mxu0 %v565
        %v3059 = vpop.f32.mrb[0].mxu0
        %v3060 = vadd.f32 %v954, %v3059
        %v3061 = vpop.f32.mrb[0].mxu0
        %v3062 = vadd.f32 %v958, %v3061
        %v3063 = vpop.f32.mrb[0].mxu0
        %v3064 = vadd.f32 %v954, %v3063
        %v3065 = vpop.f32.mrb[0].mxu0
        %v3066 = vadd.f32 %v958, %v3065
        %3067 = vmatprep.mubr.bf16.mxu0 %v574
        %3068 = vmatmul.mubr.bf16.gmra.mrb[0].mxu0 %v573
        %v3069 = vpop.f32.mrb[0].mxu0
        %v3070 = vadd.f32 %v954, %v3069
        %v3071 = vpop.f32.mrb[0].mxu0
        %v3072 = vadd.f32 %v958, %v3071
        %v3073 = vpop.f32.mrb[0].mxu0
        %v3074 = vadd.f32 %v954, %v3073
        %v3075 = vpop.f32.mrb[0].mxu0
        %v3076 = vadd.f32 %v958, %v3075
        %3077 = vmatprep.mubr.bf16.mxu0 %v582
        %3078 = vmatmul.mubr.bf16.gmra.mrb[0].mxu0 %v581
        %v3079 = vpop.f32.mrb[0].mxu0
        %v3080 = vadd.f32 %v954, %v3079
        %v3081 = vpop.f32.mrb[0].mxu0
        %v3082 = vadd.f32 %v958, %v3081
        %v3083 = vpop.f32.mrb[0].mxu0
        %v3084 = vadd.f32 %v954, %v3083
        %v3085 = vpop.f32.mrb[0].mxu0
        %v3086 = vadd.f32 %v958, %v3085
        %3087 = vmatprep.mubr.bf16.mxu0 %v590
        %3088 = vmatmul.mubr.bf16.gmra.mrb[0].mxu0 %v589
        %v3089 = vpop.f32.mrb[0].mxu0
        %v3090 = vadd.f32 %v954, %v3089
        %v3091 = vpop.f32.mrb[0].mxu0
        %v3092 = vadd.f32 %v958, %v3091
        %v3093 = vpop.f32.mrb[0].mxu0
        %v3094 = vadd.f32 %v954, %v3093
        %v3095 = vpop.f32.mrb[0].mxu0
        %v3096 = vadd.f32 %v958, %v3095
        %3097 = vmatprep.mubr.bf16.mxu0 %v598
        %3098 = vmatmul.mubr.bf16.gmra.mrb[0].mxu0 %v597
        %v3099 = vpop.f32.mrb[0].mxu0
        %v3100 = vadd.f32 %v954, %v3099
        %v3101 = vpop.f32.mrb[0].mxu0
        %v3102 = vadd.f32 %v958, %v3101
        %v3103 = vpop.f32.mrb[0].mxu0
        %v3104 = vadd.f32 %v954, %v3103
        %v3105 = vpop.f32.mrb[0].mxu0
        %v3106 = vadd.f32 %v958, %v3105
        %3107 = vmatprep.mubr.bf16.mxu0 %v606
        %3108 = vmatmul.mubr.bf16.gmra.mrb[0].mxu0 %v605
        %v3109 = vpop.f32.mrb[0].mxu0
        %v3110 = vadd.f32 %v954, %v3109
        %v3111 = vpop.f32.mrb[0].mxu0
        %v3112 = vadd.f32 %v958, %v3111
        %v3113 = vpop.f32.mrb[0].mxu0
        %v3114 = vadd.f32 %v954, %v3113
        %v3115 = vpop.f32.mrb[0].mxu0
        %v3116 = vadd.f32 %v958, %v3115
        %3117 = vmatprep.mubr.bf16.mxu0 %v614
        %3118 = vmatmul.mubr.bf16.gmra.mrb[0].mxu0 %v613
        %v3119 = vpop.f32.mrb[0].mxu0
        %v3120 = vadd.f32 %v954, %v3119
        %v3121 = vpop.f32.mrb[0].mxu0
        %v3122 = vadd.f32 %v958, %v3121
        %v3123 = vpop.f32.mrb[0].mxu0
        %v3124 = vadd.f32 %v954, %v3123
        %v3125 = vpop.f32.mrb[0].mxu0
        %v3126 = vadd.f32 %v958, %v3125
        %3127 = vmatprep.mubr.bf16.mxu0 %v622
        %3128 = vmatmul.mubr.bf16.gmra.mrb[0].mxu0 %v621
        %v3129 = vpop.f32.mrb[0].mxu0
        %v3130 = vadd.f32 %v954, %v3129
        %v3131 = vpop.f32.mrb[0].mxu0
        %v3132 = vadd.f32 %v958, %v3131
        %v3133 = vpop.f32.mrb[0].mxu0
        %v3134 = vadd.f32 %v954, %v3133
        %v3135 = vpop.f32.mrb[0].mxu0
        %v3136 = vadd.f32 %v958, %v3135
        %3137 = vmatprep.mubr.bf16.mxu0 %v630
        %3138 = vmatmul.mubr.bf16.gmra.mrb[0].mxu0 %v629
        %v3139 = vpop.f32.mrb[0].mxu0
        %v3140 = vadd.f32 %v954, %v3139
        %v3141 = vpop.f32.mrb[0].mxu0
        %v3142 = vadd.f32 %v958, %v3141
        %v3143 = vpop.f32.mrb[0].mxu0
        %v3144 = vadd.f32 %v954, %v3143
        %v3145 = vpop.f32.mrb[0].mxu0
        %v3146 = vadd.f32 %v958, %v3145
        %3147 = vmatprep.mubr.bf16.mxu0 %v638
        %3148 = vmatmul.mubr.bf16.gmra.mrb[0].mxu0 %v637
        %v3149 = vpop.f32.mrb[0].mxu0
        %v3150 = vadd.f32 %v954, %v3149
        %v3151 = vpop.f32.mrb[0].mxu0
        %v3152 = vadd.f32 %v958, %v3151
        %v3153 = vpop.f32.mrb[0].mxu0
        %v3154 = vadd.f32 %v954, %v3153
        %v3155 = vpop.f32.mrb[0].mxu0
        %v3156 = vadd.f32 %v958, %v3155
        %3157 = vmatprep.mubr.bf16.mxu0 %v646
        %3158 = vmatmul.mubr.bf16.gmra.mrb[0].mxu0 %v645
        %v3159 = vpop.f32.mrb[0].mxu0
        %v3160 = vadd.f32 %v954, %v3159
        %v3161 = vpop.f32.mrb[0].mxu0
        %v3162 = vadd.f32 %v958, %v3161
        %v3163 = vpop.f32.mrb[0].mxu0
        %v3164 = vadd.f32 %v954, %v3163
        %v3165 = vpop.f32.mrb[0].mxu0
        %v3166 = vadd.f32 %v958, %v3165
        %3167 = vmatprep.mubr.bf16.mxu0 %v654
        %3168 = vmatmul.mubr.bf16.gmra.mrb[0].mxu0 %v653
        %v3169 = vpop.f32.mrb[0].mxu0
        %v3170 = vadd.f32 %v954, %v3169
        %v3171 = vpop.f32.mrb[0].mxu0
        %v3172 = vadd.f32 %v958, %v3171
        %v3173 = vpop.f32.mrb[0].mxu0
        %v3174 = vadd.f32 %v954, %v3173
        %v3175 = vpop.f32.mrb[0].mxu0
        %v3176 = vadd.f32 %v958, %v3175
        %3177 = vmatprep.mubr.bf16.mxu0 %v662
        %3178 = vmatmul.mubr.bf16.gmra.mrb[0].mxu0 %v661
        %v3179 = vpop.f32.mrb[0].mxu0
        %v3180 = vadd.f32 %v954, %v3179
        %v3181 = vpop.f32.mrb[0].mxu0
        %v3182 = vadd.f32 %v958, %v3181
        %v3183 = vpop.f32.mrb[0].mxu0
        %v3184 = vadd.f32 %v954, %v3183
        %v3185 = vpop.f32.mrb[0].mxu0
        %v3186 = vadd.f32 %v958, %v3185
        %3187 = vmatprep.mubr.bf16.mxu0 %v670
        %3188 = vmatmul.mubr.bf16.gmra.mrb[0].mxu0 %v669
        %v3189 = vpop.f32.mrb[0].mxu0
        %v3190 = vadd.f32 %v954, %v3189
        %v3191 = vpop.f32.mrb[0].mxu0
        %v3192 = vadd.f32 %v958, %v3191
        %v3193 = vpop.f32.mrb[0].mxu0
        %v3194 = vadd.f32 %v954, %v3193
        %v3195 = vpop.f32.mrb[0].mxu0
        %v3196 = vadd.f32 %v958, %v3195
        %3197 = vmatprep.mubr.bf16.mxu0 %v678
        %3198 = vmatmul.mubr.bf16.gmra.mrb[0].mxu0 %v677
        %v3199 = vpop.f32.mrb[0].mxu0
        %v3200 = vadd.f32 %v954, %v3199
        %v3201 = vpop.f32.mrb[0].mxu0
        %v3202 = vadd.f32 %v958, %v3201
        %v3203 = vpop.f32.mrb[0].mxu0
        %v3204 = vadd.f32 %v954, %v3203
        %v3205 = vpop.f32.mrb[0].mxu0
        %v3206 = vadd.f32 %v958, %v3205
        %3207 = vdwg.mxu0
        %3208 = vmatprep.subr.bf16.mxu0 %v1798
        %3209 = vmatpush1.bf16.msra.mxu0 %v1797
        %3210 = vmatprep.subr.bf16.mxu0 %v1802
        %3211 = vmatpush1.bf16.msra.mxu0 %v1801
        %3212 = vmatprep.subr.bf16.mxu0 %v1806
        %3213 = vmatpush1.bf16.msra.mxu0 %v1805
        %3214 = vmatprep.subr.bf16.mxu0 %v1810
        %3215 = vmatpush1.bf16.msra.mxu0 %v1809
        %3216 = vmatprep.subr.bf16.mxu0 %v1814
        %3217 = vmatpush1.bf16.msra.mxu0 %v1813
        %3218 = vmatprep.subr.bf16.mxu0 %v1818
        %3219 = vmatpush1.bf16.msra.mxu0 %v1817
        %3220 = vmatprep.subr.bf16.mxu0 %v1822
        %3221 = vmatpush1.bf16.msra.mxu0 %v1821
        %3222 = vmatprep.subr.bf16.mxu0 %v1826
        %3223 = vmatpush1.bf16.msra.mxu0 %v1825
        %3224 = vmatprep.subr.bf16.mxu0 %v1830
        %3225 = vmatpush1.bf16.msra.mxu0 %v1829
        %3226 = vmatprep.subr.bf16.mxu0 %v1834
        %3227 = vmatpush1.bf16.msra.mxu0 %v1833
        %3228 = vmatprep.subr.bf16.mxu0 %v1838
        %3229 = vmatpush1.bf16.msra.mxu0 %v1837
        %3230 = vmatprep.subr.bf16.mxu0 %v1842
        %3231 = vmatpush1.bf16.msra.mxu0 %v1841
        %3232 = vmatprep.subr.bf16.mxu0 %v1846
        %3233 = vmatpush1.bf16.msra.mxu0 %v1845
        %3234 = vmatprep.subr.bf16.mxu0 %v1850
        %3235 = vmatpush1.bf16.msra.mxu0 %v1849
        %3236 = vmatprep.subr.bf16.mxu0 %v1854
        %3237 = vmatpush1.bf16.msra.mxu0 %v1853
        %3238 = vmatprep.subr.bf16.mxu0 %v1858
        %3239 = vmatpush1.bf16.msra.mxu0 %v1857
        %3240 = vmatprep.mubr.bf16.mxu0 %v560
        %3241 = vmatmul.mubr.bf16.gmra.mrb[0].mxu0 %v559
        %v3242 = vpop.f32.mrb[0].mxu0
        %v3243 = vadd.f32 %v3050, %v3242
        %v3244 = vpop.f32.mrb[0].mxu0
        %v3245 = vadd.f32 %v3052, %v3244
        %v3246 = vpop.f32.mrb[0].mxu0
        %v3247 = vadd.f32 %v3054, %v3246
        %v3248 = vpop.f32.mrb[0].mxu0
        %v3249 = vadd.f32 %v3056, %v3248
        %3250 = vmatprep.mubr.bf16.mxu0 %v568
        %3251 = vmatmul.mubr.bf16.gmra.mrb[0].mxu0 %v567
        %v3252 = vpop.f32.mrb[0].mxu0
        %v3253 = vadd.f32 %v3060, %v3252
        %v3254 = vpop.f32.mrb[0].mxu0
        %v3255 = vadd.f32 %v3062, %v3254
        %v3256 = vpop.f32.mrb[0].mxu0
        %v3257 = vadd.f32 %v3064, %v3256
        %v3258 = vpop.f32.mrb[0].mxu0
        %v3259 = vadd.f32 %v3066, %v3258
        %3260 = vmatprep.mubr.bf16.mxu0 %v576
        %3261 = vmatmul.mubr.bf16.gmra.mrb[0].mxu0 %v575
        %v3262 = vpop.f32.mrb[0].mxu0
        %v3263 = vadd.f32 %v3070, %v3262
        %v3264 = vpop.f32.mrb[0].mxu0
        %v3265 = vadd.f32 %v3072, %v3264
        %v3266 = vpop.f32.mrb[0].mxu0
        %v3267 = vadd.f32 %v3074, %v3266
        %v3268 = vpop.f32.mrb[0].mxu0
        %v3269 = vadd.f32 %v3076, %v3268
        %3270 = vmatprep.mubr.bf16.mxu0 %v584
        %3271 = vmatmul.mubr.bf16.gmra.mrb[0].mxu0 %v583
        %v3272 = vpop.f32.mrb[0].mxu0
        %v3273 = vadd.f32 %v3080, %v3272
        %v3274 = vpop.f32.mrb[0].mxu0
        %v3275 = vadd.f32 %v3082, %v3274
        %v3276 = vpop.f32.mrb[0].mxu0
        %v3277 = vadd.f32 %v3084, %v3276
        %v3278 = vpop.f32.mrb[0].mxu0
        %v3279 = vadd.f32 %v3086, %v3278
        %3280 = vmatprep.mubr.bf16.mxu0 %v592
        %3281 = vmatmul.mubr.bf16.gmra.mrb[0].mxu0 %v591
        %v3282 = vpop.f32.mrb[0].mxu0
        %v3283 = vadd.f32 %v3090, %v3282
        %v3284 = vpop.f32.mrb[0].mxu0
        %v3285 = vadd.f32 %v3092, %v3284
        %v3286 = vpop.f32.mrb[0].mxu0
        %v3287 = vadd.f32 %v3094, %v3286
        %v3288 = vpop.f32.mrb[0].mxu0
        %v3289 = vadd.f32 %v3096, %v3288
        %3290 = vmatprep.mubr.bf16.mxu0 %v600
        %3291 = vmatmul.mubr.bf16.gmra.mrb[0].mxu0 %v599
        %v3292 = vpop.f32.mrb[0].mxu0
        %v3293 = vadd.f32 %v3100, %v3292
        %v3294 = vpop.f32.mrb[0].mxu0
        %v3295 = vadd.f32 %v3102, %v3294
        %v3296 = vpop.f32.mrb[0].mxu0
        %v3297 = vadd.f32 %v3104, %v3296
        %v3298 = vpop.f32.mrb[0].mxu0
        %v3299 = vadd.f32 %v3106, %v3298
        %3300 = vmatprep.mubr.bf16.mxu0 %v608
        %3301 = vmatmul.mubr.bf16.gmra.mrb[0].mxu0 %v607
        %v3302 = vpop.f32.mrb[0].mxu0
        %v3303 = vadd.f32 %v3110, %v3302
        %v3304 = vpop.f32.mrb[0].mxu0
        %v3305 = vadd.f32 %v3112, %v3304
        %v3306 = vpop.f32.mrb[0].mxu0
        %v3307 = vadd.f32 %v3114, %v3306
        %v3308 = vpop.f32.mrb[0].mxu0
        %v3309 = vadd.f32 %v3116, %v3308
        %3310 = vmatprep.mubr.bf16.mxu0 %v616
        %3311 = vmatmul.mubr.bf16.gmra.mrb[0].mxu0 %v615
        %v3312 = vpop.f32.mrb[0].mxu0
        %v3313 = vadd.f32 %v3120, %v3312
        %v3314 = vpop.f32.mrb[0].mxu0
        %v3315 = vadd.f32 %v3122, %v3314
        %v3316 = vpop.f32.mrb[0].mxu0
        %v3317 = vadd.f32 %v3124, %v3316
        %v3318 = vpop.f32.mrb[0].mxu0
        %v3319 = vadd.f32 %v3126, %v3318
        %3320 = vmatprep.mubr.bf16.mxu0 %v624
        %3321 = vmatmul.mubr.bf16.gmra.mrb[0].mxu0 %v623
        %v3322 = vpop.f32.mrb[0].mxu0
        %v3323 = vadd.f32 %v3130, %v3322
        %v3324 = vpop.f32.mrb[0].mxu0
        %v3325 = vadd.f32 %v3132, %v3324
        %v3326 = vpop.f32.mrb[0].mxu0
        %v3327 = vadd.f32 %v3134, %v3326
        %v3328 = vpop.f32.mrb[0].mxu0
        %v3329 = vadd.f32 %v3136, %v3328
        %3330 = vmatprep.mubr.bf16.mxu0 %v632
        %3331 = vmatmul.mubr.bf16.gmra.mrb[0].mxu0 %v631
        %v3332 = vpop.f32.mrb[0].mxu0
        %v3333 = vadd.f32 %v3140, %v3332
        %v3334 = vpop.f32.mrb[0].mxu0
        %v3335 = vadd.f32 %v3142, %v3334
        %v3336 = vpop.f32.mrb[0].mxu0
        %v3337 = vadd.f32 %v3144, %v3336
        %v3338 = vpop.f32.mrb[0].mxu0
        %v3339 = vadd.f32 %v3146, %v3338
        %3340 = vmatprep.mubr.bf16.mxu0 %v640
        %3341 = vmatmul.mubr.bf16.gmra.mrb[0].mxu0 %v639
        %v3342 = vpop.f32.mrb[0].mxu0
        %v3343 = vadd.f32 %v3150, %v3342
        %v3344 = vpop.f32.mrb[0].mxu0
        %v3345 = vadd.f32 %v3152, %v3344
        %v3346 = vpop.f32.mrb[0].mxu0
        %v3347 = vadd.f32 %v3154, %v3346
        %v3348 = vpop.f32.mrb[0].mxu0
        %v3349 = vadd.f32 %v3156, %v3348
        %3350 = vmatprep.mubr.bf16.mxu0 %v648
        %3351 = vmatmul.mubr.bf16.gmra.mrb[0].mxu0 %v647
        %v3352 = vpop.f32.mrb[0].mxu0
        %v3353 = vadd.f32 %v3160, %v3352
        %v3354 = vpop.f32.mrb[0].mxu0
        %v3355 = vadd.f32 %v3162, %v3354
        %v3356 = vpop.f32.mrb[0].mxu0
        %v3357 = vadd.f32 %v3164, %v3356
        %v3358 = vpop.f32.mrb[0].mxu0
        %v3359 = vadd.f32 %v3166, %v3358
        %3360 = vmatprep.mubr.bf16.mxu0 %v656
        %3361 = vmatmul.mubr.bf16.gmra.mrb[0].mxu0 %v655
        %v3362 = vpop.f32.mrb[0].mxu0
        %v3363 = vadd.f32 %v3170, %v3362
        %v3364 = vpop.f32.mrb[0].mxu0
        %v3365 = vadd.f32 %v3172, %v3364
        %v3366 = vpop.f32.mrb[0].mxu0
        %v3367 = vadd.f32 %v3174, %v3366
        %v3368 = vpop.f32.mrb[0].mxu0
        %v3369 = vadd.f32 %v3176, %v3368
        %3370 = vmatprep.mubr.bf16.mxu0 %v664
        %3371 = vmatmul.mubr.bf16.gmra.mrb[0].mxu0 %v663
        %v3372 = vpop.f32.mrb[0].mxu0
        %v3373 = vadd.f32 %v3180, %v3372
        %v3374 = vpop.f32.mrb[0].mxu0
        %v3375 = vadd.f32 %v3182, %v3374
        %v3376 = vpop.f32.mrb[0].mxu0
        %v3377 = vadd.f32 %v3184, %v3376
        %v3378 = vpop.f32.mrb[0].mxu0
        %v3379 = vadd.f32 %v3186, %v3378
        %3380 = vmatprep.mubr.bf16.mxu0 %v672
        %3381 = vmatmul.mubr.bf16.gmra.mrb[0].mxu0 %v671
        %v3382 = vpop.f32.mrb[0].mxu0
        %v3383 = vadd.f32 %v3190, %v3382
        %v3384 = vpop.f32.mrb[0].mxu0
        %v3385 = vadd.f32 %v3192, %v3384
        %v3386 = vpop.f32.mrb[0].mxu0
        %v3387 = vadd.f32 %v3194, %v3386
        %v3388 = vpop.f32.mrb[0].mxu0
        %v3389 = vadd.f32 %v3196, %v3388
        %3390 = vmatprep.mubr.bf16.mxu0 %v680
        %3391 = vmatmul.mubr.bf16.gmra.mrb[0].mxu0 %v679
        %v3392 = vpop.f32.mrb[0].mxu0
        %v3393 = vadd.f32 %v3200, %v3392
        %v3394 = vpop.f32.mrb[0].mxu0
        %v3395 = vadd.f32 %v3202, %v3394
        %v3396 = vpop.f32.mrb[0].mxu0
        %v3397 = vadd.f32 %v3204, %v3396
        %v3398 = vpop.f32.mrb[0].mxu0
        %v3399 = vadd.f32 %v3206, %v3398
        %3400 = vdwg.mxu0
        %3401 = vmatprep.subr.bf16.mxu0 %v1862
        %3402 = vmatpush1.bf16.msra.mxu0 %v1861
        %3403 = vmatprep.subr.bf16.mxu0 %v1866
        %3404 = vmatpush1.bf16.msra.mxu0 %v1865
        %3405 = vmatprep.subr.bf16.mxu0 %v1870
        %3406 = vmatpush1.bf16.msra.mxu0 %v1869
        %3407 = vmatprep.subr.bf16.mxu0 %v1874
        %3408 = vmatpush1.bf16.msra.mxu0 %v1873
        %3409 = vmatprep.subr.bf16.mxu0 %v1878
        %3410 = vmatpush1.bf16.msra.mxu0 %v1877
        %3411 = vmatprep.subr.bf16.mxu0 %v1882
        %3412 = vmatpush1.bf16.msra.mxu0 %v1881
        %3413 = vmatprep.subr.bf16.mxu0 %v1886
        %3414 = vmatpush1.bf16.msra.mxu0 %v1885
        %3415 = vmatprep.subr.bf16.mxu0 %v1890
        %3416 = vmatpush1.bf16.msra.mxu0 %v1889
        %3417 = vmatprep.subr.bf16.mxu0 %v1894
        %3418 = vmatpush1.bf16.msra.mxu0 %v1893
        %3419 = vmatprep.subr.bf16.mxu0 %v1898
        %3420 = vmatpush1.bf16.msra.mxu0 %v1897
        %3421 = vmatprep.subr.bf16.mxu0 %v1902
        %3422 = vmatpush1.bf16.msra.mxu0 %v1901
        %3423 = vmatprep.subr.bf16.mxu0 %v1906
        %3424 = vmatpush1.bf16.msra.mxu0 %v1905
        %3425 = vmatprep.subr.bf16.mxu0 %v1910
        %3426 = vmatpush1.bf16.msra.mxu0 %v1909
        %3427 = vmatprep.subr.bf16.mxu0 %v1914
        %3428 = vmatpush1.bf16.msra.mxu0 %v1913
        %3429 = vmatprep.subr.bf16.mxu0 %v1918
        %3430 = vmatpush1.bf16.msra.mxu0 %v1917
        %3431 = vmatprep.subr.bf16.mxu0 %v1922
        %3432 = vmatpush1.bf16.msra.mxu0 %v1921
        %3433 = vmatprep.mubr.bf16.mxu0 %v562
        %3434 = vmatmul.mubr.bf16.gmra.mrb[0].mxu0 %v561
        %v3435 = vpop.f32.mrb[0].mxu0
        %v3436 = vadd.f32 %v3243, %v3435
        %v3437 = vpop.f32.mrb[0].mxu0
        %v3438 = vadd.f32 %v3245, %v3437
        %v3439 = vpop.f32.mrb[0].mxu0
        %v3440 = vadd.f32 %v3247, %v3439
        %v3441 = vpop.f32.mrb[0].mxu0
        %v3442 = vadd.f32 %v3249, %v3441
        %3443 = vmatprep.mubr.bf16.mxu0 %v570
        %3444 = vmatmul.mubr.bf16.gmra.mrb[0].mxu0 %v569
        %v3445 = vpop.f32.mrb[0].mxu0
        %v3446 = vadd.f32 %v3253, %v3445
        %v3447 = vpop.f32.mrb[0].mxu0
        %v3448 = vadd.f32 %v3255, %v3447
        %v3449 = vpop.f32.mrb[0].mxu0
        %v3450 = vadd.f32 %v3257, %v3449
        %v3451 = vpop.f32.mrb[0].mxu0
        %v3452 = vadd.f32 %v3259, %v3451
        %3453 = vmatprep.mubr.bf16.mxu0 %v578
        %3454 = vmatmul.mubr.bf16.gmra.mrb[0].mxu0 %v577
        %v3455 = vpop.f32.mrb[0].mxu0
        %v3456 = vadd.f32 %v3263, %v3455
        %v3457 = vpop.f32.mrb[0].mxu0
        %v3458 = vadd.f32 %v3265, %v3457
        %v3459 = vpop.f32.mrb[0].mxu0
        %v3460 = vadd.f32 %v3267, %v3459
        %v3461 = vpop.f32.mrb[0].mxu0
        %v3462 = vadd.f32 %v3269, %v3461
        %3463 = vmatprep.mubr.bf16.mxu0 %v586
        %3464 = vmatmul.mubr.bf16.gmra.mrb[0].mxu0 %v585
        %v3465 = vpop.f32.mrb[0].mxu0
        %v3466 = vadd.f32 %v3273, %v3465
        %v3467 = vpop.f32.mrb[0].mxu0
        %v3468 = vadd.f32 %v3275, %v3467
        %v3469 = vpop.f32.mrb[0].mxu0
        %v3470 = vadd.f32 %v3277, %v3469
        %v3471 = vpop.f32.mrb[0].mxu0
        %v3472 = vadd.f32 %v3279, %v3471
        %3473 = vmatprep.mubr.bf16.mxu0 %v594
        %3474 = vmatmul.mubr.bf16.gmra.mrb[0].mxu0 %v593
        %v3475 = vpop.f32.mrb[0].mxu0
        %v3476 = vadd.f32 %v3283, %v3475
        %v3477 = vpop.f32.mrb[0].mxu0
        %v3478 = vadd.f32 %v3285, %v3477
        %v3479 = vpop.f32.mrb[0].mxu0
        %v3480 = vadd.f32 %v3287, %v3479
        %v3481 = vpop.f32.mrb[0].mxu0
        %v3482 = vadd.f32 %v3289, %v3481
        %3483 = vmatprep.mubr.bf16.mxu0 %v602
        %3484 = vmatmul.mubr.bf16.gmra.mrb[0].mxu0 %v601
        %v3485 = vpop.f32.mrb[0].mxu0
        %v3486 = vadd.f32 %v3293, %v3485
        %v3487 = vpop.f32.mrb[0].mxu0
        %v3488 = vadd.f32 %v3295, %v3487
        %v3489 = vpop.f32.mrb[0].mxu0
        %v3490 = vadd.f32 %v3297, %v3489
        %v3491 = vpop.f32.mrb[0].mxu0
        %v3492 = vadd.f32 %v3299, %v3491
        %3493 = vmatprep.mubr.bf16.mxu0 %v610
        %3494 = vmatmul.mubr.bf16.gmra.mrb[0].mxu0 %v609
        %v3495 = vpop.f32.mrb[0].mxu0
        %v3496 = vadd.f32 %v3303, %v3495
        %v3497 = vpop.f32.mrb[0].mxu0
        %v3498 = vadd.f32 %v3305, %v3497
        %v3499 = vpop.f32.mrb[0].mxu0
        %v3500 = vadd.f32 %v3307, %v3499
        %v3501 = vpop.f32.mrb[0].mxu0
        %v3502 = vadd.f32 %v3309, %v3501
        %3503 = vmatprep.mubr.bf16.mxu0 %v618
        %3504 = vmatmul.mubr.bf16.gmra.mrb[0].mxu0 %v617
        %v3505 = vpop.f32.mrb[0].mxu0
        %v3506 = vadd.f32 %v3313, %v3505
        %v3507 = vpop.f32.mrb[0].mxu0
        %v3508 = vadd.f32 %v3315, %v3507
        %v3509 = vpop.f32.mrb[0].mxu0
        %v3510 = vadd.f32 %v3317, %v3509
        %v3511 = vpop.f32.mrb[0].mxu0
        %v3512 = vadd.f32 %v3319, %v3511
        %3513 = vmatprep.mubr.bf16.mxu0 %v626
        %3514 = vmatmul.mubr.bf16.gmra.mrb[0].mxu0 %v625
        %v3515 = vpop.f32.mrb[0].mxu0
        %v3516 = vadd.f32 %v3323, %v3515
        %v3517 = vpop.f32.mrb[0].mxu0
        %v3518 = vadd.f32 %v3325, %v3517
        %v3519 = vpop.f32.mrb[0].mxu0
        %v3520 = vadd.f32 %v3327, %v3519
        %v3521 = vpop.f32.mrb[0].mxu0
        %v3522 = vadd.f32 %v3329, %v3521
        %3523 = vmatprep.mubr.bf16.mxu0 %v634
        %3524 = vmatmul.mubr.bf16.gmra.mrb[0].mxu0 %v633
        %v3525 = vpop.f32.mrb[0].mxu0
        %v3526 = vadd.f32 %v3333, %v3525
        %v3527 = vpop.f32.mrb[0].mxu0
        %v3528 = vadd.f32 %v3335, %v3527
        %v3529 = vpop.f32.mrb[0].mxu0
        %v3530 = vadd.f32 %v3337, %v3529
        %v3531 = vpop.f32.mrb[0].mxu0
        %v3532 = vadd.f32 %v3339, %v3531
        %3533 = vmatprep.mubr.bf16.mxu0 %v642
        %3534 = vmatmul.mubr.bf16.gmra.mrb[0].mxu0 %v641
        %v3535 = vpop.f32.mrb[0].mxu0
        %v3536 = vadd.f32 %v3343, %v3535
        %v3537 = vpop.f32.mrb[0].mxu0
        %v3538 = vadd.f32 %v3345, %v3537
        %v3539 = vpop.f32.mrb[0].mxu0
        %v3540 = vadd.f32 %v3347, %v3539
        %v3541 = vpop.f32.mrb[0].mxu0
        %v3542 = vadd.f32 %v3349, %v3541
        %3543 = vmatprep.mubr.bf16.mxu0 %v650
        %3544 = vmatmul.mubr.bf16.gmra.mrb[0].mxu0 %v649
        %v3545 = vpop.f32.mrb[0].mxu0
        %v3546 = vadd.f32 %v3353, %v3545
        %v3547 = vpop.f32.mrb[0].mxu0
        %v3548 = vadd.f32 %v3355, %v3547
        %v3549 = vpop.f32.mrb[0].mxu0
        %v3550 = vadd.f32 %v3357, %v3549
        %v3551 = vpop.f32.mrb[0].mxu0
        %v3552 = vadd.f32 %v3359, %v3551
        %3553 = vmatprep.mubr.bf16.mxu0 %v658
        %3554 = vmatmul.mubr.bf16.gmra.mrb[0].mxu0 %v657
        %v3555 = vpop.f32.mrb[0].mxu0
        %v3556 = vadd.f32 %v3363, %v3555
        %v3557 = vpop.f32.mrb[0].mxu0
        %v3558 = vadd.f32 %v3365, %v3557
        %v3559 = vpop.f32.mrb[0].mxu0
        %v3560 = vadd.f32 %v3367, %v3559
        %v3561 = vpop.f32.mrb[0].mxu0
        %v3562 = vadd.f32 %v3369, %v3561
        %3563 = vmatprep.mubr.bf16.mxu0 %v666
        %3564 = vmatmul.mubr.bf16.gmra.mrb[0].mxu0 %v665
        %v3565 = vpop.f32.mrb[0].mxu0
        %v3566 = vadd.f32 %v3373, %v3565
        %v3567 = vpop.f32.mrb[0].mxu0
        %v3568 = vadd.f32 %v3375, %v3567
        %v3569 = vpop.f32.mrb[0].mxu0
        %v3570 = vadd.f32 %v3377, %v3569
        %v3571 = vpop.f32.mrb[0].mxu0
        %v3572 = vadd.f32 %v3379, %v3571
        %3573 = vmatprep.mubr.bf16.mxu0 %v674
        %3574 = vmatmul.mubr.bf16.gmra.mrb[0].mxu0 %v673
        %v3575 = vpop.f32.mrb[0].mxu0
        %v3576 = vadd.f32 %v3383, %v3575
        %v3577 = vpop.f32.mrb[0].mxu0
        %v3578 = vadd.f32 %v3385, %v3577
        %v3579 = vpop.f32.mrb[0].mxu0
        %v3580 = vadd.f32 %v3387, %v3579
        %v3581 = vpop.f32.mrb[0].mxu0
        %v3582 = vadd.f32 %v3389, %v3581
        %3583 = vmatprep.mubr.bf16.mxu0 %v682
        %3584 = vmatmul.mubr.bf16.gmra.mrb[0].mxu0 %v681
        %v3585 = vpop.f32.mrb[0].mxu0
        %v3586 = vadd.f32 %v3393, %v3585
        %v3587 = vpop.f32.mrb[0].mxu0
        %v3588 = vadd.f32 %v3395, %v3587
        %v3589 = vpop.f32.mrb[0].mxu0
        %v3590 = vadd.f32 %v3397, %v3589
        %v3591 = vpop.f32.mrb[0].mxu0
        %v3592 = vadd.f32 %v3399, %v3591
        %3593 = vdwg.mxu0
        %3594 = vmatprep.subr.bf16.mxu0 %v1926
        %3595 = vmatpush1.bf16.msra.mxu0 %v1925
        %3596 = vmatprep.subr.bf16.mxu0 %v1930
        %3597 = vmatpush1.bf16.msra.mxu0 %v1929
        %3598 = vmatprep.subr.bf16.mxu0 %v1934
        %3599 = vmatpush1.bf16.msra.mxu0 %v1933
        %3600 = vmatprep.subr.bf16.mxu0 %v1938
        %3601 = vmatpush1.bf16.msra.mxu0 %v1937
        %3602 = vmatprep.subr.bf16.mxu0 %v1942
        %3603 = vmatpush1.bf16.msra.mxu0 %v1941
        %3604 = vmatprep.subr.bf16.mxu0 %v1946
        %3605 = vmatpush1.bf16.msra.mxu0 %v1945
        %3606 = vmatprep.subr.bf16.mxu0 %v1950
        %3607 = vmatpush1.bf16.msra.mxu0 %v1949
        %3608 = vmatprep.subr.bf16.mxu0 %v1954
        %3609 = vmatpush1.bf16.msra.mxu0 %v1953
        %3610 = vmatprep.subr.bf16.mxu0 %v1958
        %3611 = vmatpush1.bf16.msra.mxu0 %v1957
        %3612 = vmatprep.subr.bf16.mxu0 %v1962
        %3613 = vmatpush1.bf16.msra.mxu0 %v1961
        %3614 = vmatprep.subr.bf16.mxu0 %v1966
        %3615 = vmatpush1.bf16.msra.mxu0 %v1965
        %3616 = vmatprep.subr.bf16.mxu0 %v1970
        %3617 = vmatpush1.bf16.msra.mxu0 %v1969
        %3618 = vmatprep.subr.bf16.mxu0 %v1974
        %3619 = vmatpush1.bf16.msra.mxu0 %v1973
        %3620 = vmatprep.subr.bf16.mxu0 %v1978
        %3621 = vmatpush1.bf16.msra.mxu0 %v1977
        %3622 = vmatprep.subr.bf16.mxu0 %v1982
        %3623 = vmatpush1.bf16.msra.mxu0 %v1981
        %3624 = vmatprep.subr.bf16.mxu0 %v1986
        %3625 = vmatpush1.bf16.msra.mxu0 %v1985
        %3626 = vmatprep.mubr.bf16.mxu0 %v564
        %3627 = vmatmul.mubr.bf16.gmra.mrb[0].mxu0 %v563
        %v3628 = vpop.f32.mrb[0].mxu0
        %v3629 = vadd.f32 %v3436, %v3628
        %v3630 = vpop.f32.mrb[0].mxu0
        %v3631 = vadd.f32 %v3438, %v3630
        %v3632 = vpop.f32.mrb[0].mxu0
        %v3633 = vadd.f32 %v3440, %v3632
        %v3634 = vpop.f32.mrb[0].mxu0
        %v3635 = vadd.f32 %v3442, %v3634
        %3636 = vmatprep.mubr.bf16.mxu0 %v572
        %3637 = vmatmul.mubr.bf16.gmra.mrb[0].mxu0 %v571
        %v3638 = vpop.f32.mrb[0].mxu0
        %v3639 = vadd.f32 %v3446, %v3638
        %v3640 = vpop.f32.mrb[0].mxu0
        %v3641 = vadd.f32 %v3448, %v3640
        %v3642 = vpop.f32.mrb[0].mxu0
        %v3643 = vadd.f32 %v3450, %v3642
        %v3644 = vpop.f32.mrb[0].mxu0
        %v3645 = vadd.f32 %v3452, %v3644
        %3646 = vmatprep.mubr.bf16.mxu0 %v580
        %3647 = vmatmul.mubr.bf16.gmra.mrb[0].mxu0 %v579
        %v3648 = vpop.f32.mrb[0].mxu0
        %v3649 = vadd.f32 %v3456, %v3648
        %v3650 = vpop.f32.mrb[0].mxu0
        %v3651 = vadd.f32 %v3458, %v3650
        %v3652 = vpop.f32.mrb[0].mxu0
        %v3653 = vadd.f32 %v3460, %v3652
        %v3654 = vpop.f32.mrb[0].mxu0
        %v3655 = vadd.f32 %v3462, %v3654
        %3656 = vmatprep.mubr.bf16.mxu0 %v588
        %3657 = vmatmul.mubr.bf16.gmra.mrb[0].mxu0 %v587
        %v3658 = vpop.f32.mrb[0].mxu0
        %v3659 = vadd.f32 %v3466, %v3658
        %v3660 = vpop.f32.mrb[0].mxu0
        %v3661 = vadd.f32 %v3468, %v3660
        %v3662 = vpop.f32.mrb[0].mxu0
        %v3663 = vadd.f32 %v3470, %v3662
        %v3664 = vpop.f32.mrb[0].mxu0
        %v3665 = vadd.f32 %v3472, %v3664
        %3666 = vmatprep.mubr.bf16.mxu0 %v596
        %3667 = vmatmul.mubr.bf16.gmra.mrb[0].mxu0 %v595
        %v3668 = vpop.f32.mrb[0].mxu0
        %v3669 = vadd.f32 %v3476, %v3668
        %v3670 = vpop.f32.mrb[0].mxu0
        %v3671 = vadd.f32 %v3478, %v3670
        %v3672 = vpop.f32.mrb[0].mxu0
        %v3673 = vadd.f32 %v3480, %v3672
        %v3674 = vpop.f32.mrb[0].mxu0
        %v3675 = vadd.f32 %v3482, %v3674
        %3676 = vmatprep.mubr.bf16.mxu0 %v604
        %3677 = vmatmul.mubr.bf16.gmra.mrb[0].mxu0 %v603
        %v3678 = vpop.f32.mrb[0].mxu0
        %v3679 = vadd.f32 %v3486, %v3678
        %v3680 = vpop.f32.mrb[0].mxu0
        %v3681 = vadd.f32 %v3488, %v3680
        %v3682 = vpop.f32.mrb[0].mxu0
        %v3683 = vadd.f32 %v3490, %v3682
        %v3684 = vpop.f32.mrb[0].mxu0
        %v3685 = vadd.f32 %v3492, %v3684
        %3686 = vmatprep.mubr.bf16.mxu0 %v612
        %3687 = vmatmul.mubr.bf16.gmra.mrb[0].mxu0 %v611
        %v3688 = vpop.f32.mrb[0].mxu0
        %v3689 = vadd.f32 %v3496, %v3688
        %v3690 = vpop.f32.mrb[0].mxu0
        %v3691 = vadd.f32 %v3498, %v3690
        %v3692 = vpop.f32.mrb[0].mxu0
        %v3693 = vadd.f32 %v3500, %v3692
        %v3694 = vpop.f32.mrb[0].mxu0
        %v3695 = vadd.f32 %v3502, %v3694
        %3696 = vmatprep.mubr.bf16.mxu0 %v620
        %3697 = vmatmul.mubr.bf16.gmra.mrb[0].mxu0 %v619
        %v3698 = vpop.f32.mrb[0].mxu0
        %v3699 = vadd.f32 %v3506, %v3698
        %v3700 = vpop.f32.mrb[0].mxu0
        %v3701 = vadd.f32 %v3508, %v3700
        %v3702 = vpop.f32.mrb[0].mxu0
        %v3703 = vadd.f32 %v3510, %v3702
        %v3704 = vpop.f32.mrb[0].mxu0
        %v3705 = vadd.f32 %v3512, %v3704
        %3706 = vmatprep.mubr.bf16.mxu0 %v628
        %3707 = vmatmul.mubr.bf16.gmra.mrb[0].mxu0 %v627
        %v3708 = vpop.f32.mrb[0].mxu0
        %v3709 = vadd.f32 %v3516, %v3708
        %v3710 = vpop.f32.mrb[0].mxu0
        %v3711 = vadd.f32 %v3518, %v3710
        %v3712 = vpop.f32.mrb[0].mxu0
        %v3713 = vadd.f32 %v3520, %v3712
        %v3714 = vpop.f32.mrb[0].mxu0
        %v3715 = vadd.f32 %v3522, %v3714
        %3716 = vmatprep.mubr.bf16.mxu0 %v636
        %3717 = vmatmul.mubr.bf16.gmra.mrb[0].mxu0 %v635
        %v3718 = vpop.f32.mrb[0].mxu0
        %v3719 = vadd.f32 %v3526, %v3718
        %v3720 = vpop.f32.mrb[0].mxu0
        %v3721 = vadd.f32 %v3528, %v3720
        %v3722 = vpop.f32.mrb[0].mxu0
        %v3723 = vadd.f32 %v3530, %v3722
        %v3724 = vpop.f32.mrb[0].mxu0
        %v3725 = vadd.f32 %v3532, %v3724
        %3726 = vmatprep.mubr.bf16.mxu0 %v644
        %3727 = vmatmul.mubr.bf16.gmra.mrb[0].mxu0 %v643
        %v3728 = vpop.f32.mrb[0].mxu0
        %v3729 = vadd.f32 %v3536, %v3728
        %v3730 = vpop.f32.mrb[0].mxu0
        %v3731 = vadd.f32 %v3538, %v3730
        %v3732 = vpop.f32.mrb[0].mxu0
        %v3733 = vadd.f32 %v3540, %v3732
        %v3734 = vpop.f32.mrb[0].mxu0
        %v3735 = vadd.f32 %v3542, %v3734
        %3736 = vmatprep.mubr.bf16.mxu0 %v652
        %3737 = vmatmul.mubr.bf16.gmra.mrb[0].mxu0 %v651
        %v3738 = vpop.f32.mrb[0].mxu0
        %v3739 = vadd.f32 %v3546, %v3738
        %v3740 = vpop.f32.mrb[0].mxu0
        %v3741 = vadd.f32 %v3548, %v3740
        %v3742 = vpop.f32.mrb[0].mxu0
        %v3743 = vadd.f32 %v3550, %v3742
        %v3744 = vpop.f32.mrb[0].mxu0
        %v3745 = vadd.f32 %v3552, %v3744
        %3746 = vmatprep.mubr.bf16.mxu0 %v660
        %3747 = vmatmul.mubr.bf16.gmra.mrb[0].mxu0 %v659
        %v3748 = vpop.f32.mrb[0].mxu0
        %v3749 = vadd.f32 %v3556, %v3748
        %v3750 = vpop.f32.mrb[0].mxu0
        %v3751 = vadd.f32 %v3558, %v3750
        %v3752 = vpop.f32.mrb[0].mxu0
        %v3753 = vadd.f32 %v3560, %v3752
        %v3754 = vpop.f32.mrb[0].mxu0
        %v3755 = vadd.f32 %v3562, %v3754
        %3756 = vmatprep.mubr.bf16.mxu0 %v668
        %3757 = vmatmul.mubr.bf16.gmra.mrb[0].mxu0 %v667
        %v3758 = vpop.f32.mrb[0].mxu0
        %v3759 = vadd.f32 %v3566, %v3758
        %v3760 = vpop.f32.mrb[0].mxu0
        %v3761 = vadd.f32 %v3568, %v3760
        %v3762 = vpop.f32.mrb[0].mxu0
        %v3763 = vadd.f32 %v3570, %v3762
        %v3764 = vpop.f32.mrb[0].mxu0
        %v3765 = vadd.f32 %v3572, %v3764
        %3766 = vmatprep.mubr.bf16.mxu0 %v676
        %3767 = vmatmul.mubr.bf16.gmra.mrb[0].mxu0 %v675
        %v3768 = vpop.f32.mrb[0].mxu0
        %v3769 = vadd.f32 %v3576, %v3768
        %v3770 = vpop.f32.mrb[0].mxu0
        %v3771 = vadd.f32 %v3578, %v3770
        %v3772 = vpop.f32.mrb[0].mxu0
        %v3773 = vadd.f32 %v3580, %v3772
        %v3774 = vpop.f32.mrb[0].mxu0
        %v3775 = vadd.f32 %v3582, %v3774
        %3776 = vmatprep.mubr.bf16.mxu0 %v684
        %3777 = vmatmul.mubr.bf16.gmra.mrb[0].mxu0 %v683
        %v3778 = vpop.f32.mrb[0].mxu0
        %v3779 = vadd.f32 %v3586, %v3778
        %v3780 = vpop.f32.mrb[0].mxu0
        %v3781 = vadd.f32 %v3588, %v3780
        %v3782 = vpop.f32.mrb[0].mxu0
        %v3783 = vadd.f32 %v3590, %v3782
        %v3784 = vpop.f32.mrb[0].mxu0
        %v3785 = vadd.f32 %v3592, %v3784
        %3786 = vdwg.mxu0
        %v3787 = vtanh.pop %v2857
        %v3788 = vtanh.pop %v2859
        %v3789 = vtanh.pop %v2861
        %v3790 = vtanh.pop %v2863
        %v3791 = vtanh.pop %v2867
        %v3792 = vtanh.pop %v2869
        %v3793 = vtanh.pop %v2871
        %v3794 = vtanh.pop %v2873
        %v3795 = vtanh.pop %v2877
        %v3796 = vtanh.pop %v2879
        %v3797 = vtanh.pop %v2881
        %v3798 = vtanh.pop %v2883
        %v3799 = vtanh.pop %v2887
        %v3800 = vtanh.pop %v2889
        %v3801 = vtanh.pop %v2891
        %v3802 = vtanh.pop %v2893
        %v3803 = vtanh.pop %v2897
        %v3804 = vtanh.pop %v2899
        %v3805 = vtanh.pop %v2901
        %v3806 = vtanh.pop %v2903
        %v3807 = vtanh.pop %v2907
        %v3808 = vtanh.pop %v2909
        %v3809 = vtanh.pop %v2911
        %v3810 = vtanh.pop %v2913
        %v3811 = vtanh.pop %v2917
        %v3812 = vtanh.pop %v2919
        %v3813 = vtanh.pop %v2921
        %v3814 = vtanh.pop %v2923
        %v3815 = vtanh.pop %v2927
        %v3816 = vtanh.pop %v2929
        %v3817 = vtanh.pop %v2931
        %v3818 = vtanh.pop %v2933
        %v3819 = vtanh.pop %v2937
        %v3820 = vtanh.pop %v2939
        %v3821 = vtanh.pop %v2941
        %v3822 = vtanh.pop %v2943
        %v3823 = vtanh.pop %v2947
        %v3824 = vtanh.pop %v2949
        %v3825 = vtanh.pop %v2951
        %v3826 = vtanh.pop %v2953
        %v3827 = vtanh.pop %v2957
        %v3828 = vtanh.pop %v2959
        %v3829 = vtanh.pop %v2961
        %v3830 = vtanh.pop %v2963
        %v3831 = vtanh.pop %v2967
        %v3832 = vtanh.pop %v2969
        %v3833 = vtanh.pop %v2971
        %v3834 = vtanh.pop %v2973
        %v3835 = vtanh.pop %v2977
        %v3836 = vtanh.pop %v2979
        %v3837 = vtanh.pop %v2981
        %v3838 = vtanh.pop %v2983
        %v3839 = vtanh.pop %v2987
        %v3840 = vtanh.pop %v2989
        %v3841 = vtanh.pop %v2991
        %v3842 = vtanh.pop %v2993
        %v3843 = vtanh.pop %v2997
        %v3844 = vtanh.pop %v2999
        %v3845 = vtanh.pop %v3001
        %v3846 = vtanh.pop %v3003
        %v3847 = vtanh.pop %v3007
        %v3848 = vtanh.pop %v3009
        %v3849 = vtanh.pop %v3011
        %v3850 = vtanh.pop %v3013
        %v3851 = vxor.u32 %v3629, 2147483648
        %v3852 = vxor.u32 %v3631, 2147483648
        %v3853 = vxor.u32 %v3633, 2147483648
        %v3854 = vxor.u32 %v3635, 2147483648
        %v3855 = vxor.u32 %v3639, 2147483648
        %v3856 = vxor.u32 %v3641, 2147483648
        %v3857 = vxor.u32 %v3643, 2147483648
        %v3858 = vxor.u32 %v3645, 2147483648
        %v3859 = vxor.u32 %v3649, 2147483648
        %v3860 = vxor.u32 %v3651, 2147483648
        %v3861 = vxor.u32 %v3653, 2147483648
        %v3862 = vxor.u32 %v3655, 2147483648
        %v3863 = vxor.u32 %v3659, 2147483648
        %v3864 = vxor.u32 %v3661, 2147483648
        %v3865 = vxor.u32 %v3663, 2147483648
        %v3866 = vxor.u32 %v3665, 2147483648
        %v3867 = vxor.u32 %v3669, 2147483648
        %v3868 = vxor.u32 %v3671, 2147483648
        %v3869 = vxor.u32 %v3673, 2147483648
        %v3870 = vxor.u32 %v3675, 2147483648
        %v3871 = vxor.u32 %v3679, 2147483648
        %v3872 = vxor.u32 %v3681, 2147483648
        %v3873 = vxor.u32 %v3683, 2147483648
        %v3874 = vxor.u32 %v3685, 2147483648
        %v3875 = vxor.u32 %v3689, 2147483648
        %v3876 = vxor.u32 %v3691, 2147483648
        %v3877 = vxor.u32 %v3693, 2147483648
        %v3878 = vxor.u32 %v3695, 2147483648
        %v3879 = vxor.u32 %v3699, 2147483648
        %v3880 = vxor.u32 %v3701, 2147483648
        %v3881 = vxor.u32 %v3703, 2147483648
        %v3882 = vxor.u32 %v3705, 2147483648
        %v3883 = vxor.u32 %v3709, 2147483648
        %v3884 = vxor.u32 %v3711, 2147483648
        %v3885 = vxor.u32 %v3713, 2147483648
        %v3886 = vxor.u32 %v3715, 2147483648
        %v3887 = vxor.u32 %v3719, 2147483648
        %v3888 = vxor.u32 %v3721, 2147483648
        %v3889 = vxor.u32 %v3723, 2147483648
        %v3890 = vxor.u32 %v3725, 2147483648
        %v3891 = vxor.u32 %v3729, 2147483648
        %v3892 = vxor.u32 %v3731, 2147483648
        %v3893 = vxor.u32 %v3733, 2147483648
        %v3894 = vxor.u32 %v3735, 2147483648
        %v3895 = vxor.u32 %v3739, 2147483648
        %v3896 = vxor.u32 %v3741, 2147483648
        %v3897 = vxor.u32 %v3743, 2147483648
        %v3898 = vxor.u32 %v3745, 2147483648
        %v3899 = vxor.u32 %v3749, 2147483648
        %v3900 = vxor.u32 %v3751, 2147483648
        %v3901 = vxor.u32 %v3753, 2147483648
        %v3902 = vxor.u32 %v3755, 2147483648
        %v3903 = vxor.u32 %v3759, 2147483648
        %v3904 = vxor.u32 %v3761, 2147483648
        %v3905 = vxor.u32 %v3763, 2147483648
        %v3906 = vxor.u32 %v3765, 2147483648
        %v3907 = vxor.u32 %v3769, 2147483648
        %v3908 = vxor.u32 %v3771, 2147483648
        %v3909 = vxor.u32 %v3773, 2147483648
        %v3910 = vxor.u32 %v3775, 2147483648
        %v3911 = vxor.u32 %v3779, 2147483648
        %v3912 = vxor.u32 %v3781, 2147483648
        %v3913 = vxor.u32 %v3783, 2147483648
        %v3914 = vxor.u32 %v3785, 2147483648
        %v3915 = vmul.f32 %v3851, 1.442695
        %v3916 = vpow.pop %v3915
        %v3917 = vmul.f32 %v3852, 1.442695
        %v3918 = vpow.pop %v3917
        %v3919 = vmul.f32 %v3853, 1.442695
        %v3920 = vpow.pop %v3919
        %v3921 = vmul.f32 %v3854, 1.442695
        %v3922 = vpow.pop %v3921
        %v3923 = vmul.f32 %v3855, 1.442695
        %v3924 = vpow.pop %v3923
        %v3925 = vmul.f32 %v3856, 1.442695
        %v3926 = vpow.pop %v3925
        %v3927 = vmul.f32 %v3857, 1.442695
        %v3928 = vpow.pop %v3927
        %v3929 = vmul.f32 %v3858, 1.442695
        %v3930 = vpow.pop %v3929
        %v3931 = vmul.f32 %v3859, 1.442695
        %v3932 = vpow.pop %v3931
        %v3933 = vmul.f32 %v3860, 1.442695
        %v3934 = vpow.pop %v3933
        %v3935 = vmul.f32 %v3861, 1.442695
        %v3936 = vpow.pop %v3935
        %v3937 = vmul.f32 %v3862, 1.442695
        %v3938 = vpow.pop %v3937
        %v3939 = vmul.f32 %v3863, 1.442695
        %v3940 = vpow.pop %v3939
        %v3941 = vmul.f32 %v3864, 1.442695
        %v3942 = vpow.pop %v3941
        %v3943 = vmul.f32 %v3865, 1.442695
        %v3944 = vpow.pop %v3943
        %v3945 = vmul.f32 %v3866, 1.442695
        %v3946 = vpow.pop %v3945
        %v3947 = vmul.f32 %v3867, 1.442695
        %v3948 = vpow.pop %v3947
        %v3949 = vmul.f32 %v3868, 1.442695
        %v3950 = vpow.pop %v3949
        %v3951 = vmul.f32 %v3869, 1.442695
        %v3952 = vpow.pop %v3951
        %v3953 = vmul.f32 %v3870, 1.442695
        %v3954 = vpow.pop %v3953
        %v3955 = vmul.f32 %v3871, 1.442695
        %v3956 = vpow.pop %v3955
        %v3957 = vmul.f32 %v3872, 1.442695
        %v3958 = vpow.pop %v3957
        %v3959 = vmul.f32 %v3873, 1.442695
        %v3960 = vpow.pop %v3959
        %v3961 = vmul.f32 %v3874, 1.442695
        %v3962 = vpow.pop %v3961
        %v3963 = vmul.f32 %v3875, 1.442695
        %v3964 = vpow.pop %v3963
        %v3965 = vmul.f32 %v3876, 1.442695
        %v3966 = vpow.pop %v3965
        %v3967 = vmul.f32 %v3877, 1.442695
        %v3968 = vpow.pop %v3967
        %v3969 = vmul.f32 %v3878, 1.442695
        %v3970 = vpow.pop %v3969
        %v3971 = vmul.f32 %v3879, 1.442695
        %v3972 = vpow.pop %v3971
        %v3973 = vmul.f32 %v3880, 1.442695
        %v3974 = vpow.pop %v3973
        %v3975 = vmul.f32 %v3881, 1.442695
        %v3976 = vpow.pop %v3975
        %v3977 = vmul.f32 %v3882, 1.442695
        %v3978 = vpow.pop %v3977
        %v3979 = vmul.f32 %v3883, 1.442695
        %v3980 = vpow.pop %v3979
        %v3981 = vmul.f32 %v3884, 1.442695
        %v3982 = vpow.pop %v3981
        %v3983 = vmul.f32 %v3885, 1.442695
        %v3984 = vpow.pop %v3983
        %v3985 = vmul.f32 %v3886, 1.442695
        %v3986 = vpow.pop %v3985
        %v3987 = vmul.f32 %v3887, 1.442695
        %v3988 = vpow.pop %v3987
        %v3989 = vmul.f32 %v3888, 1.442695
        %v3990 = vpow.pop %v3989
        %v3991 = vmul.f32 %v3889, 1.442695
        %v3992 = vpow.pop %v3991
        %v3993 = vmul.f32 %v3890, 1.442695
        %v3994 = vpow.pop %v3993
        %v3995 = vmul.f32 %v3891, 1.442695
        %v3996 = vpow.pop %v3995
        %v3997 = vmul.f32 %v3892, 1.442695
        %v3998 = vpow.pop %v3997
        %v3999 = vmul.f32 %v3893, 1.442695
        %v4000 = vpow.pop %v3999
        %v4001 = vmul.f32 %v3894, 1.442695
        %v4002 = vpow.pop %v4001
        %v4003 = vmul.f32 %v3895, 1.442695
        %v4004 = vpow.pop %v4003
        %v4005 = vmul.f32 %v3896, 1.442695
        %v4006 = vpow.pop %v4005
        %v4007 = vmul.f32 %v3897, 1.442695
        %v4008 = vpow.pop %v4007
        %v4009 = vmul.f32 %v3898, 1.442695
        %v4010 = vpow.pop %v4009
        %v4011 = vmul.f32 %v3899, 1.442695
        %v4012 = vpow.pop %v4011
        %v4013 = vmul.f32 %v3900, 1.442695
        %v4014 = vpow.pop %v4013
        %v4015 = vmul.f32 %v3901, 1.442695
        %v4016 = vpow.pop %v4015
        %v4017 = vmul.f32 %v3902, 1.442695
        %v4018 = vpow.pop %v4017
        %v4019 = vmul.f32 %v3903, 1.442695
        %v4020 = vpow.pop %v4019
        %v4021 = vmul.f32 %v3904, 1.442695
        %v4022 = vpow.pop %v4021
        %v4023 = vmul.f32 %v3905, 1.442695
        %v4024 = vpow.pop %v4023
        %v4025 = vmul.f32 %v3906, 1.442695
        %v4026 = vpow.pop %v4025
        %v4027 = vmul.f32 %v3907, 1.442695
        %v4028 = vpow.pop %v4027
        %v4029 = vmul.f32 %v3908, 1.442695
        %v4030 = vpow.pop %v4029
        %v4031 = vmul.f32 %v3909, 1.442695
        %v4032 = vpow.pop %v4031
        %v4033 = vmul.f32 %v3910, 1.442695
        %v4034 = vpow.pop %v4033
        %v4035 = vmul.f32 %v3911, 1.442695
        %v4036 = vpow.pop %v4035
        %v4037 = vmul.f32 %v3912, 1.442695
        %v4038 = vpow.pop %v4037
        %v4039 = vmul.f32 %v3913, 1.442695
        %v4040 = vpow.pop %v4039
        %v4041 = vmul.f32 %v3914, 1.442695
        %v4042 = vpow.pop %v4041
        %v4043 = vadd.f32 %v3916, 1.0
        %v4044 = vadd.f32 %v3918, 1.0
        %v4045 = vadd.f32 %v3920, 1.0
        %v4046 = vadd.f32 %v3922, 1.0
        %v4047 = vadd.f32 %v3924, 1.0
        %v4048 = vadd.f32 %v3926, 1.0
        %v4049 = vadd.f32 %v3928, 1.0
        %v4050 = vadd.f32 %v3930, 1.0
        %v4051 = vadd.f32 %v3932, 1.0
        %v4052 = vadd.f32 %v3934, 1.0
        %v4053 = vadd.f32 %v3936, 1.0
        %v4054 = vadd.f32 %v3938, 1.0
        %v4055 = vadd.f32 %v3940, 1.0
        %v4056 = vadd.f32 %v3942, 1.0
        %v4057 = vadd.f32 %v3944, 1.0
        %v4058 = vadd.f32 %v3946, 1.0
        %v4059 = vadd.f32 %v3948, 1.0
        %v4060 = vadd.f32 %v3950, 1.0
        %v4061 = vadd.f32 %v3952, 1.0
        %v4062 = vadd.f32 %v3954, 1.0
        %v4063 = vadd.f32 %v3956, 1.0
        %v4064 = vadd.f32 %v3958, 1.0
        %v4065 = vadd.f32 %v3960, 1.0
        %v4066 = vadd.f32 %v3962, 1.0
        %v4067 = vadd.f32 %v3964, 1.0
        %v4068 = vadd.f32 %v3966, 1.0
        %v4069 = vadd.f32 %v3968, 1.0
        %v4070 = vadd.f32 %v3970, 1.0
        %v4071 = vadd.f32 %v3972, 1.0
        %v4072 = vadd.f32 %v3974, 1.0
        %v4073 = vadd.f32 %v3976, 1.0
        %v4074 = vadd.f32 %v3978, 1.0
        %v4075 = vadd.f32 %v3980, 1.0
        %v4076 = vadd.f32 %v3982, 1.0
        %v4077 = vadd.f32 %v3984, 1.0
        %v4078 = vadd.f32 %v3986, 1.0
        %v4079 = vadd.f32 %v3988, 1.0
        %v4080 = vadd.f32 %v3990, 1.0
        %v4081 = vadd.f32 %v3992, 1.0
        %v4082 = vadd.f32 %v3994, 1.0
        %v4083 = vadd.f32 %v3996, 1.0
        %v4084 = vadd.f32 %v3998, 1.0
        %v4085 = vadd.f32 %v4000, 1.0
        %v4086 = vadd.f32 %v4002, 1.0
        %v4087 = vadd.f32 %v4004, 1.0
        %v4088 = vadd.f32 %v4006, 1.0
        %v4089 = vadd.f32 %v4008, 1.0
        %v4090 = vadd.f32 %v4010, 1.0
        %v4091 = vadd.f32 %v4012, 1.0
        %v4092 = vadd.f32 %v4014, 1.0
        %v4093 = vadd.f32 %v4016, 1.0
        %v4094 = vadd.f32 %v4018, 1.0
        %v4095 = vadd.f32 %v4020, 1.0
        %v4096 = vadd.f32 %v4022, 1.0
        %v4097 = vadd.f32 %v4024, 1.0
        %v4098 = vadd.f32 %v4026, 1.0
        %v4099 = vadd.f32 %v4028, 1.0
        %v4100 = vadd.f32 %v4030, 1.0
        %v4101 = vadd.f32 %v4032, 1.0
        %v4102 = vadd.f32 %v4034, 1.0
        %v4103 = vadd.f32 %v4036, 1.0
        %v4104 = vadd.f32 %v4038, 1.0
        %v4105 = vadd.f32 %v4040, 1.0
        %v4106 = vadd.f32 %v4042, 1.0
        %v4107 = vrcp.pop %v4043
        %v4108 = vmul.f32 1.0, %v4107
        %v4109 = vrcp.pop %v4044
        %v4110 = vmul.f32 1.0, %v4109
        %v4111 = vrcp.pop %v4045
        %v4112 = vmul.f32 1.0, %v4111
        %v4113 = vrcp.pop %v4046
        %v4114 = vmul.f32 1.0, %v4113
        %v4115 = vrcp.pop %v4047
        %v4116 = vmul.f32 1.0, %v4115
        %v4117 = vrcp.pop %v4048
        %v4118 = vmul.f32 1.0, %v4117
        %v4119 = vrcp.pop %v4049
        %v4120 = vmul.f32 1.0, %v4119
        %v4121 = vrcp.pop %v4050
        %v4122 = vmul.f32 1.0, %v4121
        %v4123 = vrcp.pop %v4051
        %v4124 = vmul.f32 1.0, %v4123
        %v4125 = vrcp.pop %v4052
        %v4126 = vmul.f32 1.0, %v4125
        %v4127 = vrcp.pop %v4053
        %v4128 = vmul.f32 1.0, %v4127
        %v4129 = vrcp.pop %v4054
        %v4130 = vmul.f32 1.0, %v4129
        %v4131 = vrcp.pop %v4055
        %v4132 = vmul.f32 1.0, %v4131
        %v4133 = vrcp.pop %v4056
        %v4134 = vmul.f32 1.0, %v4133
        %v4135 = vrcp.pop %v4057
        %v4136 = vmul.f32 1.0, %v4135
        %v4137 = vrcp.pop %v4058
        %v4138 = vmul.f32 1.0, %v4137
        %v4139 = vrcp.pop %v4059
        %v4140 = vmul.f32 1.0, %v4139
        %v4141 = vrcp.pop %v4060
        %v4142 = vmul.f32 1.0, %v4141
        %v4143 = vrcp.pop %v4061
        %v4144 = vmul.f32 1.0, %v4143
        %v4145 = vrcp.pop %v4062
        %v4146 = vmul.f32 1.0, %v4145
        %v4147 = vrcp.pop %v4063
        %v4148 = vmul.f32 1.0, %v4147
        %v4149 = vrcp.pop %v4064
        %v4150 = vmul.f32 1.0, %v4149
        %v4151 = vrcp.pop %v4065
        %v4152 = vmul.f32 1.0, %v4151
        %v4153 = vrcp.pop %v4066
        %v4154 = vmul.f32 1.0, %v4153
        %v4155 = vrcp.pop %v4067
        %v4156 = vmul.f32 1.0, %v4155
        %v4157 = vrcp.pop %v4068
        %v4158 = vmul.f32 1.0, %v4157
        %v4159 = vrcp.pop %v4069
        %v4160 = vmul.f32 1.0, %v4159
        %v4161 = vrcp.pop %v4070
        %v4162 = vmul.f32 1.0, %v4161
        %v4163 = vrcp.pop %v4071
        %v4164 = vmul.f32 1.0, %v4163
        %v4165 = vrcp.pop %v4072
        %v4166 = vmul.f32 1.0, %v4165
        %v4167 = vrcp.pop %v4073
        %v4168 = vmul.f32 1.0, %v4167
        %v4169 = vrcp.pop %v4074
        %v4170 = vmul.f32 1.0, %v4169
        %v4171 = vrcp.pop %v4075
        %v4172 = vmul.f32 1.0, %v4171
        %v4173 = vrcp.pop %v4076
        %v4174 = vmul.f32 1.0, %v4173
        %v4175 = vrcp.pop %v4077
        %v4176 = vmul.f32 1.0, %v4175
        %v4177 = vrcp.pop %v4078
        %v4178 = vmul.f32 1.0, %v4177
        %v4179 = vrcp.pop %v4079
        %v4180 = vmul.f32 1.0, %v4179
        %v4181 = vrcp.pop %v4080
        %v4182 = vmul.f32 1.0, %v4181
        %v4183 = vrcp.pop %v4081
        %v4184 = vmul.f32 1.0, %v4183
        %v4185 = vrcp.pop %v4082
        %v4186 = vmul.f32 1.0, %v4185
        %v4187 = vrcp.pop %v4083
        %v4188 = vmul.f32 1.0, %v4187
        %v4189 = vrcp.pop %v4084
        %v4190 = vmul.f32 1.0, %v4189
        %v4191 = vrcp.pop %v4085
        %v4192 = vmul.f32 1.0, %v4191
        %v4193 = vrcp.pop %v4086
        %v4194 = vmul.f32 1.0, %v4193
        %v4195 = vrcp.pop %v4087
        %v4196 = vmul.f32 1.0, %v4195
        %v4197 = vrcp.pop %v4088
        %v4198 = vmul.f32 1.0, %v4197
        %v4199 = vrcp.pop %v4089
        %v4200 = vmul.f32 1.0, %v4199
        %v4201 = vrcp.pop %v4090
        %v4202 = vmul.f32 1.0, %v4201
        %v4203 = vrcp.pop %v4091
        %v4204 = vmul.f32 1.0, %v4203
        %v4205 = vrcp.pop %v4092
        %v4206 = vmul.f32 1.0, %v4205
        %v4207 = vrcp.pop %v4093
        %v4208 = vmul.f32 1.0, %v4207
        %v4209 = vrcp.pop %v4094
        %v4210 = vmul.f32 1.0, %v4209
        %v4211 = vrcp.pop %v4095
        %v4212 = vmul.f32 1.0, %v4211
        %v4213 = vrcp.pop %v4096
        %v4214 = vmul.f32 1.0, %v4213
        %v4215 = vrcp.pop %v4097
        %v4216 = vmul.f32 1.0, %v4215
        %v4217 = vrcp.pop %v4098
        %v4218 = vmul.f32 1.0, %v4217
        %v4219 = vrcp.pop %v4099
        %v4220 = vmul.f32 1.0, %v4219
        %v4221 = vrcp.pop %v4100
        %v4222 = vmul.f32 1.0, %v4221
        %v4223 = vrcp.pop %v4101
        %v4224 = vmul.f32 1.0, %v4223
        %v4225 = vrcp.pop %v4102
        %v4226 = vmul.f32 1.0, %v4225
        %v4227 = vrcp.pop %v4103
        %v4228 = vmul.f32 1.0, %v4227
        %v4229 = vrcp.pop %v4104
        %v4230 = vmul.f32 1.0, %v4229
        %v4231 = vrcp.pop %v4105
        %v4232 = vmul.f32 1.0, %v4231
        %v4233 = vrcp.pop %v4106
        %v4234 = vmul.f32 1.0, %v4233
        %v4235 = vmul.f32 %v3787, %v4108
        %v4236 = vmul.f32 %v3788, %v4110
        %v4237 = vmul.f32 %v3789, %v4112
        %v4238 = vmul.f32 %v3790, %v4114
        %v4239 = vmul.f32 %v3791, %v4116
        %v4240 = vmul.f32 %v3792, %v4118
        %v4241 = vmul.f32 %v3793, %v4120
        %v4242 = vmul.f32 %v3794, %v4122
        %v4243 = vmul.f32 %v3795, %v4124
        %v4244 = vmul.f32 %v3796, %v4126
        %v4245 = vmul.f32 %v3797, %v4128
        %v4246 = vmul.f32 %v3798, %v4130
        %v4247 = vmul.f32 %v3799, %v4132
        %v4248 = vmul.f32 %v3800, %v4134
        %v4249 = vmul.f32 %v3801, %v4136
        %v4250 = vmul.f32 %v3802, %v4138
        %v4251 = vmul.f32 %v3803, %v4140
        %v4252 = vmul.f32 %v3804, %v4142
        %v4253 = vmul.f32 %v3805, %v4144
        %v4254 = vmul.f32 %v3806, %v4146
        %v4255 = vmul.f32 %v3807, %v4148
        %v4256 = vmul.f32 %v3808, %v4150
        %v4257 = vmul.f32 %v3809, %v4152
        %v4258 = vmul.f32 %v3810, %v4154
        %v4259 = vmul.f32 %v3811, %v4156
        %v4260 = vmul.f32 %v3812, %v4158
        %v4261 = vmul.f32 %v3813, %v4160
        %v4262 = vmul.f32 %v3814, %v4162
        %v4263 = vmul.f32 %v3815, %v4164
        %v4264 = vmul.f32 %v3816, %v4166
        %v4265 = vmul.f32 %v3817, %v4168
        %v4266 = vmul.f32 %v3818, %v4170
        %v4267 = vmul.f32 %v3819, %v4172
        %v4268 = vmul.f32 %v3820, %v4174
        %v4269 = vmul.f32 %v3821, %v4176
        %v4270 = vmul.f32 %v3822, %v4178
        %v4271 = vmul.f32 %v3823, %v4180
        %v4272 = vmul.f32 %v3824, %v4182
        %v4273 = vmul.f32 %v3825, %v4184
        %v4274 = vmul.f32 %v3826, %v4186
        %v4275 = vmul.f32 %v3827, %v4188
        %v4276 = vmul.f32 %v3828, %v4190
        %v4277 = vmul.f32 %v3829, %v4192
        %v4278 = vmul.f32 %v3830, %v4194
        %v4279 = vmul.f32 %v3831, %v4196
        %v4280 = vmul.f32 %v3832, %v4198
        %v4281 = vmul.f32 %v3833, %v4200
        %v4282 = vmul.f32 %v3834, %v4202
        %v4283 = vmul.f32 %v3835, %v4204
        %v4284 = vmul.f32 %v3836, %v4206
        %v4285 = vmul.f32 %v3837, %v4208
        %v4286 = vmul.f32 %v3838, %v4210
        %v4287 = vmul.f32 %v3839, %v4212
        %v4288 = vmul.f32 %v3840, %v4214
        %v4289 = vmul.f32 %v3841, %v4216
        %v4290 = vmul.f32 %v3842, %v4218
        %v4291 = vmul.f32 %v3843, %v4220
        %v4292 = vmul.f32 %v3844, %v4222
        %v4293 = vmul.f32 %v3845, %v4224
        %v4294 = vmul.f32 %v3846, %v4226
        %v4295 = vmul.f32 %v3847, %v4228
        %v4296 = vmul.f32 %v3848, %v4230
        %v4297 = vmul.f32 %v3849, %v4232
        %v4298 = vmul.f32 %v3850, %v4234
        %v4299 = vpack.c.bf16 %v4237, %v4235
        %v4300 = vpack.c.bf16 %v4238, %v4236
        %v4301 = vpack.c.bf16 %v4241, %v4239
        %v4302 = vpack.c.bf16 %v4242, %v4240
        %v4303 = vpack.c.bf16 %v4245, %v4243
        %v4304 = vpack.c.bf16 %v4246, %v4244
        %v4305 = vpack.c.bf16 %v4249, %v4247
        %v4306 = vpack.c.bf16 %v4250, %v4248
        %v4307 = vpack.c.bf16 %v4253, %v4251
        %v4308 = vpack.c.bf16 %v4254, %v4252
        %v4309 = vpack.c.bf16 %v4257, %v4255
        %v4310 = vpack.c.bf16 %v4258, %v4256
        %v4311 = vpack.c.bf16 %v4261, %v4259
        %v4312 = vpack.c.bf16 %v4262, %v4260
        %v4313 = vpack.c.bf16 %v4265, %v4263
        %v4314 = vpack.c.bf16 %v4266, %v4264
        %v4315 = vpack.c.bf16 %v4269, %v4267
        %v4316 = vpack.c.bf16 %v4270, %v4268
        %v4317 = vpack.c.bf16 %v4273, %v4271
        %v4318 = vpack.c.bf16 %v4274, %v4272
        %v4319 = vpack.c.bf16 %v4277, %v4275
        %v4320 = vpack.c.bf16 %v4278, %v4276
        %v4321 = vpack.c.bf16 %v4281, %v4279
        %v4322 = vpack.c.bf16 %v4282, %v4280
        %v4323 = vpack.c.bf16 %v4285, %v4283
        %v4324 = vpack.c.bf16 %v4286, %v4284
        %v4325 = vpack.c.bf16 %v4289, %v4287
        %v4326 = vpack.c.bf16 %v4290, %v4288
        %v4327 = vpack.c.bf16 %v4293, %v4291
        %v4328 = vpack.c.bf16 %v4294, %v4292
        %v4329 = vpack.c.bf16 %v4297, %v4295
        %v4330 = vpack.c.bf16 %v4298, %v4296
        %v4331 = vld [vmem:[#allocation8] sm:$0xf]
        %v4332 = vld [vmem:[#allocation8 + $0x4] sm:$0xf]
        %v4333 = vld [vmem:[#allocation8 + $0x8] sm:$0xf]
        %v4334 = vld [vmem:[#allocation8 + $0xc] sm:$0xf]
        %v4335 = vld [vmem:[#allocation8 + $0x10] sm:$0xf]
        %v4336 = vld [vmem:[#allocation8 + $0x14] sm:$0xf]
        %v4337 = vld [vmem:[#allocation8 + $0x18] sm:$0xf]
        %v4338 = vld [vmem:[#allocation8 + $0x1c] sm:$0xf]
        %v4339 = vld [vmem:[#allocation8 + $0x20] sm:$0xf]
        %v4340 = vld [vmem:[#allocation8 + $0x24] sm:$0xf]
        %v4341 = vld [vmem:[#allocation8 + $0x28] sm:$0xf]
        %v4342 = vld [vmem:[#allocation8 + $0x2c] sm:$0xf]
        %v4343 = vld [vmem:[#allocation8 + $0x30] sm:$0xf]
        %v4344 = vld [vmem:[#allocation8 + $0x34] sm:$0xf]
        %v4345 = vld [vmem:[#allocation8 + $0x38] sm:$0xf]
        %v4346 = vld [vmem:[#allocation8 + $0x3c] sm:$0xf]
        %v4347 = vld [vmem:[#allocation8 + $0x40] sm:$0xf]
        %v4348 = vld [vmem:[#allocation8 + $0x44] sm:$0xf]
        %v4349 = vld [vmem:[#allocation8 + $0x48] sm:$0xf]
        %v4350 = vld [vmem:[#allocation8 + $0x4c] sm:$0xf]
        %v4351 = vld [vmem:[#allocation8 + $0x50] sm:$0xf]
        %v4352 = vld [vmem:[#allocation8 + $0x54] sm:$0xf]
        %v4353 = vld [vmem:[#allocation8 + $0x58] sm:$0xf]
        %v4354 = vld [vmem:[#allocation8 + $0x5c] sm:$0xf]
        %v4355 = vld [vmem:[#allocation8 + $0x60] sm:$0xf]
        %v4356 = vld [vmem:[#allocation8 + $0x64] sm:$0xf]
        %v4357 = vld [vmem:[#allocation8 + $0x68] sm:$0xf]
        %v4358 = vld [vmem:[#allocation8 + $0x6c] sm:$0xf]
        %v4359 = vld [vmem:[#allocation8 + $0x70] sm:$0xf]
        %v4360 = vld [vmem:[#allocation8 + $0x74] sm:$0xf]
        %v4361 = vld [vmem:[#allocation8 + $0x78] sm:$0xf]
        %v4362 = vld [vmem:[#allocation8 + $0x7c] sm:$0xf]
        %v4363 = vld [vmem:[#allocation10] sm:$0x1]
        %v4365 = vlaneseq
        %v4366 = vshrl.u32 %v4365, 7
        %v4367 = vsub.s32 0, %v4366
        %v4368 = vrot.slane %v4363, %v4367
        %v4402 = vunpack.c.l.b16 %v4331
        %v4403 = vunpack.c.l.b16 %v4332
        %v4404 = vunpack.c.l.b16 %v4333
        %v4405 = vunpack.c.l.b16 %v4334
        %v4406 = vunpack.c.l.b16 %v4335
        %v4407 = vunpack.c.l.b16 %v4336
        %v4408 = vunpack.c.l.b16 %v4337
        %v4409 = vunpack.c.l.b16 %v4338
        %v4410 = vunpack.c.l.b16 %v4339
        %v4411 = vunpack.c.l.b16 %v4340
        %v4412 = vunpack.c.l.b16 %v4341
        %v4413 = vunpack.c.l.b16 %v4342
        %v4414 = vunpack.c.l.b16 %v4343
        %v4415 = vunpack.c.l.b16 %v4344
        %v4416 = vunpack.c.l.b16 %v4345
        %v4417 = vunpack.c.l.b16 %v4346
        %v4418 = vunpack.c.l.b16 %v4347
        %v4419 = vunpack.c.l.b16 %v4348
        %v4420 = vunpack.c.l.b16 %v4349
        %v4421 = vunpack.c.l.b16 %v4350
        %v4422 = vunpack.c.l.b16 %v4351
        %v4423 = vunpack.c.l.b16 %v4352
        %v4424 = vunpack.c.l.b16 %v4353
        %v4425 = vunpack.c.l.b16 %v4354
        %v4426 = vunpack.c.l.b16 %v4355
        %v4427 = vunpack.c.l.b16 %v4356
        %v4428 = vunpack.c.l.b16 %v4357
        %v4429 = vunpack.c.l.b16 %v4358
        %v4430 = vunpack.c.l.b16 %v4359
        %v4431 = vunpack.c.l.b16 %v4360
        %v4432 = vunpack.c.l.b16 %v4361
        %v4433 = vunpack.c.l.b16 %v4362
        %v4434 = vpack.c.b16 %v4403, %v4402
        %v4435 = vpack.c.b16 %v4405, %v4404
        %v4436 = vpack.c.b16 %v4407, %v4406
        %v4437 = vpack.c.b16 %v4409, %v4408
        %v4438 = vpack.c.b16 %v4411, %v4410
        %v4439 = vpack.c.b16 %v4413, %v4412
        %v4440 = vpack.c.b16 %v4415, %v4414
        %v4441 = vpack.c.b16 %v4417, %v4416
        %v4442 = vpack.c.b16 %v4419, %v4418
        %v4443 = vpack.c.b16 %v4421, %v4420
        %v4444 = vpack.c.b16 %v4423, %v4422
        %v4445 = vpack.c.b16 %v4425, %v4424
        %v4446 = vpack.c.b16 %v4427, %v4426
        %v4447 = vpack.c.b16 %v4429, %v4428
        %v4448 = vpack.c.b16 %v4431, %v4430
        %v4449 = vpack.c.b16 %v4433, %v4432
        %4466 = vmatprep.subr.bf16.mxu0 0
        %4467 = vmatpush1.bf16.msra.mxu0 %v4434
        %4468 = vmatprep.subr.bf16.mxu0 0
        %4469 = vmatpush1.bf16.msra.mxu0 %v4435
        %4470 = vmatprep.subr.bf16.mxu0 0
        %4471 = vmatpush1.bf16.msra.mxu0 %v4436
        %4472 = vmatprep.subr.bf16.mxu0 0
        %4473 = vmatpush1.bf16.msra.mxu0 %v4437
        %4474 = vmatprep.subr.bf16.mxu0 0
        %4475 = vmatpush1.bf16.msra.mxu0 %v4438
        %4476 = vmatprep.subr.bf16.mxu0 0
        %4477 = vmatpush1.bf16.msra.mxu0 %v4439
        %4478 = vmatprep.subr.bf16.mxu0 0
        %4479 = vmatpush1.bf16.msra.mxu0 %v4440
        %4480 = vmatprep.subr.bf16.mxu0 0
        %4481 = vmatpush1.bf16.msra.mxu0 %v4441
        %4482 = vmatprep.subr.bf16.mxu0 0
        %4483 = vmatpush1.bf16.msra.mxu0 %v4442
        %4484 = vmatprep.subr.bf16.mxu0 0
        %4485 = vmatpush1.bf16.msra.mxu0 %v4443
        %4486 = vmatprep.subr.bf16.mxu0 0
        %4487 = vmatpush1.bf16.msra.mxu0 %v4444
        %4488 = vmatprep.subr.bf16.mxu0 0
        %4489 = vmatpush1.bf16.msra.mxu0 %v4445
        %4490 = vmatprep.subr.bf16.mxu0 0
        %4491 = vmatpush1.bf16.msra.mxu0 %v4446
        %4492 = vmatprep.subr.bf16.mxu0 0
        %4493 = vmatpush1.bf16.msra.mxu0 %v4447
        %4494 = vmatprep.subr.bf16.mxu0 0
        %4495 = vmatpush1.bf16.msra.mxu0 %v4448
        %4496 = vmatprep.subr.bf16.mxu0 0
        %4497 = vmatpush1.bf16.msra.mxu0 %v4449
        %4498 = vmatprep.mubr.bf16.mxu0 %v4300
        %4499 = vmatmul.mubr.bf16.gmra.mrb[0].mxu0 %v4299
        %v4500 = vpop.f32.mrb[0].mxu0
        %v4501 = vadd.f32 %v4368, %v4500
        %v4502 = vpop.f32.mrb[0].mxu0
        %v4503 = vpop.f32.mrb[0].mxu0
        %v4504 = vadd.f32 %v4368, %v4503
        %v4505 = vpop.f32.mrb[0].mxu0
        %4506 = vmatprep.mubr.bf16.mxu0 %v4302
        %4507 = vmatmul.mubr.bf16.gmra.mrb[0].mxu0 %v4301
        %v4508 = vpop.f32.mrb[0].mxu0
        %v4509 = vadd.f32 %v4368, %v4508
        %v4510 = vpop.f32.mrb[0].mxu0
        %v4511 = vpop.f32.mrb[0].mxu0
        %v4512 = vadd.f32 %v4368, %v4511
        %v4513 = vpop.f32.mrb[0].mxu0
        %4514 = vmatprep.mubr.bf16.mxu0 %v4304
        %4515 = vmatmul.mubr.bf16.gmra.mrb[0].mxu0 %v4303
        %v4516 = vpop.f32.mrb[0].mxu0
        %v4517 = vadd.f32 %v4368, %v4516
        %v4518 = vpop.f32.mrb[0].mxu0
        %v4519 = vpop.f32.mrb[0].mxu0
        %v4520 = vadd.f32 %v4368, %v4519
        %v4521 = vpop.f32.mrb[0].mxu0
        %4522 = vmatprep.mubr.bf16.mxu0 %v4306
        %4523 = vmatmul.mubr.bf16.gmra.mrb[0].mxu0 %v4305
        %v4524 = vpop.f32.mrb[0].mxu0
        %v4525 = vadd.f32 %v4368, %v4524
        %v4526 = vpop.f32.mrb[0].mxu0
        %v4527 = vpop.f32.mrb[0].mxu0
        %v4528 = vadd.f32 %v4368, %v4527
        %v4529 = vpop.f32.mrb[0].mxu0
        %4530 = vmatprep.mubr.bf16.mxu0 %v4308
        %4531 = vmatmul.mubr.bf16.gmra.mrb[0].mxu0 %v4307
        %v4532 = vpop.f32.mrb[0].mxu0
        %v4533 = vadd.f32 %v4368, %v4532
        %v4534 = vpop.f32.mrb[0].mxu0
        %v4535 = vpop.f32.mrb[0].mxu0
        %v4536 = vadd.f32 %v4368, %v4535
        %v4537 = vpop.f32.mrb[0].mxu0
        %4538 = vmatprep.mubr.bf16.mxu0 %v4310
        %4539 = vmatmul.mubr.bf16.gmra.mrb[0].mxu0 %v4309
        %v4540 = vpop.f32.mrb[0].mxu0
        %v4541 = vadd.f32 %v4368, %v4540
        %v4542 = vpop.f32.mrb[0].mxu0
        %v4543 = vpop.f32.mrb[0].mxu0
        %v4544 = vadd.f32 %v4368, %v4543
        %v4545 = vpop.f32.mrb[0].mxu0
        %4546 = vmatprep.mubr.bf16.mxu0 %v4312
        %4547 = vmatmul.mubr.bf16.gmra.mrb[0].mxu0 %v4311
        %v4548 = vpop.f32.mrb[0].mxu0
        %v4549 = vadd.f32 %v4368, %v4548
        %v4550 = vpop.f32.mrb[0].mxu0
        %v4551 = vpop.f32.mrb[0].mxu0
        %v4552 = vadd.f32 %v4368, %v4551
        %v4553 = vpop.f32.mrb[0].mxu0
        %4554 = vmatprep.mubr.bf16.mxu0 %v4314
        %4555 = vmatmul.mubr.bf16.gmra.mrb[0].mxu0 %v4313
        %v4556 = vpop.f32.mrb[0].mxu0
        %v4557 = vadd.f32 %v4368, %v4556
        %v4558 = vpop.f32.mrb[0].mxu0
        %v4559 = vpop.f32.mrb[0].mxu0
        %v4560 = vadd.f32 %v4368, %v4559
        %v4561 = vpop.f32.mrb[0].mxu0
        %4562 = vmatprep.mubr.bf16.mxu0 %v4316
        %4563 = vmatmul.mubr.bf16.gmra.mrb[0].mxu0 %v4315
        %v4564 = vpop.f32.mrb[0].mxu0
        %v4565 = vadd.f32 %v4368, %v4564
        %v4566 = vpop.f32.mrb[0].mxu0
        %v4567 = vpop.f32.mrb[0].mxu0
        %v4568 = vadd.f32 %v4368, %v4567
        %v4569 = vpop.f32.mrb[0].mxu0
        %4570 = vmatprep.mubr.bf16.mxu0 %v4318
        %4571 = vmatmul.mubr.bf16.gmra.mrb[0].mxu0 %v4317
        %v4572 = vpop.f32.mrb[0].mxu0
        %v4573 = vadd.f32 %v4368, %v4572
        %v4574 = vpop.f32.mrb[0].mxu0
        %v4575 = vpop.f32.mrb[0].mxu0
        %v4576 = vadd.f32 %v4368, %v4575
        %v4577 = vpop.f32.mrb[0].mxu0
        %4578 = vmatprep.mubr.bf16.mxu0 %v4320
        %4579 = vmatmul.mubr.bf16.gmra.mrb[0].mxu0 %v4319
        %v4580 = vpop.f32.mrb[0].mxu0
        %v4581 = vadd.f32 %v4368, %v4580
        %v4582 = vpop.f32.mrb[0].mxu0
        %v4583 = vpop.f32.mrb[0].mxu0
        %v4584 = vadd.f32 %v4368, %v4583
        %v4585 = vpop.f32.mrb[0].mxu0
        %4586 = vmatprep.mubr.bf16.mxu0 %v4322
        %4587 = vmatmul.mubr.bf16.gmra.mrb[0].mxu0 %v4321
        %v4588 = vpop.f32.mrb[0].mxu0
        %v4589 = vadd.f32 %v4368, %v4588
        %v4590 = vpop.f32.mrb[0].mxu0
        %v4591 = vpop.f32.mrb[0].mxu0
        %v4592 = vadd.f32 %v4368, %v4591
        %v4593 = vpop.f32.mrb[0].mxu0
        %4594 = vmatprep.mubr.bf16.mxu0 %v4324
        %4595 = vmatmul.mubr.bf16.gmra.mrb[0].mxu0 %v4323
        %v4596 = vpop.f32.mrb[0].mxu0
        %v4597 = vadd.f32 %v4368, %v4596
        %v4598 = vpop.f32.mrb[0].mxu0
        %v4599 = vpop.f32.mrb[0].mxu0
        %v4600 = vadd.f32 %v4368, %v4599
        %v4601 = vpop.f32.mrb[0].mxu0
        %4602 = vmatprep.mubr.bf16.mxu0 %v4326
        %4603 = vmatmul.mubr.bf16.gmra.mrb[0].mxu0 %v4325
        %v4604 = vpop.f32.mrb[0].mxu0
        %v4605 = vadd.f32 %v4368, %v4604
        %v4606 = vpop.f32.mrb[0].mxu0
        %v4607 = vpop.f32.mrb[0].mxu0
        %v4608 = vadd.f32 %v4368, %v4607
        %v4609 = vpop.f32.mrb[0].mxu0
        %4610 = vmatprep.mubr.bf16.mxu0 %v4328
        %4611 = vmatmul.mubr.bf16.gmra.mrb[0].mxu0 %v4327
        %v4612 = vpop.f32.mrb[0].mxu0
        %v4613 = vadd.f32 %v4368, %v4612
        %v4614 = vpop.f32.mrb[0].mxu0
        %v4615 = vpop.f32.mrb[0].mxu0
        %v4616 = vadd.f32 %v4368, %v4615
        %v4617 = vpop.f32.mrb[0].mxu0
        %4618 = vmatprep.mubr.bf16.mxu0 %v4330
        %4619 = vmatmul.mubr.bf16.gmra.mrb[0].mxu0 %v4329
        %v4620 = vpop.f32.mrb[0].mxu0
        %v4621 = vadd.f32 %v4368, %v4620
        %v4622 = vpop.f32.mrb[0].mxu0
        %v4623 = vpop.f32.mrb[0].mxu0
        %v4624 = vadd.f32 %v4368, %v4623
        %v4625 = vpop.f32.mrb[0].mxu0
        %4626 = vdwg.mxu0
        %v4627 = vpack.c.bf16 %v4504, %v4501
        %v4628 = vpack.c.bf16 %v4512, %v4509
        %v4629 = vpack.c.bf16 %v4520, %v4517
        %v4630 = vpack.c.bf16 %v4528, %v4525
        %v4631 = vpack.c.bf16 %v4536, %v4533
        %v4632 = vpack.c.bf16 %v4544, %v4541
        %v4633 = vpack.c.bf16 %v4552, %v4549
        %v4634 = vpack.c.bf16 %v4560, %v4557
        %v4635 = vpack.c.bf16 %v4568, %v4565
        %v4636 = vpack.c.bf16 %v4576, %v4573
        %v4637 = vpack.c.bf16 %v4584, %v4581
        %v4638 = vpack.c.bf16 %v4592, %v4589
        %v4639 = vpack.c.bf16 %v4600, %v4597
        %v4640 = vpack.c.bf16 %v4608, %v4605
        %v4641 = vpack.c.bf16 %v4616, %v4613
        %v4642 = vpack.c.bf16 %v4624, %v4621
        %v4659 = vunpack.c.l.b16 %v4627
        %v4660 = vunpack.c.h.b16 %v4627
        %v4661 = vunpack.c.l.b16 %v4628
        %v4662 = vunpack.c.h.b16 %v4628
        %v4663 = vunpack.c.l.b16 %v4629
        %v4664 = vunpack.c.h.b16 %v4629
        %v4665 = vunpack.c.l.b16 %v4630
        %v4666 = vunpack.c.h.b16 %v4630
        %v4667 = vunpack.c.l.b16 %v4631
        %v4668 = vunpack.c.h.b16 %v4631
        %v4669 = vunpack.c.l.b16 %v4632
        %v4670 = vunpack.c.h.b16 %v4632
        %v4671 = vunpack.c.l.b16 %v4633
        %v4672 = vunpack.c.h.b16 %v4633
        %v4673 = vunpack.c.l.b16 %v4634
        %v4674 = vunpack.c.h.b16 %v4634
        %v4675 = vunpack.c.l.b16 %v4635
        %v4676 = vunpack.c.h.b16 %v4635
        %v4677 = vunpack.c.l.b16 %v4636
        %v4678 = vunpack.c.h.b16 %v4636
        %v4679 = vunpack.c.l.b16 %v4637
        %v4680 = vunpack.c.h.b16 %v4637
        %v4681 = vunpack.c.l.b16 %v4638
        %v4682 = vunpack.c.h.b16 %v4638
        %v4683 = vunpack.c.l.b16 %v4639
        %v4684 = vunpack.c.h.b16 %v4639
        %v4685 = vunpack.c.l.b16 %v4640
        %v4686 = vunpack.c.h.b16 %v4640
        %v4687 = vunpack.c.l.b16 %v4641
        %v4688 = vunpack.c.h.b16 %v4641
        %v4689 = vunpack.c.l.b16 %v4642
        %v4690 = vunpack.c.h.b16 %v4642
        %v4691 = vpack.c.b16 %v4659, %v4659
        %v4692 = vpack.c.b16 %v4660, %v4660
        %v4693 = vpack.c.b16 %v4661, %v4661
        %v4694 = vpack.c.b16 %v4662, %v4662
        %v4695 = vpack.c.b16 %v4663, %v4663
        %v4696 = vpack.c.b16 %v4664, %v4664
        %v4697 = vpack.c.b16 %v4665, %v4665
        %v4698 = vpack.c.b16 %v4666, %v4666
        %v4699 = vpack.c.b16 %v4667, %v4667
        %v4700 = vpack.c.b16 %v4668, %v4668
        %v4701 = vpack.c.b16 %v4669, %v4669
        %v4702 = vpack.c.b16 %v4670, %v4670
        %v4703 = vpack.c.b16 %v4671, %v4671
        %v4704 = vpack.c.b16 %v4672, %v4672
        %v4705 = vpack.c.b16 %v4673, %v4673
        %v4706 = vpack.c.b16 %v4674, %v4674
        %v4707 = vpack.c.b16 %v4675, %v4675
        %v4708 = vpack.c.b16 %v4676, %v4676
        %v4709 = vpack.c.b16 %v4677, %v4677
        %v4710 = vpack.c.b16 %v4678, %v4678
        %v4711 = vpack.c.b16 %v4679, %v4679
        %v4712 = vpack.c.b16 %v4680, %v4680
        %v4713 = vpack.c.b16 %v4681, %v4681
        %v4714 = vpack.c.b16 %v4682, %v4682
        %v4715 = vpack.c.b16 %v4683, %v4683
        %v4716 = vpack.c.b16 %v4684, %v4684
        %v4717 = vpack.c.b16 %v4685, %v4685
        %v4718 = vpack.c.b16 %v4686, %v4686
        %v4719 = vpack.c.b16 %v4687, %v4687
        %v4720 = vpack.c.b16 %v4688, %v4688
        %v4721 = vpack.c.b16 %v4689, %v4689
        %v4722 = vpack.c.b16 %v4690, %v4690
        %4755 = vst [vmem:[%s297] sm:$0xf] %v4691
        %4756 = vst [vmem:[%s297 + $0x4] sm:$0xf] %v4692
        %4757 = vst [vmem:[%s297 + $0x8] sm:$0xf] %v4693
        %4758 = vst [vmem:[%s297 + $0xc] sm:$0xf] %v4694
        %4759 = vst [vmem:[%s297 + $0x10] sm:$0xf] %v4695
        %4760 = vst [vmem:[%s297 + $0x14] sm:$0xf] %v4696
        %4761 = vst [vmem:[%s297 + $0x18] sm:$0xf] %v4697
        %4762 = vst [vmem:[%s297 + $0x1c] sm:$0xf] %v4698
        %4763 = vst [vmem:[%s297 + $0x20] sm:$0xf] %v4699
        %4764 = vst [vmem:[%s297 + $0x24] sm:$0xf] %v4700
        %4765 = vst [vmem:[%s297 + $0x28] sm:$0xf] %v4701
        %4766 = vst [vmem:[%s297 + $0x2c] sm:$0xf] %v4702
        %4767 = vst [vmem:[%s297 + $0x30] sm:$0xf] %v4703
        %4768 = vst [vmem:[%s297 + $0x34] sm:$0xf] %v4704
        %4769 = vst [vmem:[%s297 + $0x38] sm:$0xf] %v4705
        %4770 = vst [vmem:[%s297 + $0x3c] sm:$0xf] %v4706
        %4771 = vst [vmem:[%s297 + $0x40] sm:$0xf] %v4707
        %4772 = vst [vmem:[%s297 + $0x44] sm:$0xf] %v4708
        %4773 = vst [vmem:[%s297 + $0x48] sm:$0xf] %v4709
        %4774 = vst [vmem:[%s297 + $0x4c] sm:$0xf] %v4710
        %4775 = vst [vmem:[%s297 + $0x50] sm:$0xf] %v4711
        %4776 = vst [vmem:[%s297 + $0x54] sm:$0xf] %v4712
        %4777 = vst [vmem:[%s297 + $0x58] sm:$0xf] %v4713
        %4778 = vst [vmem:[%s297 + $0x5c] sm:$0xf] %v4714
        %4779 = vst [vmem:[%s297 + $0x60] sm:$0xf] %v4715
        %4780 = vst [vmem:[%s297 + $0x64] sm:$0xf] %v4716
        %4781 = vst [vmem:[%s297 + $0x68] sm:$0xf] %v4717
        %4782 = vst [vmem:[%s297 + $0x6c] sm:$0xf] %v4718
        %4783 = vst [vmem:[%s297 + $0x70] sm:$0xf] %v4719
        %4784 = vst [vmem:[%s297 + $0x74] sm:$0xf] %v4720
        %4785 = vst [vmem:[%s297 + $0x78] sm:$0xf] %v4721
        %4786 = vst [vmem:[%s297 + $0x7c] sm:$0xf] %v4722
        %s4787 = sand.u32 %s142, 1
        %s4788 = scalar_lea.sflag [#allocation4], %s4787
        %s4789 = sand.u32 %s142, 1
        %s4790 = smul.addr %s4789, 128
        %s4791 = scalar_lea.vmem [#allocation11], %s4790
        // Predicated region
        $region61: #{tpu_custom_call.1} parent=39 // pred_check
          %p4792 = pneg %p152
        $region62: #{tpu_custom_call.1} parent=39 // pred_check_branch
          %4794 = sbr.rel (%p4792) target = $region64
        $region63: #{tpu_custom_call.1} parent=39 // pred_region
          %s4795 = smul.u32 32, %s24
          %s4797 = ssub.s32 2048, 2048
          %4798 = vsyncadd %s4788, %s4797
          %s4799 = smul.addr %s4795, 64
          %s4800 = scalar_lea.hbm %s5, %s4799
          %s4801 = sshll.u32 %s4791, 4
          %s4802 = int_to_ptr.vmem [resolvable:$true] %s4801
          %4807 = dma.vmem_to_hbm [thread:$0]  %s4802, 2048, %s4800, %s4788, 64, 64, 4
        $region64: #{tpu_custom_call.1} parent=39 // pred_fallthru
          _
      $region40: #{tpu_custom_call.1} parent=5 // pred_fallthru
        _
      %p4808 = scmp.le.s32.totalorder 2, %s19
      // Predicated region
      $region65: #{tpu_custom_call.1} parent=5 // pred_check
        %p4809 = pneg %p4808
      $region66: #{tpu_custom_call.1} parent=5 // pred_check_branch
        %4811 = sbr.rel (%p4809) target = $region68
      $region67: #{tpu_custom_call.1} parent=5 // pred_region
        %s4812 = ssub.s32 %s19, 2
        // Predicated region
        $region69: #{tpu_custom_call.1} parent=67 // pred_check
          %p4813 = pneg %p158
        $region70: #{tpu_custom_call.1} parent=67 // pred_check_branch
          %4815 = sbr.rel (%p4813) target = $region72
        $region71: #{tpu_custom_call.1} parent=67 // pred_region
          %s4816 = sand.u32 %s143, 1
          %s4817 = scalar_lea.sflag [#allocation4], %s4816
          %s4818 = sand.u32 %s143, 1
          %s4819 = smul.addr %s4818, 128
          %s4820 = scalar_lea.vmem [#allocation11], %s4819
          %4821 = dma.done %s4817, 2048
        $region72: #{tpu_custom_call.1} parent=67 // pred_fallthru
          _
      $region68: #{tpu_custom_call.1} parent=5 // pred_fallthru
        _
    $region6: #{tpu_custom_call.1} parent=1 // loop_footer
      %s23 = sadd.s32 1, %s19
    $region7: #{tpu_custom_call.1} parent=1 // loop_footer_branch
      %18 = sbr.rel target = $region3
    $region8: #{tpu_custom_call.1} parent=1 // loop_exit
      _
    %4822 = vsyncpa [#allocation3], 1
    %s4823 = scalar_lea.sflag [#allocation3], 1
    %4824 = vsyncpa %s4823, 1
    %4825 = vsyncpa [#allocation6], 1
    %4826 = vsyncpa [#allocation9], 1
    %4827 = vsyncpa [#allocation4], 1
    %s4828 = scalar_lea.sflag [#allocation4], 1
    %4829 = vsyncpa %s4828, 1

</llo_original>
